<compile_context>
chip_gen: v7x
topology: tpu7x:2x2x1
jax: 0.10.0
libtpu: 0.0.40
codegen_flags: <defaults>
</compile_context>

<pallas_src>
import functools

import numpy as np
import jax
import jax.numpy as jnp
from jax import lax
from jax.experimental import pallas as pl
from jax.experimental.pallas import tpu as pltpu


# ----------------------------------------------------------------------------
# Host-side constants (built once per shape, never rebuilt inside jit traces)
# ----------------------------------------------------------------------------
def _interp_matrix_np(out_size, in_size):
    """Row i = bilinear align_corners=True weights over the input samples."""
    m = np.zeros((out_size, in_size), np.float32)
    if in_size == 1:
        m[:, 0] = 1.0
        return m
    src = np.arange(out_size, dtype=np.float64) * (in_size - 1) / (out_size - 1)
    lo = np.minimum(np.floor(src).astype(np.int64), in_size - 1)
    hi = np.minimum(lo + 1, in_size - 1)
    frac = (src - lo).astype(np.float32)
    rows = np.arange(out_size)
    np.add.at(m, (rows, lo), 1.0 - frac)
    np.add.at(m, (rows, hi), frac)
    return m


@functools.lru_cache(maxsize=None)
def _peb_constants(N, C, H, W):
    B, H2, W2 = N * C, 2 * H, 2 * W
    HW2 = H2 * W2
    uh = _interp_matrix_np(H2, H)                       # (H2, H)
    uw = _interp_matrix_np(W2, W)                       # (W2, W)
    uh_b = np.ascontiguousarray(np.broadcast_to(uh[None], (B, H2, H)))
    uw_b = np.ascontiguousarray(np.broadcast_to(uw[None], (B, W2, W)))
    p = np.arange(HW2)
    i, j = p // W2, p % W2
    # row-top / row-bottom / col-left / col-right validity masks (flat spatial)
    masks = np.stack([i != 0, i != H2 - 1, j != 0, j != W2 - 1]).astype(np.float32)
    # per-channel averaging over (batch, spatial): rows/cols indexed by (n, c)
    m_avg = np.kron(np.ones((N, N), np.float32),
                    np.eye(C, dtype=np.float32)) / float(N * HW2)
    return {
        "uh_b": jnp.asarray(uh_b), "uw_b": jnp.asarray(uw_b),
        "masks": jnp.asarray(masks), "m_avg": jnp.asarray(m_avg),
    }


# ----------------------------------------------------------------------------
# Fused kernel
# ----------------------------------------------------------------------------
def _lane_rotate(v, off, size):
    """u[:, p] = v[:, (p + off) % size] via two static lane slices + concat."""
    s = off % size
    if s == 0:
        return v
    return jnp.concatenate([v[:, s:], v[:, :s]], axis=1)


def _peb_fused_kernel(dims,
                      x_ref, uw_ref, uh_ref, mask_ref, mavg_ref,
                      w1_ref, b1_ref, gam_ref, bet_ref, w2_ref, b2_ref,
                      out_ref, s3d_ref, sflat_ref):
    # x_ref   : (B, H, W)      B = N*C image-channel rows
    # uw_ref  : (B, W2, W)     width  interpolation matrix (broadcast over B)
    # uh_ref  : (B, H2, H)     height interpolation matrix (broadcast over B)
    # mask_ref: (4, H2*W2)     [top, bottom, left, right] validity masks
    # mavg_ref: (B, B)         per-channel averaging over (n, spatial), incl. 1/count
    # w1_ref  : (B, 9*B)       block-diag 3x3 conv weights, cols ordered (k, n, ci)
    # b1/gam/bet_ref: (B, 1)   conv1 bias / BN gamma / BN beta, tiled over n
    # w2_ref  : (N*Cout, B)    block-diag 1x1 conv weights
    # b2_ref  : (N*Cout, 1)
    # out_ref : (N*Cout, H2*W2)
    # s3d_ref : (B, H2, W2)    scratch (upsample result, 2-D spatial)
    # sflat_ref:(B, H2*W2)     scratch (upsample result, flat spatial)
    N, C, Cout, H, W = dims
    B, H2, W2 = N * C, 2 * H, 2 * W
    HW2 = H2 * W2

    # --- separable bilinear x2 upsample (align_corners=True), on the MXU ------
    t = jnp.einsum("bhw,bjw->bhj", x_ref[...], uw_ref[...],
                   preferred_element_type=jnp.float32)             # (B, H, W2)
    s3d_ref[...] = jnp.einsum("bih,bhj->bij", uh_ref[...], t,
                              preferred_element_type=jnp.float32)  # (B, H2, W2)

    # --- relayout (B, H2, W2) -> (B, H2*W2) through VMEM (ref addressing) -----
    for i in range(H2):
        sflat_ref[:, i * W2:(i + 1) * W2] = s3d_ref[:, i, :]
    x1 = sflat_ref[...]                                            # (B, HW2) lane-dense

    # --- 3x3 SAME conv: 9 taps = circular lane shifts + boundary masks,
    #     channel contraction as ONE stacked matmul ----------------------------
    mt, mb = mask_ref[0:1, :], mask_ref[1:2, :]
    ml, mr = mask_ref[2:3, :], mask_ref[3:4, :]
    taps = []
    for k in range(9):
        dr, dc = k // 3 - 1, k % 3 - 1
        tap = _lane_rotate(x1, dr * W2 + dc, HW2)
        m = None
        if dr == -1:
            m = mt
        elif dr == 1:
            m = mb
        if dc == -1:
            m = ml if m is None else m * ml
        elif dc == 1:
            m = mr if m is None else m * mr
        if m is not None:
            tap = tap * m
        taps.append(tap)
    stacked = jnp.concatenate(taps, axis=0)                        # (9*B, HW2)
    y = jnp.dot(w1_ref[...], stacked,
                preferred_element_type=jnp.float32) + b1_ref[...]  # (B, HW2)

    # --- BatchNorm2d (training-mode batch stats, centered two-pass) + ReLU ----
    row_sum = jnp.sum(y, axis=1, keepdims=True)                    # (B, 1)
    mean = jnp.dot(mavg_ref[...], row_sum,
                   preferred_element_type=jnp.float32)             # (B, 1) per-channel
    d = y - mean
    row_ss = jnp.sum(d * d, axis=1, keepdims=True)
    var = jnp.dot(mavg_ref[...], row_ss,
                  preferred_element_type=jnp.float32)              # biased variance
    scale = gam_ref[...] * lax.rsqrt(var + 1e-5)
    shift = bet_ref[...] - mean * scale
    z = x1 + jnp.maximum(y * scale + shift, 0.0)                   # residual + ReLU

    # --- 1x1 conv --------------------------------------------------------------
    out_ref[...] = jnp.dot(w2_ref[...], z,
                           preferred_element_type=jnp.float32) + b2_ref[...]


# ----------------------------------------------------------------------------
# Forward wrapper (NCHW in / NCHW out, same convention as the PyTorch module)
# ----------------------------------------------------------------------------
def peb_forward(x_nchw, params):
    N, C, H, W = x_nchw.shape
    Cout = params["w2"].shape[1]
    B, H2, W2 = N * C, 2 * H, 2 * W
    HW2 = H2 * W2
    consts = _peb_constants(N, C, H, W)

    # Parameter-dependent block weights (tiny, built per call in plain XLA).
    w1_kcoci = jnp.transpose(params["w1"].reshape(9, C, C), (0, 2, 1))   # [k, co, ci]
    eye_n = jnp.eye(N, dtype=jnp.float32)
    w1_big = jnp.einsum("koc,nm->nokmc", w1_kcoci, eye_n).reshape(B, 9 * B)
    b1_rows = jnp.tile(params["b1"].reshape(1, C), (N, 1)).reshape(B, 1)
    gam_rows = jnp.tile(params["gamma"].reshape(1, C), (N, 1)).reshape(B, 1)
    bet_rows = jnp.tile(params["beta"].reshape(1, C), (N, 1)).reshape(B, 1)
    w2_big = jnp.kron(eye_n, params["w2"].T)                             # (N*Cout, B)
    b2_rows = jnp.tile(params["b2"].reshape(1, Cout), (N, 1)).reshape(N * Cout, 1)

    x3 = x_nchw.reshape(B, H, W)

    operands = (x3, consts["uw_b"], consts["uh_b"], consts["masks"], consts["m_avg"],
                w1_big, b1_rows, gam_rows, bet_rows, w2_big, b2_rows)

    # vmem limit derived from actual operand/scratch/output bytes (+ headroom).
    operand_bytes = sum(int(np.prod(o.shape)) * 4 for o in operands)
    extra_bytes = 4 * (B * H2 * W2 + B * HW2 + N * Cout * HW2)
    vmem_limit = int(min(max(8 * (operand_bytes + extra_bytes), 4 << 20), 64 << 20))

    kern = functools.partial(_peb_fused_kernel, (N, C, Cout, H, W))
    vmem = pltpu.MemorySpace.VMEM
    out2d = pl.pallas_call(
        kern,
        out_shape=jax.ShapeDtypeStruct((N * Cout, HW2), jnp.float32),
        in_specs=[pl.BlockSpec(memory_space=vmem)] * len(operands),
        out_specs=pl.BlockSpec(memory_space=vmem),
        scratch_shapes=[pltpu.VMEM((B, H2, W2), jnp.float32),
                        pltpu.VMEM((B, HW2), jnp.float32)],
        compiler_params=pltpu.CompilerParams(vmem_limit_bytes=vmem_limit),
    )(*operands)
    return out2d.reshape(N, Cout, H2, W2)


# ----------------------------------------------------------------------------
# Pure-JAX reference (correctness check only)
# ----------------------------------------------------------------------------
def upsample_bilinear_x2_align_corners(x):
    N, H, W, C = x.shape
    H2, W2 = 2 * H, 2 * W

    def coords(out_size, in_size):
        if in_size == 1:
            src = jnp.zeros((out_size,), jnp.float32)
        else:
            src = jnp.arange(out_size, dtype=jnp.float32) * (in_size - 1) / (out_size - 1)
        lo = jnp.floor(src).astype(jnp.int32)
        hi = jnp.minimum(lo + 1, in_size - 1)
        frac = src - lo.astype(jnp.float32)
        return lo, hi, frac

    y0, y1, wy = coords(H2, H)
    x0, x1, wx = coords(W2, W)
    r0 = jnp.take(x, y0, axis=1)
    r1 = jnp.take(x, y1, axis=1)
    rows = r0 * (1.0 - wy)[None, :, None, None] + r1 * wy[None, :, None, None]
    c0 = jnp.take(rows, x0, axis=2)
    c1 = jnp.take(rows, x1, axis=2)
    return c0 * (1.0 - wx)[None, None, :, None] + c1 * wx[None, None, :, None]


def peb_reference(x_nchw, params):
    x = jnp.transpose(x_nchw, (0, 2, 3, 1))
    x1 = upsample_bilinear_x2_align_corners(x)
    dn = ("NHWC", "HWIO", "NHWC")
    y = lax.conv_general_dilated(x1, params["w1"], (1, 1), "SAME",
                                 dimension_numbers=dn) + params["b1"]
    mean = jnp.mean(y, axis=(0, 1, 2))
    var = jnp.mean((y - mean) ** 2, axis=(0, 1, 2))
    eps = 1e-5
    yhat = (y - mean) / jnp.sqrt(var + eps) * params["gamma"] + params["beta"]
    z = x1 + jnp.maximum(yhat, 0.0)
    C, Cout = params["w2"].shape
    out = lax.conv_general_dilated(z, params["w2"].reshape(1, 1, C, Cout),
                                   (1, 1), "SAME",
                                   dimension_numbers=dn) + params["b2"]
    return jnp.transpose(out, (0, 3, 1, 2))


if __name__ == "__main__":
    N, Cin, Cout, H, W = 2, 4, 8, 16, 16
    key = jax.random.PRNGKey(0)
    kx, kw1, kb1, kw2, kb2 = jax.random.split(key, 5)

    x = jax.random.normal(kx, (N, Cin, H, W), jnp.float32)

    params = {
        # conv1: 3x3, Cin -> Cin (HWIO)
        "w1": 0.1 * jax.random.normal(kw1, (3, 3, Cin, Cin), jnp.float32),
        "b1": 0.1 * jax.random.normal(kb1, (Cin,), jnp.float32),
        # BatchNorm2d(Cin) default init
        "gamma": jnp.ones((Cin,), jnp.float32),
        "beta": jnp.zeros((Cin,), jnp.float32),
        # conv2: 1x1, Cin -> Cout
        "w2": 0.1 * jax.random.normal(kw2, (Cin, Cout), jnp.float32),
        "b2": 0.1 * jax.random.normal(kb2, (Cout,), jnp.float32),
    }

    fwd = jax.jit(peb_forward)
    out = jax.block_until_ready(fwd(x, params))
    ref = jax.block_until_ready(peb_reference(x, params))

    assert out.shape == (N, Cout, 2 * H, 2 * W), out.shape
    err = float(jnp.max(jnp.abs(out - ref)))
    assert err < 1e-3, err
    print("KERNEL_OK")
</pallas_src>

<mosaic_0001>
module attributes {stable_mosaic.version = 11 : i64} {
  func.func @_peb_fused_kernel(%arg0: memref<8x16x16xf32, #tpu.memory_space<vmem>>, %arg1: memref<8x32x16xf32, #tpu.memory_space<vmem>>, %arg2: memref<8x32x16xf32, #tpu.memory_space<vmem>>, %arg3: memref<4x1024xf32, #tpu.memory_space<vmem>>, %arg4: memref<8x8xf32, #tpu.memory_space<vmem>>, %arg5: memref<8x72xf32, #tpu.memory_space<vmem>>, %arg6: memref<8x1xf32, #tpu.memory_space<vmem>>, %arg7: memref<8x1xf32, #tpu.memory_space<vmem>>, %arg8: memref<8x1xf32, #tpu.memory_space<vmem>>, %arg9: memref<16x8xf32, #tpu.memory_space<vmem>>, %arg10: memref<16x1xf32, #tpu.memory_space<vmem>>, %arg11: memref<16x1024xf32, #tpu.memory_space<vmem>>, %arg12: memref<8x32x32xf32, #tpu.memory_space<vmem>>, %arg13: memref<8x1024xf32, #tpu.memory_space<vmem>>) attributes {dimension_semantics = [], scalar_prefetch = 0 : i64, scratch_operands = 2 : i64, tpu.core_type = #tpu.core_type<tc>} {
    %c0 = arith.constant 0 : index
    %c0_0 = arith.constant 0 : index
    %c0_1 = arith.constant 0 : index
    %0 = vector.load %arg0[%c0, %c0_0, %c0_1] : memref<8x16x16xf32, #tpu.memory_space<vmem>>, vector<8x16x16xf32>
    %c0_2 = arith.constant 0 : index
    %c0_3 = arith.constant 0 : index
    %c0_4 = arith.constant 0 : index
    %1 = vector.load %arg1[%c0_2, %c0_3, %c0_4] : memref<8x32x16xf32, #tpu.memory_space<vmem>>, vector<8x32x16xf32>
    "tpu.trace_start"() <{level = 10 : i32, message = "bhw,bjw->bhj"}> : () -> ()
    %cst = arith.constant dense<0.000000e+00> : vector<8x16x32xf32>
    %2 = tpu.matmul %0, %1, %cst {dimension_numbers = #tpu.dot_dimension_numbers<[2], [2], [1], [1], [0, 0, 0, 1, 1, 1], [0], [0]>} : vector<8x16x16xf32>, vector<8x32x16xf32>, vector<8x16x32xf32> -> vector<8x16x32xf32>
    "tpu.trace_stop"() : () -> ()
    %c0_5 = arith.constant 0 : index
    %c0_6 = arith.constant 0 : index
    %c0_7 = arith.constant 0 : index
    %3 = vector.load %arg2[%c0_5, %c0_6, %c0_7] : memref<8x32x16xf32, #tpu.memory_space<vmem>>, vector<8x32x16xf32>
    "tpu.trace_start"() <{level = 10 : i32, message = "bih,bhj->bij"}> : () -> ()
    %cst_8 = arith.constant dense<0.000000e+00> : vector<8x32x32xf32>
    %4 = tpu.matmul %3, %2, %cst_8 {dimension_numbers = #tpu.dot_dimension_numbers<[2], [1], [1], [2], [0, 0, 0, 1, 1, 2], [0], [0]>} : vector<8x32x16xf32>, vector<8x16x32xf32>, vector<8x32x32xf32> -> vector<8x32x32xf32>
    "tpu.trace_stop"() : () -> ()
    %c0_9 = arith.constant 0 : index
    %c0_10 = arith.constant 0 : index
    %c0_11 = arith.constant 0 : index
    %5 = vector.load %arg12[%c0_9, %c0_10, %c0_11] : memref<8x32x32xf32, #tpu.memory_space<vmem>>, vector<8x32x32xf32>
    tpu.vector_store %arg12[%c0_9, %c0_10, %c0_11], %4 {strides = array<i32>} : memref<8x32x32xf32, #tpu.memory_space<vmem>>, vector<8x32x32xf32>,
    %c0_12 = arith.constant 0 : index
    %c0_13 = arith.constant 0 : index
    %c0_14 = arith.constant 0 : index
    %6 = vector.load %arg12[%c0_12, %c0_13, %c0_14] : memref<8x32x32xf32, #tpu.memory_space<vmem>>, vector<8x1x32xf32>
    %7 = vector.shape_cast %6 : vector<8x1x32xf32> to vector<8x32xf32>
    %c0_15 = arith.constant 0 : index
    %c0_16 = arith.constant 0 : index
    %8 = vector.load %arg13[%c0_15, %c0_16] : memref<8x1024xf32, #tpu.memory_space<vmem>>, vector<8x32xf32>
    tpu.vector_store %arg13[%c0_15, %c0_16], %7 {strides = array<i32>} : memref<8x1024xf32, #tpu.memory_space<vmem>>, vector<8x32xf32>,
    %c0_17 = arith.constant 0 : index
    %c1 = arith.constant 1 : index
    %c0_18 = arith.constant 0 : index
    %9 = vector.load %arg12[%c0_17, %c1, %c0_18] : memref<8x32x32xf32, #tpu.memory_space<vmem>>, vector<8x1x32xf32>
    %10 = vector.shape_cast %9 : vector<8x1x32xf32> to vector<8x32xf32>
    %c0_19 = arith.constant 0 : index
    %c32 = arith.constant 32 : index
    %11 = vector.load %arg13[%c0_19, %c32] : memref<8x1024xf32, #tpu.memory_space<vmem>>, vector<8x32xf32>
    tpu.vector_store %arg13[%c0_19, %c32], %10 {strides = array<i32>} : memref<8x1024xf32, #tpu.memory_space<vmem>>, vector<8x32xf32>,
    %c0_20 = arith.constant 0 : index
    %c2 = arith.constant 2 : index
    %c0_21 = arith.constant 0 : index
    %12 = vector.load %arg12[%c0_20, %c2, %c0_21] : memref<8x32x32xf32, #tpu.memory_space<vmem>>, vector<8x1x32xf32>
    %13 = vector.shape_cast %12 : vector<8x1x32xf32> to vector<8x32xf32>
    %c0_22 = arith.constant 0 : index
    %c64 = arith.constant 64 : index
    %14 = vector.load %arg13[%c0_22, %c64] : memref<8x1024xf32, #tpu.memory_space<vmem>>, vector<8x32xf32>
    tpu.vector_store %arg13[%c0_22, %c64], %13 {strides = array<i32>} : memref<8x1024xf32, #tpu.memory_space<vmem>>, vector<8x32xf32>,
    %c0_23 = arith.constant 0 : index
    %c3 = arith.constant 3 : index
    %c0_24 = arith.constant 0 : index
    %15 = vector.load %arg12[%c0_23, %c3, %c0_24] : memref<8x32x32xf32, #tpu.memory_space<vmem>>, vector<8x1x32xf32>
    %16 = vector.shape_cast %15 : vector<8x1x32xf32> to vector<8x32xf32>
    %c0_25 = arith.constant 0 : index
    %c96 = arith.constant 96 : index
    %17 = vector.load %arg13[%c0_25, %c96] : memref<8x1024xf32, #tpu.memory_space<vmem>>, vector<8x32xf32>
    tpu.vector_store %arg13[%c0_25, %c96], %16 {strides = array<i32>} : memref<8x1024xf32, #tpu.memory_space<vmem>>, vector<8x32xf32>,
    %c0_26 = arith.constant 0 : index
    %c4 = arith.constant 4 : index
    %c0_27 = arith.constant 0 : index
    %18 = vector.load %arg12[%c0_26, %c4, %c0_27] : memref<8x32x32xf32, #tpu.memory_space<vmem>>, vector<8x1x32xf32>
    %19 = vector.shape_cast %18 : vector<8x1x32xf32> to vector<8x32xf32>
    %c0_28 = arith.constant 0 : index
    %c128 = arith.constant 128 : index
    %20 = vector.load %arg13[%c0_28, %c128] : memref<8x1024xf32, #tpu.memory_space<vmem>>, vector<8x32xf32>
    tpu.vector_store %arg13[%c0_28, %c128], %19 {strides = array<i32>} : memref<8x1024xf32, #tpu.memory_space<vmem>>, vector<8x32xf32>,
    %c0_29 = arith.constant 0 : index
    %c5 = arith.constant 5 : index
    %c0_30 = arith.constant 0 : index
    %21 = vector.load %arg12[%c0_29, %c5, %c0_30] : memref<8x32x32xf32, #tpu.memory_space<vmem>>, vector<8x1x32xf32>
    %22 = vector.shape_cast %21 : vector<8x1x32xf32> to vector<8x32xf32>
    %c0_31 = arith.constant 0 : index
    %c160 = arith.constant 160 : index
    %23 = vector.load %arg13[%c0_31, %c160] : memref<8x1024xf32, #tpu.memory_space<vmem>>, vector<8x32xf32>
    tpu.vector_store %arg13[%c0_31, %c160], %22 {strides = array<i32>} : memref<8x1024xf32, #tpu.memory_space<vmem>>, vector<8x32xf32>,
    %c0_32 = arith.constant 0 : index
    %c6 = arith.constant 6 : index
    %c0_33 = arith.constant 0 : index
    %24 = vector.load %arg12[%c0_32, %c6, %c0_33] : memref<8x32x32xf32, #tpu.memory_space<vmem>>, vector<8x1x32xf32>
    %25 = vector.shape_cast %24 : vector<8x1x32xf32> to vector<8x32xf32>
    %c0_34 = arith.constant 0 : index
    %c192 = arith.constant 192 : index
    %26 = vector.load %arg13[%c0_34, %c192] : memref<8x1024xf32, #tpu.memory_space<vmem>>, vector<8x32xf32>
    tpu.vector_store %arg13[%c0_34, %c192], %25 {strides = array<i32>} : memref<8x1024xf32, #tpu.memory_space<vmem>>, vector<8x32xf32>,
    %c0_35 = arith.constant 0 : index
    %c7 = arith.constant 7 : index
    %c0_36 = arith.constant 0 : index
    %27 = vector.load %arg12[%c0_35, %c7, %c0_36] : memref<8x32x32xf32, #tpu.memory_space<vmem>>, vector<8x1x32xf32>
    %28 = vector.shape_cast %27 : vector<8x1x32xf32> to vector<8x32xf32>
    %c0_37 = arith.constant 0 : index
    %c224 = arith.constant 224 : index
    %29 = vector.load %arg13[%c0_37, %c224] : memref<8x1024xf32, #tpu.memory_space<vmem>>, vector<8x32xf32>
    tpu.vector_store %arg13[%c0_37, %c224], %28 {strides = array<i32>} : memref<8x1024xf32, #tpu.memory_space<vmem>>, vector<8x32xf32>,
    %c0_38 = arith.constant 0 : index
    %c8 = arith.constant 8 : index
    %c0_39 = arith.constant 0 : index
    %30 = vector.load %arg12[%c0_38, %c8, %c0_39] : memref<8x32x32xf32, #tpu.memory_space<vmem>>, vector<8x1x32xf32>
    %31 = vector.shape_cast %30 : vector<8x1x32xf32> to vector<8x32xf32>
    %c0_40 = arith.constant 0 : index
    %c256 = arith.constant 256 : index
    %32 = vector.load %arg13[%c0_40, %c256] : memref<8x1024xf32, #tpu.memory_space<vmem>>, vector<8x32xf32>
    tpu.vector_store %arg13[%c0_40, %c256], %31 {strides = array<i32>} : memref<8x1024xf32, #tpu.memory_space<vmem>>, vector<8x32xf32>,
    %c0_41 = arith.constant 0 : index
    %c9 = arith.constant 9 : index
    %c0_42 = arith.constant 0 : index
    %33 = vector.load %arg12[%c0_41, %c9, %c0_42] : memref<8x32x32xf32, #tpu.memory_space<vmem>>, vector<8x1x32xf32>
    %34 = vector.shape_cast %33 : vector<8x1x32xf32> to vector<8x32xf32>
    %c0_43 = arith.constant 0 : index
    %c288 = arith.constant 288 : index
    %35 = vector.load %arg13[%c0_43, %c288] : memref<8x1024xf32, #tpu.memory_space<vmem>>, vector<8x32xf32>
    tpu.vector_store %arg13[%c0_43, %c288], %34 {strides = array<i32>} : memref<8x1024xf32, #tpu.memory_space<vmem>>, vector<8x32xf32>,
    %c0_44 = arith.constant 0 : index
    %c10 = arith.constant 10 : index
    %c0_45 = arith.constant 0 : index
    %36 = vector.load %arg12[%c0_44, %c10, %c0_45] : memref<8x32x32xf32, #tpu.memory_space<vmem>>, vector<8x1x32xf32>
    %37 = vector.shape_cast %36 : vector<8x1x32xf32> to vector<8x32xf32>
    %c0_46 = arith.constant 0 : index
    %c320 = arith.constant 320 : index
    %38 = vector.load %arg13[%c0_46, %c320] : memref<8x1024xf32, #tpu.memory_space<vmem>>, vector<8x32xf32>
    tpu.vector_store %arg13[%c0_46, %c320], %37 {strides = array<i32>} : memref<8x1024xf32, #tpu.memory_space<vmem>>, vector<8x32xf32>,
    %c0_47 = arith.constant 0 : index
    %c11 = arith.constant 11 : index
    %c0_48 = arith.constant 0 : index
    %39 = vector.load %arg12[%c0_47, %c11, %c0_48] : memref<8x32x32xf32, #tpu.memory_space<vmem>>, vector<8x1x32xf32>
    %40 = vector.shape_cast %39 : vector<8x1x32xf32> to vector<8x32xf32>
    %c0_49 = arith.constant 0 : index
    %c352 = arith.constant 352 : index
    %41 = vector.load %arg13[%c0_49, %c352] : memref<8x1024xf32, #tpu.memory_space<vmem>>, vector<8x32xf32>
    tpu.vector_store %arg13[%c0_49, %c352], %40 {strides = array<i32>} : memref<8x1024xf32, #tpu.memory_space<vmem>>, vector<8x32xf32>,
    %c0_50 = arith.constant 0 : index
    %c12 = arith.constant 12 : index
    %c0_51 = arith.constant 0 : index
    %42 = vector.load %arg12[%c0_50, %c12, %c0_51] : memref<8x32x32xf32, #tpu.memory_space<vmem>>, vector<8x1x32xf32>
    %43 = vector.shape_cast %42 : vector<8x1x32xf32> to vector<8x32xf32>
    %c0_52 = arith.constant 0 : index
    %c384 = arith.constant 384 : index
    %44 = vector.load %arg13[%c0_52, %c384] : memref<8x1024xf32, #tpu.memory_space<vmem>>, vector<8x32xf32>
    tpu.vector_store %arg13[%c0_52, %c384], %43 {strides = array<i32>} : memref<8x1024xf32, #tpu.memory_space<vmem>>, vector<8x32xf32>,
    %c0_53 = arith.constant 0 : index
    %c13 = arith.constant 13 : index
    %c0_54 = arith.constant 0 : index
    %45 = vector.load %arg12[%c0_53, %c13, %c0_54] : memref<8x32x32xf32, #tpu.memory_space<vmem>>, vector<8x1x32xf32>
    %46 = vector.shape_cast %45 : vector<8x1x32xf32> to vector<8x32xf32>
    %c0_55 = arith.constant 0 : index
    %c416 = arith.constant 416 : index
    %47 = vector.load %arg13[%c0_55, %c416] : memref<8x1024xf32, #tpu.memory_space<vmem>>, vector<8x32xf32>
    tpu.vector_store %arg13[%c0_55, %c416], %46 {strides = array<i32>} : memref<8x1024xf32, #tpu.memory_space<vmem>>, vector<8x32xf32>,
    %c0_56 = arith.constant 0 : index
    %c14 = arith.constant 14 : index
    %c0_57 = arith.constant 0 : index
    %48 = vector.load %arg12[%c0_56, %c14, %c0_57] : memref<8x32x32xf32, #tpu.memory_space<vmem>>, vector<8x1x32xf32>
    %49 = vector.shape_cast %48 : vector<8x1x32xf32> to vector<8x32xf32>
    %c0_58 = arith.constant 0 : index
    %c448 = arith.constant 448 : index
    %50 = vector.load %arg13[%c0_58, %c448] : memref<8x1024xf32, #tpu.memory_space<vmem>>, vector<8x32xf32>
    tpu.vector_store %arg13[%c0_58, %c448], %49 {strides = array<i32>} : memref<8x1024xf32, #tpu.memory_space<vmem>>, vector<8x32xf32>,
    %c0_59 = arith.constant 0 : index
    %c15 = arith.constant 15 : index
    %c0_60 = arith.constant 0 : index
    %51 = vector.load %arg12[%c0_59, %c15, %c0_60] : memref<8x32x32xf32, #tpu.memory_space<vmem>>, vector<8x1x32xf32>
    %52 = vector.shape_cast %51 : vector<8x1x32xf32> to vector<8x32xf32>
    %c0_61 = arith.constant 0 : index
    %c480 = arith.constant 480 : index
    %53 = vector.load %arg13[%c0_61, %c480] : memref<8x1024xf32, #tpu.memory_space<vmem>>, vector<8x32xf32>
    tpu.vector_store %arg13[%c0_61, %c480], %52 {strides = array<i32>} : memref<8x1024xf32, #tpu.memory_space<vmem>>, vector<8x32xf32>,
    %c0_62 = arith.constant 0 : index
    %c16 = arith.constant 16 : index
    %c0_63 = arith.constant 0 : index
    %54 = vector.load %arg12[%c0_62, %c16, %c0_63] : memref<8x32x32xf32, #tpu.memory_space<vmem>>, vector<8x1x32xf32>
    %55 = vector.shape_cast %54 : vector<8x1x32xf32> to vector<8x32xf32>
    %c0_64 = arith.constant 0 : index
    %c512 = arith.constant 512 : index
    %56 = vector.load %arg13[%c0_64, %c512] : memref<8x1024xf32, #tpu.memory_space<vmem>>, vector<8x32xf32>
    tpu.vector_store %arg13[%c0_64, %c512], %55 {strides = array<i32>} : memref<8x1024xf32, #tpu.memory_space<vmem>>, vector<8x32xf32>,
    %c0_65 = arith.constant 0 : index
    %c17 = arith.constant 17 : index
    %c0_66 = arith.constant 0 : index
    %57 = vector.load %arg12[%c0_65, %c17, %c0_66] : memref<8x32x32xf32, #tpu.memory_space<vmem>>, vector<8x1x32xf32>
    %58 = vector.shape_cast %57 : vector<8x1x32xf32> to vector<8x32xf32>
    %c0_67 = arith.constant 0 : index
    %c544 = arith.constant 544 : index
    %59 = vector.load %arg13[%c0_67, %c544] : memref<8x1024xf32, #tpu.memory_space<vmem>>, vector<8x32xf32>
    tpu.vector_store %arg13[%c0_67, %c544], %58 {strides = array<i32>} : memref<8x1024xf32, #tpu.memory_space<vmem>>, vector<8x32xf32>,
    %c0_68 = arith.constant 0 : index
    %c18 = arith.constant 18 : index
    %c0_69 = arith.constant 0 : index
    %60 = vector.load %arg12[%c0_68, %c18, %c0_69] : memref<8x32x32xf32, #tpu.memory_space<vmem>>, vector<8x1x32xf32>
    %61 = vector.shape_cast %60 : vector<8x1x32xf32> to vector<8x32xf32>
    %c0_70 = arith.constant 0 : index
    %c576 = arith.constant 576 : index
    %62 = vector.load %arg13[%c0_70, %c576] : memref<8x1024xf32, #tpu.memory_space<vmem>>, vector<8x32xf32>
    tpu.vector_store %arg13[%c0_70, %c576], %61 {strides = array<i32>} : memref<8x1024xf32, #tpu.memory_space<vmem>>, vector<8x32xf32>,
    %c0_71 = arith.constant 0 : index
    %c19 = arith.constant 19 : index
    %c0_72 = arith.constant 0 : index
    %63 = vector.load %arg12[%c0_71, %c19, %c0_72] : memref<8x32x32xf32, #tpu.memory_space<vmem>>, vector<8x1x32xf32>
    %64 = vector.shape_cast %63 : vector<8x1x32xf32> to vector<8x32xf32>
    %c0_73 = arith.constant 0 : index
    %c608 = arith.constant 608 : index
    %65 = vector.load %arg13[%c0_73, %c608] : memref<8x1024xf32, #tpu.memory_space<vmem>>, vector<8x32xf32>
    tpu.vector_store %arg13[%c0_73, %c608], %64 {strides = array<i32>} : memref<8x1024xf32, #tpu.memory_space<vmem>>, vector<8x32xf32>,
    %c0_74 = arith.constant 0 : index
    %c20 = arith.constant 20 : index
    %c0_75 = arith.constant 0 : index
    %66 = vector.load %arg12[%c0_74, %c20, %c0_75] : memref<8x32x32xf32, #tpu.memory_space<vmem>>, vector<8x1x32xf32>
    %67 = vector.shape_cast %66 : vector<8x1x32xf32> to vector<8x32xf32>
    %c0_76 = arith.constant 0 : index
    %c640 = arith.constant 640 : index
    %68 = vector.load %arg13[%c0_76, %c640] : memref<8x1024xf32, #tpu.memory_space<vmem>>, vector<8x32xf32>
    tpu.vector_store %arg13[%c0_76, %c640], %67 {strides = array<i32>} : memref<8x1024xf32, #tpu.memory_space<vmem>>, vector<8x32xf32>,
    %c0_77 = arith.constant 0 : index
    %c21 = arith.constant 21 : index
    %c0_78 = arith.constant 0 : index
    %69 = vector.load %arg12[%c0_77, %c21, %c0_78] : memref<8x32x32xf32, #tpu.memory_space<vmem>>, vector<8x1x32xf32>
    %70 = vector.shape_cast %69 : vector<8x1x32xf32> to vector<8x32xf32>
    %c0_79 = arith.constant 0 : index
    %c672 = arith.constant 672 : index
    %71 = vector.load %arg13[%c0_79, %c672] : memref<8x1024xf32, #tpu.memory_space<vmem>>, vector<8x32xf32>
    tpu.vector_store %arg13[%c0_79, %c672], %70 {strides = array<i32>} : memref<8x1024xf32, #tpu.memory_space<vmem>>, vector<8x32xf32>,
    %c0_80 = arith.constant 0 : index
    %c22 = arith.constant 22 : index
    %c0_81 = arith.constant 0 : index
    %72 = vector.load %arg12[%c0_80, %c22, %c0_81] : memref<8x32x32xf32, #tpu.memory_space<vmem>>, vector<8x1x32xf32>
    %73 = vector.shape_cast %72 : vector<8x1x32xf32> to vector<8x32xf32>
    %c0_82 = arith.constant 0 : index
    %c704 = arith.constant 704 : index
    %74 = vector.load %arg13[%c0_82, %c704] : memref<8x1024xf32, #tpu.memory_space<vmem>>, vector<8x32xf32>
    tpu.vector_store %arg13[%c0_82, %c704], %73 {strides = array<i32>} : memref<8x1024xf32, #tpu.memory_space<vmem>>, vector<8x32xf32>,
    %c0_83 = arith.constant 0 : index
    %c23 = arith.constant 23 : index
    %c0_84 = arith.constant 0 : index
    %75 = vector.load %arg12[%c0_83, %c23, %c0_84] : memref<8x32x32xf32, #tpu.memory_space<vmem>>, vector<8x1x32xf32>
    %76 = vector.shape_cast %75 : vector<8x1x32xf32> to vector<8x32xf32>
    %c0_85 = arith.constant 0 : index
    %c736 = arith.constant 736 : index
    %77 = vector.load %arg13[%c0_85, %c736] : memref<8x1024xf32, #tpu.memory_space<vmem>>, vector<8x32xf32>
    tpu.vector_store %arg13[%c0_85, %c736], %76 {strides = array<i32>} : memref<8x1024xf32, #tpu.memory_space<vmem>>, vector<8x32xf32>,
    %c0_86 = arith.constant 0 : index
    %c24 = arith.constant 24 : index
    %c0_87 = arith.constant 0 : index
    %78 = vector.load %arg12[%c0_86, %c24, %c0_87] : memref<8x32x32xf32, #tpu.memory_space<vmem>>, vector<8x1x32xf32>
    %79 = vector.shape_cast %78 : vector<8x1x32xf32> to vector<8x32xf32>
    %c0_88 = arith.constant 0 : index
    %c768 = arith.constant 768 : index
    %80 = vector.load %arg13[%c0_88, %c768] : memref<8x1024xf32, #tpu.memory_space<vmem>>, vector<8x32xf32>
    tpu.vector_store %arg13[%c0_88, %c768], %79 {strides = array<i32>} : memref<8x1024xf32, #tpu.memory_space<vmem>>, vector<8x32xf32>,
    %c0_89 = arith.constant 0 : index
    %c25 = arith.constant 25 : index
    %c0_90 = arith.constant 0 : index
    %81 = vector.load %arg12[%c0_89, %c25, %c0_90] : memref<8x32x32xf32, #tpu.memory_space<vmem>>, vector<8x1x32xf32>
    %82 = vector.shape_cast %81 : vector<8x1x32xf32> to vector<8x32xf32>
    %c0_91 = arith.constant 0 : index
    %c800 = arith.constant 800 : index
    %83 = vector.load %arg13[%c0_91, %c800] : memref<8x1024xf32, #tpu.memory_space<vmem>>, vector<8x32xf32>
    tpu.vector_store %arg13[%c0_91, %c800], %82 {strides = array<i32>} : memref<8x1024xf32, #tpu.memory_space<vmem>>, vector<8x32xf32>,
    %c0_92 = arith.constant 0 : index
    %c26 = arith.constant 26 : index
    %c0_93 = arith.constant 0 : index
    %84 = vector.load %arg12[%c0_92, %c26, %c0_93] : memref<8x32x32xf32, #tpu.memory_space<vmem>>, vector<8x1x32xf32>
    %85 = vector.shape_cast %84 : vector<8x1x32xf32> to vector<8x32xf32>
    %c0_94 = arith.constant 0 : index
    %c832 = arith.constant 832 : index
    %86 = vector.load %arg13[%c0_94, %c832] : memref<8x1024xf32, #tpu.memory_space<vmem>>, vector<8x32xf32>
    tpu.vector_store %arg13[%c0_94, %c832], %85 {strides = array<i32>} : memref<8x1024xf32, #tpu.memory_space<vmem>>, vector<8x32xf32>,
    %c0_95 = arith.constant 0 : index
    %c27 = arith.constant 27 : index
    %c0_96 = arith.constant 0 : index
    %87 = vector.load %arg12[%c0_95, %c27, %c0_96] : memref<8x32x32xf32, #tpu.memory_space<vmem>>, vector<8x1x32xf32>
    %88 = vector.shape_cast %87 : vector<8x1x32xf32> to vector<8x32xf32>
    %c0_97 = arith.constant 0 : index
    %c864 = arith.constant 864 : index
    %89 = vector.load %arg13[%c0_97, %c864] : memref<8x1024xf32, #tpu.memory_space<vmem>>, vector<8x32xf32>
    tpu.vector_store %arg13[%c0_97, %c864], %88 {strides = array<i32>} : memref<8x1024xf32, #tpu.memory_space<vmem>>, vector<8x32xf32>,
    %c0_98 = arith.constant 0 : index
    %c28 = arith.constant 28 : index
    %c0_99 = arith.constant 0 : index
    %90 = vector.load %arg12[%c0_98, %c28, %c0_99] : memref<8x32x32xf32, #tpu.memory_space<vmem>>, vector<8x1x32xf32>
    %91 = vector.shape_cast %90 : vector<8x1x32xf32> to vector<8x32xf32>
    %c0_100 = arith.constant 0 : index
    %c896 = arith.constant 896 : index
    %92 = vector.load %arg13[%c0_100, %c896] : memref<8x1024xf32, #tpu.memory_space<vmem>>, vector<8x32xf32>
    tpu.vector_store %arg13[%c0_100, %c896], %91 {strides = array<i32>} : memref<8x1024xf32, #tpu.memory_space<vmem>>, vector<8x32xf32>,
    %c0_101 = arith.constant 0 : index
    %c29 = arith.constant 29 : index
    %c0_102 = arith.constant 0 : index
    %93 = vector.load %arg12[%c0_101, %c29, %c0_102] : memref<8x32x32xf32, #tpu.memory_space<vmem>>, vector<8x1x32xf32>
    %94 = vector.shape_cast %93 : vector<8x1x32xf32> to vector<8x32xf32>
    %c0_103 = arith.constant 0 : index
    %c928 = arith.constant 928 : index
    %95 = vector.load %arg13[%c0_103, %c928] : memref<8x1024xf32, #tpu.memory_space<vmem>>, vector<8x32xf32>
    tpu.vector_store %arg13[%c0_103, %c928], %94 {strides = array<i32>} : memref<8x1024xf32, #tpu.memory_space<vmem>>, vector<8x32xf32>,
    %c0_104 = arith.constant 0 : index
    %c30 = arith.constant 30 : index
    %c0_105 = arith.constant 0 : index
    %96 = vector.load %arg12[%c0_104, %c30, %c0_105] : memref<8x32x32xf32, #tpu.memory_space<vmem>>, vector<8x1x32xf32>
    %97 = vector.shape_cast %96 : vector<8x1x32xf32> to vector<8x32xf32>
    %c0_106 = arith.constant 0 : index
    %c960 = arith.constant 960 : index
    %98 = vector.load %arg13[%c0_106, %c960] : memref<8x1024xf32, #tpu.memory_space<vmem>>, vector<8x32xf32>
    tpu.vector_store %arg13[%c0_106, %c960], %97 {strides = array<i32>} : memref<8x1024xf32, #tpu.memory_space<vmem>>, vector<8x32xf32>,
    %c0_107 = arith.constant 0 : index
    %c31 = arith.constant 31 : index
    %c0_108 = arith.constant 0 : index
    %99 = vector.load %arg12[%c0_107, %c31, %c0_108] : memref<8x32x32xf32, #tpu.memory_space<vmem>>, vector<8x1x32xf32>
    %100 = vector.shape_cast %99 : vector<8x1x32xf32> to vector<8x32xf32>
    %c0_109 = arith.constant 0 : index
    %c992 = arith.constant 992 : index
    %101 = vector.load %arg13[%c0_109, %c992] : memref<8x1024xf32, #tpu.memory_space<vmem>>, vector<8x32xf32>
    tpu.vector_store %arg13[%c0_109, %c992], %100 {strides = array<i32>} : memref<8x1024xf32, #tpu.memory_space<vmem>>, vector<8x32xf32>,
    %c0_110 = arith.constant 0 : index
    %c0_111 = arith.constant 0 : index
    %102 = vector.load %arg13[%c0_110, %c0_111] : memref<8x1024xf32, #tpu.memory_space<vmem>>, vector<8x1024xf32>
    %c0_112 = arith.constant 0 : index
    %c0_113 = arith.constant 0 : index
    %103 = vector.load %arg3[%c0_112, %c0_113] : memref<4x1024xf32, #tpu.memory_space<vmem>>, vector<1x1024xf32>
    %c1_114 = arith.constant 1 : index
    %c0_115 = arith.constant 0 : index
    %104 = vector.load %arg3[%c1_114, %c0_115] : memref<4x1024xf32, #tpu.memory_space<vmem>>, vector<1x1024xf32>
    %c2_116 = arith.constant 2 : index
    %c0_117 = arith.constant 0 : index
    %105 = vector.load %arg3[%c2_116, %c0_117] : memref<4x1024xf32, #tpu.memory_space<vmem>>, vector<1x1024xf32>
    %c3_118 = arith.constant 3 : index
    %c0_119 = arith.constant 0 : index
    %106 = vector.load %arg3[%c3_118, %c0_119] : memref<4x1024xf32, #tpu.memory_space<vmem>>, vector<1x1024xf32>
    %107 = vector.extract_strided_slice %102 {offsets = [0, 991], sizes = [8, 33], strides = [1, 1]} : vector<8x1024xf32> to vector<8x33xf32>
    %108 = vector.extract_strided_slice %102 {offsets = [0, 0], sizes = [8, 991], strides = [1, 1]} : vector<8x1024xf32> to vector<8x991xf32>
    %109 = tpu.concatenate %107, %108 in 1 : vector<8x33xf32>, vector<8x991xf32> -> vector<8x1024xf32>
    %110 = arith.mulf %103, %105 : vector<1x1024xf32>
    %111 = vector.broadcast %110 : vector<1x1024xf32> to vector<8x1024xf32>
    %112 = arith.mulf %109, %111 : vector<8x1024xf32>
    %113 = vector.extract_strided_slice %102 {offsets = [0, 992], sizes = [8, 32], strides = [1, 1]} : vector<8x1024xf32> to vector<8x32xf32>
    %114 = vector.extract_strided_slice %102 {offsets = [0, 0], sizes = [8, 992], strides = [1, 1]} : vector<8x1024xf32> to vector<8x992xf32>
    %115 = tpu.concatenate %113, %114 in 1 : vector<8x32xf32>, vector<8x992xf32> -> vector<8x1024xf32>
    %116 = vector.broadcast %103 : vector<1x1024xf32> to vector<8x1024xf32>
    %117 = arith.mulf %115, %116 : vector<8x1024xf32>
    %118 = vector.extract_strided_slice %102 {offsets = [0, 993], sizes = [8, 31], strides = [1, 1]} : vector<8x1024xf32> to vector<8x31xf32>
    %119 = vector.extract_strided_slice %102 {offsets = [0, 0], sizes = [8, 993], strides = [1, 1]} : vector<8x1024xf32> to vector<8x993xf32>
    %120 = tpu.concatenate %118, %119 in 1 : vector<8x31xf32>, vector<8x993xf32> -> vector<8x1024xf32>
    %121 = arith.mulf %103, %106 : vector<1x1024xf32>
    %122 = vector.broadcast %121 : vector<1x1024xf32> to vector<8x1024xf32>
    %123 = arith.mulf %120, %122 : vector<8x1024xf32>
    %124 = vector.extract_strided_slice %102 {offsets = [0, 1023], sizes = [8, 1], strides = [1, 1]} : vector<8x1024xf32> to vector<8x1xf32>
    %125 = vector.extract_strided_slice %102 {offsets = [0, 0], sizes = [8, 1023], strides = [1, 1]} : vector<8x1024xf32> to vector<8x1023xf32>
    %126 = tpu.concatenate %124, %125 in 1 : vector<8x1xf32>, vector<8x1023xf32> -> vector<8x1024xf32>
    %127 = vector.broadcast %105 : vector<1x1024xf32> to vector<8x1024xf32>
    %128 = arith.mulf %126, %127 : vector<8x1024xf32>
    %129 = vector.extract_strided_slice %102 {offsets = [0, 1], sizes = [8, 1023], strides = [1, 1]} : vector<8x1024xf32> to vector<8x1023xf32>
    %130 = vector.extract_strided_slice %102 {offsets = [0, 0], sizes = [8, 1], strides = [1, 1]} : vector<8x1024xf32> to vector<8x1xf32>
    %131 = tpu.concatenate %129, %130 in 1 : vector<8x1023xf32>, vector<8x1xf32> -> vector<8x1024xf32>
    %132 = vector.broadcast %106 : vector<1x1024xf32> to vector<8x1024xf32>
    %133 = arith.mulf %131, %132 : vector<8x1024xf32>
    %134 = vector.extract_strided_slice %102 {offsets = [0, 31], sizes = [8, 993], strides = [1, 1]} : vector<8x1024xf32> to vector<8x993xf32>
    %135 = vector.extract_strided_slice %102 {offsets = [0, 0], sizes = [8, 31], strides = [1, 1]} : vector<8x1024xf32> to vector<8x31xf32>
    %136 = tpu.concatenate %134, %135 in 1 : vector<8x993xf32>, vector<8x31xf32> -> vector<8x1024xf32>
    %137 = arith.mulf %104, %105 : vector<1x1024xf32>
    %138 = vector.broadcast %137 : vector<1x1024xf32> to vector<8x1024xf32>
    %139 = arith.mulf %136, %138 : vector<8x1024xf32>
    %140 = vector.extract_strided_slice %102 {offsets = [0, 32], sizes = [8, 992], strides = [1, 1]} : vector<8x1024xf32> to vector<8x992xf32>
    %141 = vector.extract_strided_slice %102 {offsets = [0, 0], sizes = [8, 32], strides = [1, 1]} : vector<8x1024xf32> to vector<8x32xf32>
    %142 = tpu.concatenate %140, %141 in 1 : vector<8x992xf32>, vector<8x32xf32> -> vector<8x1024xf32>
    %143 = vector.broadcast %104 : vector<1x1024xf32> to vector<8x1024xf32>
    %144 = arith.mulf %142, %143 : vector<8x1024xf32>
    %145 = vector.extract_strided_slice %102 {offsets = [0, 33], sizes = [8, 991], strides = [1, 1]} : vector<8x1024xf32> to vector<8x991xf32>
    %146 = vector.extract_strided_slice %102 {offsets = [0, 0], sizes = [8, 33], strides = [1, 1]} : vector<8x1024xf32> to vector<8x33xf32>
    %147 = tpu.concatenate %145, %146 in 1 : vector<8x991xf32>, vector<8x33xf32> -> vector<8x1024xf32>
    %148 = arith.mulf %104, %106 : vector<1x1024xf32>
    %149 = vector.broadcast %148 : vector<1x1024xf32> to vector<8x1024xf32>
    %150 = arith.mulf %147, %149 : vector<8x1024xf32>
    %151 = tpu.concatenate %112, %117, %123, %128, %102, %133, %139, %144, %150 in 0 : vector<8x1024xf32>, vector<8x1024xf32>, vector<8x1024xf32>, vector<8x1024xf32>, vector<8x1024xf32>, vector<8x1024xf32>, vector<8x1024xf32>, vector<8x1024xf32>, vector<8x1024xf32> -> vector<72x1024xf32>
    %c0_120 = arith.constant 0 : index
    %c0_121 = arith.constant 0 : index
    %152 = vector.load %arg5[%c0_120, %c0_121] : memref<8x72xf32, #tpu.memory_space<vmem>>, vector<8x72xf32>
    %cst_122 = arith.constant dense<0.000000e+00> : vector<8x1024xf32>
    %153 = tpu.matmul %152, %151, %cst_122 {dimension_numbers = #tpu.dot_dimension_numbers<[1], [0], [0], [1], [0, 0, 1, 1], [], []>} : vector<8x72xf32>, vector<72x1024xf32>, vector<8x1024xf32> -> vector<8x1024xf32>
    %c0_123 = arith.constant 0 : index
    %c0_124 = arith.constant 0 : index
    %154 = vector.load %arg6[%c0_123, %c0_124] : memref<8x1xf32, #tpu.memory_space<vmem>>, vector<8x1xf32>
    %155 = vector.broadcast %154 : vector<8x1xf32> to vector<8x1024xf32>
    %156 = arith.addf %153, %155 : vector<8x1024xf32>
    %cst_125 = arith.constant dense<0.000000e+00> : vector<8xf32>
    %157 = vector.multi_reduction <add>, %156, %cst_125 [1] : vector<8x1024xf32> to vector<8xf32>
    %158 = vector.shape_cast %157 : vector<8xf32> to vector<8x1xf32>
    %c0_126 = arith.constant 0 : index
    %c0_127 = arith.constant 0 : index
    %159 = vector.load %arg4[%c0_126, %c0_127] : memref<8x8xf32, #tpu.memory_space<vmem>>, vector<8x8xf32>
    %cst_128 = arith.constant dense<0.000000e+00> : vector<8x1xf32>
    %160 = tpu.matmul %159, %158, %cst_128 {dimension_numbers = #tpu.dot_dimension_numbers<[1], [0], [0], [1], [0, 0, 1, 1], [], []>} : vector<8x8xf32>, vector<8x1xf32>, vector<8x1xf32> -> vector<8x1xf32>
    %161 = vector.broadcast %160 : vector<8x1xf32> to vector<8x1024xf32>
    %162 = arith.subf %156, %161 : vector<8x1024xf32>
    %163 = arith.mulf %162, %162 : vector<8x1024xf32>
    %cst_129 = arith.constant dense<0.000000e+00> : vector<8xf32>
    %164 = vector.multi_reduction <add>, %163, %cst_129 [1] : vector<8x1024xf32> to vector<8xf32>
    %165 = vector.shape_cast %164 : vector<8xf32> to vector<8x1xf32>
    %c0_130 = arith.constant 0 : index
    %c0_131 = arith.constant 0 : index
    %166 = vector.load %arg4[%c0_130, %c0_131] : memref<8x8xf32, #tpu.memory_space<vmem>>, vector<8x8xf32>
    %cst_132 = arith.constant dense<0.000000e+00> : vector<8x1xf32>
    %167 = tpu.matmul %166, %165, %cst_132 {dimension_numbers = #tpu.dot_dimension_numbers<[1], [0], [0], [1], [0, 0, 1, 1], [], []>} : vector<8x8xf32>, vector<8x1xf32>, vector<8x1xf32> -> vector<8x1xf32>
    %c0_133 = arith.constant 0 : index
    %c0_134 = arith.constant 0 : index
    %168 = vector.load %arg7[%c0_133, %c0_134] : memref<8x1xf32, #tpu.memory_space<vmem>>, vector<8x1xf32>
    %cst_135 = arith.constant 9.99999974E-6 : f32
    %169 = vector.broadcast %cst_135 : f32 to vector<8x1xf32>
    %170 = arith.addf %167, %169 : vector<8x1xf32>
    %171 = math.rsqrt %170 : vector<8x1xf32>
    %172 = arith.mulf %168, %171 : vector<8x1xf32>
    %c0_136 = arith.constant 0 : index
    %c0_137 = arith.constant 0 : index
    %173 = vector.load %arg8[%c0_136, %c0_137] : memref<8x1xf32, #tpu.memory_space<vmem>>, vector<8x1xf32>
    %174 = arith.mulf %160, %172 : vector<8x1xf32>
    %175 = arith.subf %173, %174 : vector<8x1xf32>
    %176 = vector.broadcast %172 : vector<8x1xf32> to vector<8x1024xf32>
    %177 = arith.mulf %156, %176 : vector<8x1024xf32>
    %178 = vector.broadcast %175 : vector<8x1xf32> to vector<8x1024xf32>
    %179 = arith.addf %177, %178 : vector<8x1024xf32>
    %cst_138 = arith.constant 0.000000e+00 : f32
    %180 = vector.broadcast %cst_138 : f32 to vector<8x1024xf32>
    %181 = arith.maximumf %179, %180 : vector<8x1024xf32>
    %182 = arith.addf %102, %181 : vector<8x1024xf32>
    %c0_139 = arith.constant 0 : index
    %c0_140 = arith.constant 0 : index
    %183 = vector.load %arg9[%c0_139, %c0_140] : memref<16x8xf32, #tpu.memory_space<vmem>>, vector<16x8xf32>
    %cst_141 = arith.constant dense<0.000000e+00> : vector<16x1024xf32>
    %184 = tpu.matmul %183, %182, %cst_141 {dimension_numbers = #tpu.dot_dimension_numbers<[1], [0], [0], [1], [0, 0, 1, 1], [], []>} : vector<16x8xf32>, vector<8x1024xf32>, vector<16x1024xf32> -> vector<16x1024xf32>
    %c0_142 = arith.constant 0 : index
    %c0_143 = arith.constant 0 : index
    %185 = vector.load %arg10[%c0_142, %c0_143] : memref<16x1xf32, #tpu.memory_space<vmem>>, vector<16x1xf32>
    %186 = vector.broadcast %185 : vector<16x1xf32> to vector<16x1024xf32>
    %187 = arith.addf %184, %186 : vector<16x1024xf32>
    %c0_144 = arith.constant 0 : index
    %c0_145 = arith.constant 0 : index
    %188 = vector.load %arg11[%c0_144, %c0_145] : memref<16x1024xf32, #tpu.memory_space<vmem>>, vector<16x1024xf32>
    tpu.vector_store %arg11[%c0_144, %c0_145], %187 {strides = array<i32>} : memref<16x1024xf32, #tpu.memory_space<vmem>>, vector<16x1024xf32>,
    return
  }
}

</mosaic_0001>

<llo_original>
// kernel: tile.18
$region0: #{tile.18}
  #allocation0 [shape = 's32[1]{0}', space=sflag, size = 0x4, scoped, tag = 'scoped memory for tile.18']
  %s0 = inlined_call_operand.vmem [shape: f32[4], index: 0, kind: input, shape index: {}]
  %s1 = inlined_call_operand.vmem [shape: f32[2,1,1,4], index: 1, kind: output, shape index: {}]
  // Predicated region
  $region2: #{tile.18} parent=0 // pred_check
    _
  $region3: #{tile.18} parent=0 // pred_check_branch
    %3 = sbr.rel (0) target = $region5
  $region4: #{tile.18} parent=0 // pred_region
    _
  $region5: #{tile.18} parent=0 // pred_fallthru
    _
  %v4 = vld [vmem:[%s0] ss:$0 sm:$0xff]
  %5 = vst [vmem:[%s1] sm:$0x3] %v4

// kernel: tile.30
$region0: #{tile.30}
  #allocation0 [shape = 's32[1]{0}', space=sflag, size = 0x4, scoped, tag = 'scoped memory for tile.30']
  %s0 = inlined_call_operand.vmem [shape: f32[8], index: 0, kind: input, shape index: {}]
  %s1 = inlined_call_operand.vmem [shape: f32[2,1,1,8], index: 1, kind: output, shape index: {}]
  // Predicated region
  $region2: #{tile.30} parent=0 // pred_check
    _
  $region3: #{tile.30} parent=0 // pred_check_branch
    %3 = sbr.rel (0) target = $region5
  $region4: #{tile.30} parent=0 // pred_region
    _
  $region5: #{tile.30} parent=0 // pred_fallthru
    _
  %v4 = vld [vmem:[%s0] ss:$0 sm:$0xff]
  %5 = vst [vmem:[%s1] sm:$0x3] %v4

// kernel: tile.3
$region0: #{tile.3}
  %s0 = inlined_call_operand.vmem [shape: f32[2,1,1,8], index: 0, kind: input, shape index: {}]
  %s1 = inlined_call_operand.vmem [shape: f32[16,1], index: 1, kind: output, shape index: {}]
  $region1: #{tile.3} parent=0
    #allocation0 [shape = 'u8[4096]{0}', space=vmem, size = 0x1000, scoped, tag = 'scoped mem for input reshape']
    %s3 = sshllo.u32 0, 2
    %v4 = vld [vmem:[%s0] sm:%s3]
    %5 = vst [vmem:[#allocation0] sm:%s3] %v4
    %v6 = vld [vmem:[#allocation0] sm:$0x3]
    %vm7 = vcmask 7168
    %8 = vst.msk [vmem:[%s1] ss:$8 sm:$0x3] %vm7, %v6
    %v9 = vld [vmem:[#allocation0] sm:$0x3]
    %10 = vrot.lane.b32.xlu0 %v9, 127
    %v11 = vpop.permute.xlu0 %10
    %vm12 = vcmask 7168
    %s13 = scalar_lea.vmem %s1, 1
    %14 = vst.msk [vmem:[%s13] ss:$8 sm:$0x3] %vm12, %v11
    %v15 = vld [vmem:[#allocation0] sm:$0x3]
    %16 = vrot.lane.b32.xlu0 %v15, 126
    %v17 = vpop.permute.xlu0 %16
    %vm18 = vcmask 7168
    %s19 = scalar_lea.vmem %s1, 2
    %20 = vst.msk [vmem:[%s19] ss:$8 sm:$0x3] %vm18, %v17
    %v21 = vld [vmem:[#allocation0] sm:$0x3]
    %22 = vrot.lane.b32.xlu0 %v21, 125
    %v23 = vpop.permute.xlu0 %22
    %vm24 = vcmask 7168
    %s25 = scalar_lea.vmem %s1, 3
    %26 = vst.msk [vmem:[%s25] ss:$8 sm:$0x3] %vm24, %v23
    %v27 = vld [vmem:[#allocation0] sm:$0x3]
    %28 = vrot.lane.b32.xlu0 %v27, 124
    %v29 = vpop.permute.xlu0 %28
    %vm30 = vcmask 7168
    %s31 = scalar_lea.vmem %s1, 4
    %32 = vst.msk [vmem:[%s31] ss:$8 sm:$0x3] %vm30, %v29
    %v33 = vld [vmem:[#allocation0] sm:$0x3]
    %34 = vrot.lane.b32.xlu0 %v33, 123
    %v35 = vpop.permute.xlu0 %34
    %vm36 = vcmask 7168
    %s37 = scalar_lea.vmem %s1, 5
    %38 = vst.msk [vmem:[%s37] ss:$8 sm:$0x3] %vm36, %v35
    %v39 = vld [vmem:[#allocation0] sm:$0x3]
    %40 = vrot.lane.b32.xlu0 %v39, 122
    %v41 = vpop.permute.xlu0 %40
    %vm42 = vcmask 7168
    %s43 = scalar_lea.vmem %s1, 6
    %44 = vst.msk [vmem:[%s43] ss:$8 sm:$0x3] %vm42, %v41
    %v45 = vld [vmem:[#allocation0] sm:$0x3]
    %46 = vrot.lane.b32.xlu0 %v45, 121
    %v47 = vpop.permute.xlu0 %46
    %vm48 = vcmask 7168
    %s49 = scalar_lea.vmem %s1, 7
    %50 = vst.msk [vmem:[%s49] ss:$8 sm:$0x3] %vm48, %v47

// kernel: tile.1
$region0: #{tile.1}
  %s0 = inlined_call_operand.vmem [shape: f32[2,1,1,4], index: 0, kind: input, shape index: {}]
  %s1 = inlined_call_operand.vmem [shape: f32[8,1], index: 1, kind: output, shape index: {}]
  $region1: #{tile.1} parent=0
    #allocation0 [shape = 'u8[4096]{0}', space=vmem, size = 0x1000, scoped, tag = 'scoped mem for input reshape']
    %s3 = sshllo.u32 0, 2
    %v4 = vld [vmem:[%s0] sm:%s3]
    %5 = vst [vmem:[#allocation0] sm:%s3] %v4
    %v6 = vld [vmem:[#allocation0] sm:$0x3]
    %vm7 = vcmask 7168
    %8 = vst.msk [vmem:[%s1] ss:$4 sm:$0x3] %vm7, %v6
    %v9 = vld [vmem:[#allocation0] sm:$0x3]
    %10 = vrot.lane.b32.xlu0 %v9, 127
    %v11 = vpop.permute.xlu0 %10
    %vm12 = vcmask 7168
    %s13 = scalar_lea.vmem %s1, 1
    %14 = vst.msk [vmem:[%s13] ss:$4 sm:$0x3] %vm12, %v11
    %v15 = vld [vmem:[#allocation0] sm:$0x3]
    %16 = vrot.lane.b32.xlu0 %v15, 126
    %v17 = vpop.permute.xlu0 %16
    %vm18 = vcmask 7168
    %s19 = scalar_lea.vmem %s1, 2
    %20 = vst.msk [vmem:[%s19] ss:$4 sm:$0x3] %vm18, %v17
    %v21 = vld [vmem:[#allocation0] sm:$0x3]
    %22 = vrot.lane.b32.xlu0 %v21, 125
    %v23 = vpop.permute.xlu0 %22
    %vm24 = vcmask 7168
    %s25 = scalar_lea.vmem %s1, 3
    %26 = vst.msk [vmem:[%s25] ss:$4 sm:$0x3] %vm24, %v23

// kernel: peb_forward.1
$region0: #{peb_forward.1}
  #allocation0 [shape = 'u32[]', space=smem, size = 0x4, offset = 0x4, fixed_abs, tag = 'smem constant byte address 0x4 - core index']
  #allocation1 [shape = 'u32[144,128]{1,0:T(1,128)}', space=vmem, size = 0x12000, scoped, tag = 'internal scratch']
  #allocation2 [shape = 'f32[8,32,32]{2,1,0:T(8,128)}', space=vmem, size = 0x20000, scoped, tag = 'scratch operand']
  #allocation3 [shape = 'f32[8,1024]{1,0:T(8,128)}', space=vmem, size = 0x8000, scoped, tag = 'scratch operand']
  %s0 = inlined_call_operand.vmem [shape: f32[8,16,16], index: 0, kind: input, shape index: {}]
  %s1 = inlined_call_operand.vmem [shape: f32[8,32,16], index: 1, kind: input, shape index: {}, may-alias: {1,2}]
  %s2 = inlined_call_operand.vmem [shape: f32[8,32,16], index: 2, kind: input, shape index: {}, may-alias: {1,2}]
  %s3 = inlined_call_operand.vmem [shape: f32[4,1024], index: 3, kind: input, shape index: {}]
  %s4 = inlined_call_operand.vmem [shape: f32[8,8], index: 4, kind: input, shape index: {}]
  %s5 = inlined_call_operand.vmem [shape: f32[8,72], index: 5, kind: input, shape index: {}]
  %s6 = inlined_call_operand.vmem [shape: f32[8,1], index: 6, kind: input, shape index: {}]
  %s7 = inlined_call_operand.vmem [shape: f32[8,1], index: 7, kind: input, shape index: {}]
  %s8 = inlined_call_operand.vmem [shape: f32[8,1], index: 8, kind: input, shape index: {}]
  %s9 = inlined_call_operand.vmem [shape: f32[16,8], index: 9, kind: input, shape index: {}]
  %s10 = inlined_call_operand.vmem [shape: f32[16,1], index: 10, kind: input, shape index: {}]
  %s11 = inlined_call_operand.vmem [shape: f32[16,1024], index: 11, kind: output, shape index: {}]
  %s12 = sld [smem:[#allocation0]]
  $region54: #{peb_forward.1} parent=0
    _
  %s14 = ssub.s32 1, %s12
  %s15 = scalar_select 0, %s14, %s12
  // Predicated region
  $region2: #{peb_forward.1} parent=0 // pred_check
    _
  $region3: #{peb_forward.1} parent=0 // pred_check_branch
    %17 = sbr.rel (0) target = $region5
  $region4: #{peb_forward.1} parent=0 // pred_region
    _
  $region5: #{peb_forward.1} parent=0 // pred_fallthru
    _
  // Predicated region
  $region6: #{peb_forward.1} parent=0 // pred_check
    _
  $region7: #{peb_forward.1} parent=0 // pred_check_branch
    %19 = sbr.rel (0) target = $region9
  $region8: #{peb_forward.1} parent=0 // pred_region
    _
  $region9: #{peb_forward.1} parent=0 // pred_fallthru
    _
  // Predicated region
  $region10: #{peb_forward.1} parent=0 // pred_check
    _
  $region11: #{peb_forward.1} parent=0 // pred_check_branch
    %21 = sbr.rel (0) target = $region13
  $region12: #{peb_forward.1} parent=0 // pred_region
    _
  $region13: #{peb_forward.1} parent=0 // pred_fallthru
    _
  // Predicated region
  $region14: #{peb_forward.1} parent=0 // pred_check
    _
  $region15: #{peb_forward.1} parent=0 // pred_check_branch
    %23 = sbr.rel (0) target = $region17
  $region16: #{peb_forward.1} parent=0 // pred_region
    _
  $region17: #{peb_forward.1} parent=0 // pred_fallthru
    _
  // Predicated region
  $region18: #{peb_forward.1} parent=0 // pred_check
    _
  $region19: #{peb_forward.1} parent=0 // pred_check_branch
    %25 = sbr.rel (0) target = $region21
  $region20: #{peb_forward.1} parent=0 // pred_region
    _
  $region21: #{peb_forward.1} parent=0 // pred_fallthru
    _
  // Predicated region
  $region22: #{peb_forward.1} parent=0 // pred_check
    _
  $region23: #{peb_forward.1} parent=0 // pred_check_branch
    %27 = sbr.rel (0) target = $region25
  $region24: #{peb_forward.1} parent=0 // pred_region
    _
  $region25: #{peb_forward.1} parent=0 // pred_fallthru
    _
  // Predicated region
  $region26: #{peb_forward.1} parent=0 // pred_check
    _
  $region27: #{peb_forward.1} parent=0 // pred_check_branch
    %29 = sbr.rel (0) target = $region29
  $region28: #{peb_forward.1} parent=0 // pred_region
    _
  $region29: #{peb_forward.1} parent=0 // pred_fallthru
    _
  // Predicated region
  $region30: #{peb_forward.1} parent=0 // pred_check
    _
  $region31: #{peb_forward.1} parent=0 // pred_check_branch
    %31 = sbr.rel (0) target = $region33
  $region32: #{peb_forward.1} parent=0 // pred_region
    _
  $region33: #{peb_forward.1} parent=0 // pred_fallthru
    _
  // Predicated region
  $region34: #{peb_forward.1} parent=0 // pred_check
    _
  $region35: #{peb_forward.1} parent=0 // pred_check_branch
    %33 = sbr.rel (0) target = $region37
  $region36: #{peb_forward.1} parent=0 // pred_region
    _
  $region37: #{peb_forward.1} parent=0 // pred_fallthru
    _
  // Predicated region
  $region38: #{peb_forward.1} parent=0 // pred_check
    _
  $region39: #{peb_forward.1} parent=0 // pred_check_branch
    %35 = sbr.rel (0) target = $region41
  $region40: #{peb_forward.1} parent=0 // pred_region
    _
  $region41: #{peb_forward.1} parent=0 // pred_fallthru
    _
  // Predicated region
  $region42: #{peb_forward.1} parent=0 // pred_check
    _
  $region43: #{peb_forward.1} parent=0 // pred_check_branch
    %37 = sbr.rel (0) target = $region45
  $region44: #{peb_forward.1} parent=0 // pred_region
    _
  $region45: #{peb_forward.1} parent=0 // pred_fallthru
    _
  %v38 = vld [vmem:[%s0] sm:$0xff]
  %v39 = vld [vmem:[%s0 + $0x8] sm:$0xff]
  %v40 = vld [vmem:[%s0 + $0x10] sm:$0xff]
  %v41 = vld [vmem:[%s0 + $0x18] sm:$0xff]
  %v42 = vld [vmem:[%s0 + $0x20] sm:$0xff]
  %v43 = vld [vmem:[%s0 + $0x28] sm:$0xff]
  %v44 = vld [vmem:[%s0 + $0x30] sm:$0xff]
  %v45 = vld [vmem:[%s0 + $0x38] sm:$0xff]
  %v46 = vld [vmem:[%s0 + $0x40] sm:$0xff]
  %v47 = vld [vmem:[%s0 + $0x48] sm:$0xff]
  %v48 = vld [vmem:[%s0 + $0x50] sm:$0xff]
  %v49 = vld [vmem:[%s0 + $0x58] sm:$0xff]
  %v50 = vld [vmem:[%s0 + $0x60] sm:$0xff]
  %v51 = vld [vmem:[%s0 + $0x68] sm:$0xff]
  %v52 = vld [vmem:[%s0 + $0x70] sm:$0xff]
  %v53 = vld [vmem:[%s0 + $0x78] sm:$0xff]
  %v54 = vld [vmem:[%s1] sm:$0xff]
  %v55 = vld [vmem:[%s1 + $0x8] sm:$0xff]
  %v56 = vld [vmem:[%s1 + $0x10] sm:$0xff]
  %v57 = vld [vmem:[%s1 + $0x18] sm:$0xff]
  %v58 = vld [vmem:[%s1 + $0x20] sm:$0xff]
  %v59 = vld [vmem:[%s1 + $0x28] sm:$0xff]
  %v60 = vld [vmem:[%s1 + $0x30] sm:$0xff]
  %v61 = vld [vmem:[%s1 + $0x38] sm:$0xff]
  %v62 = vld [vmem:[%s1 + $0x40] sm:$0xff]
  %v63 = vld [vmem:[%s1 + $0x48] sm:$0xff]
  %v64 = vld [vmem:[%s1 + $0x50] sm:$0xff]
  %v65 = vld [vmem:[%s1 + $0x58] sm:$0xff]
  %v66 = vld [vmem:[%s1 + $0x60] sm:$0xff]
  %v67 = vld [vmem:[%s1 + $0x68] sm:$0xff]
  %v68 = vld [vmem:[%s1 + $0x70] sm:$0xff]
  %v69 = vld [vmem:[%s1 + $0x78] sm:$0xff]
  %v70 = vld [vmem:[%s1 + $0x80] sm:$0xff]
  %v71 = vld [vmem:[%s1 + $0x88] sm:$0xff]
  %v72 = vld [vmem:[%s1 + $0x90] sm:$0xff]
  %v73 = vld [vmem:[%s1 + $0x98] sm:$0xff]
  %v74 = vld [vmem:[%s1 + $0xa0] sm:$0xff]
  %v75 = vld [vmem:[%s1 + $0xa8] sm:$0xff]
  %v76 = vld [vmem:[%s1 + $0xb0] sm:$0xff]
  %v77 = vld [vmem:[%s1 + $0xb8] sm:$0xff]
  %v78 = vld [vmem:[%s1 + $0xc0] sm:$0xff]
  %v79 = vld [vmem:[%s1 + $0xc8] sm:$0xff]
  %v80 = vld [vmem:[%s1 + $0xd0] sm:$0xff]
  %v81 = vld [vmem:[%s1 + $0xd8] sm:$0xff]
  %v82 = vld [vmem:[%s1 + $0xe0] sm:$0xff]
  %v83 = vld [vmem:[%s1 + $0xe8] sm:$0xff]
  %v84 = vld [vmem:[%s1 + $0xf0] sm:$0xff]
  %v85 = vld [vmem:[%s1 + $0xf8] sm:$0xff]
  %vm86 = vcmask 130048
  %v88 = vsel %vm86, %v38, 0
  %v91 = vsel %vm86, %v39, 0
  %v94 = vsel %vm86, %v54, 0
  %v97 = vsel %vm86, %v55, 0
  %v100 = vsel %vm86, %v56, 0
  %v103 = vsel %vm86, %v57, 0
  %105 = vmatprep.subr.mxu0 0.0
  %106 = vmatpush1.xpose.msra.mxu0 %v94
  %107 = vmatprep.subr.mxu0 0.0
  %108 = vmatpush1.xpose.msra.mxu0 %v97
  %109 = vmatprep.subr.mxu0 0.0
  %110 = vmatpush1.xpose.msra.mxu0 %v100
  %111 = vmatprep.subr.mxu0 0.0
  %112 = vmatpush1.xpose.msra.mxu0 %v103
  %113 = vmatprep.subr.mxu0 0.0
  %114 = vmatpush1.xpose.msra.mxu0 0.0
  %115 = vmatprep.subr.mxu0 0.0
  %116 = vmatpush1.xpose.msra.mxu0 0.0
  %117 = vmatprep.subr.mxu0 0.0
  %118 = vmatpush1.xpose.msra.mxu0 0.0
  %119 = vmatprep.subr.mxu0 0.0
  %120 = vmatpush1.xpose.msra.mxu0 0.0
  %121 = vmatprep.subr.mxu0 0.0
  %122 = vmatpush1.xpose.msra.mxu0 0.0
  %123 = vmatprep.subr.mxu0 0.0
  %124 = vmatpush1.xpose.msra.mxu0 0.0
  %125 = vmatprep.subr.mxu0 0.0
  %126 = vmatpush1.xpose.msra.mxu0 0.0
  %127 = vmatprep.subr.mxu0 0.0
  %128 = vmatpush1.xpose.msra.mxu0 0.0
  %129 = vmatprep.subr.mxu0 0.0
  %130 = vmatpush1.xpose.msra.mxu0 0.0
  %131 = vmatprep.subr.mxu0 0.0
  %132 = vmatpush1.xpose.msra.mxu0 0.0
  %133 = vmatprep.subr.mxu0 0.0
  %134 = vmatpush1.xpose.msra.mxu0 0.0
  %135 = vmatprep.subr.mxu0 0.0
  %136 = vmatpush1.xpose.msra.mxu0 0.0
  %137 = vmatprep.subr.mxu0 0.0
  %138 = vmatpush1.xpose.msra.mxu0 0.0
  %139 = vmatprep.subr.mxu0 0.0
  %140 = vmatpush1.xpose.msra.mxu0 0.0
  %141 = vmatprep.subr.mxu0 0.0
  %142 = vmatpush1.xpose.msra.mxu0 0.0
  %143 = vmatprep.subr.mxu0 0.0
  %144 = vmatpush1.xpose.msra.mxu0 0.0
  %145 = vmatprep.subr.mxu0 0.0
  %146 = vmatpush1.xpose.msra.mxu0 0.0
  %147 = vmatprep.subr.mxu0 0.0
  %148 = vmatpush1.xpose.msra.mxu0 0.0
  %149 = vmatprep.subr.mxu0 0.0
  %150 = vmatpush1.xpose.msra.mxu0 0.0
  %151 = vmatprep.subr.mxu0 0.0
  %152 = vmatpush1.xpose.msra.mxu0 0.0
  %153 = vmatprep.subr.mxu0 0.0
  %154 = vmatpush1.xpose.msra.mxu0 0.0
  %155 = vmatprep.subr.mxu0 0.0
  %156 = vmatpush1.xpose.msra.mxu0 0.0
  %157 = vmatprep.subr.mxu0 0.0
  %158 = vmatpush1.xpose.msra.mxu0 0.0
  %159 = vmatprep.subr.mxu0 0.0
  %160 = vmatpush1.xpose.msra.mxu0 0.0
  %161 = vmatprep.subr.mxu0 0.0
  %162 = vmatpush1.xpose.msra.mxu0 0.0
  %163 = vmatprep.subr.mxu0 0.0
  %164 = vmatpush1.xpose.msra.mxu0 0.0
  %165 = vmatprep.subr.mxu0 0.0
  %166 = vmatpush1.xpose.msra.mxu0 0.0
  %167 = vmatprep.subr.mxu0 0.0
  %168 = vmatpush1.xpose.msra.mxu0 0.0
  %169 = vmatprep.mubr.f32.mxu0 0.0
  %170 = vmatmul.mubr.f32.gmra.mrb[0].mxu0 %v88
  %v171 = vpop.f32.mrb[0].mxu0
  %v172 = vadd.f32 0.0, %v171
  %v173 = vpop.f32.mrb[0].mxu0
  %174 = vmatprep.mubr.f32.mxu0 0.0
  %175 = vmatmul.mubr.f32.gmra.mrb[0].mxu0 %v91
  %v176 = vpop.f32.mrb[0].mxu0
  %v177 = vadd.f32 0.0, %v176
  %v178 = vpop.f32.mrb[0].mxu0
  %179 = vdwg.mxu0
  %v181 = vsel %vm86, %v40, 0
  %v184 = vsel %vm86, %v41, 0
  %v187 = vsel %vm86, %v58, 0
  %v190 = vsel %vm86, %v59, 0
  %v193 = vsel %vm86, %v60, 0
  %v196 = vsel %vm86, %v61, 0
  %198 = vmatprep.subr.mxu0 0.0
  %199 = vmatpush1.xpose.msra.mxu0 %v187
  %200 = vmatprep.subr.mxu0 0.0
  %201 = vmatpush1.xpose.msra.mxu0 %v190
  %202 = vmatprep.subr.mxu0 0.0
  %203 = vmatpush1.xpose.msra.mxu0 %v193
  %204 = vmatprep.subr.mxu0 0.0
  %205 = vmatpush1.xpose.msra.mxu0 %v196
  %206 = vmatprep.subr.mxu0 0.0
  %207 = vmatpush1.xpose.msra.mxu0 0.0
  %208 = vmatprep.subr.mxu0 0.0
  %209 = vmatpush1.xpose.msra.mxu0 0.0
  %210 = vmatprep.subr.mxu0 0.0
  %211 = vmatpush1.xpose.msra.mxu0 0.0
  %212 = vmatprep.subr.mxu0 0.0
  %213 = vmatpush1.xpose.msra.mxu0 0.0
  %214 = vmatprep.subr.mxu0 0.0
  %215 = vmatpush1.xpose.msra.mxu0 0.0
  %216 = vmatprep.subr.mxu0 0.0
  %217 = vmatpush1.xpose.msra.mxu0 0.0
  %218 = vmatprep.subr.mxu0 0.0
  %219 = vmatpush1.xpose.msra.mxu0 0.0
  %220 = vmatprep.subr.mxu0 0.0
  %221 = vmatpush1.xpose.msra.mxu0 0.0
  %222 = vmatprep.subr.mxu0 0.0
  %223 = vmatpush1.xpose.msra.mxu0 0.0
  %224 = vmatprep.subr.mxu0 0.0
  %225 = vmatpush1.xpose.msra.mxu0 0.0
  %226 = vmatprep.subr.mxu0 0.0
  %227 = vmatpush1.xpose.msra.mxu0 0.0
  %228 = vmatprep.subr.mxu0 0.0
  %229 = vmatpush1.xpose.msra.mxu0 0.0
  %230 = vmatprep.subr.mxu0 0.0
  %231 = vmatpush1.xpose.msra.mxu0 0.0
  %232 = vmatprep.subr.mxu0 0.0
  %233 = vmatpush1.xpose.msra.mxu0 0.0
  %234 = vmatprep.subr.mxu0 0.0
  %235 = vmatpush1.xpose.msra.mxu0 0.0
  %236 = vmatprep.subr.mxu0 0.0
  %237 = vmatpush1.xpose.msra.mxu0 0.0
  %238 = vmatprep.subr.mxu0 0.0
  %239 = vmatpush1.xpose.msra.mxu0 0.0
  %240 = vmatprep.subr.mxu0 0.0
  %241 = vmatpush1.xpose.msra.mxu0 0.0
  %242 = vmatprep.subr.mxu0 0.0
  %243 = vmatpush1.xpose.msra.mxu0 0.0
  %244 = vmatprep.subr.mxu0 0.0
  %245 = vmatpush1.xpose.msra.mxu0 0.0
  %246 = vmatprep.subr.mxu0 0.0
  %247 = vmatpush1.xpose.msra.mxu0 0.0
  %248 = vmatprep.subr.mxu0 0.0
  %249 = vmatpush1.xpose.msra.mxu0 0.0
  %250 = vmatprep.subr.mxu0 0.0
  %251 = vmatpush1.xpose.msra.mxu0 0.0
  %252 = vmatprep.subr.mxu0 0.0
  %253 = vmatpush1.xpose.msra.mxu0 0.0
  %254 = vmatprep.subr.mxu0 0.0
  %255 = vmatpush1.xpose.msra.mxu0 0.0
  %256 = vmatprep.subr.mxu0 0.0
  %257 = vmatpush1.xpose.msra.mxu0 0.0
  %258 = vmatprep.subr.mxu0 0.0
  %259 = vmatpush1.xpose.msra.mxu0 0.0
  %260 = vmatprep.subr.mxu0 0.0
  %261 = vmatpush1.xpose.msra.mxu0 0.0
  %262 = vmatprep.mubr.f32.mxu0 0.0
  %263 = vmatmul.mubr.f32.gmra.mrb[0].mxu0 %v181
  %v264 = vpop.f32.mrb[0].mxu0
  %v265 = vadd.f32 0.0, %v264
  %v266 = vpop.f32.mrb[0].mxu0
  %267 = vmatprep.mubr.f32.mxu0 0.0
  %268 = vmatmul.mubr.f32.gmra.mrb[0].mxu0 %v184
  %v269 = vpop.f32.mrb[0].mxu0
  %v270 = vadd.f32 0.0, %v269
  %v271 = vpop.f32.mrb[0].mxu0
  %272 = vdwg.mxu0
  %v274 = vsel %vm86, %v42, 0
  %v277 = vsel %vm86, %v43, 0
  %v280 = vsel %vm86, %v62, 0
  %v283 = vsel %vm86, %v63, 0
  %v286 = vsel %vm86, %v64, 0
  %v289 = vsel %vm86, %v65, 0
  %291 = vmatprep.subr.mxu0 0.0
  %292 = vmatpush1.xpose.msra.mxu0 %v280
  %293 = vmatprep.subr.mxu0 0.0
  %294 = vmatpush1.xpose.msra.mxu0 %v283
  %295 = vmatprep.subr.mxu0 0.0
  %296 = vmatpush1.xpose.msra.mxu0 %v286
  %297 = vmatprep.subr.mxu0 0.0
  %298 = vmatpush1.xpose.msra.mxu0 %v289
  %299 = vmatprep.subr.mxu0 0.0
  %300 = vmatpush1.xpose.msra.mxu0 0.0
  %301 = vmatprep.subr.mxu0 0.0
  %302 = vmatpush1.xpose.msra.mxu0 0.0
  %303 = vmatprep.subr.mxu0 0.0
  %304 = vmatpush1.xpose.msra.mxu0 0.0
  %305 = vmatprep.subr.mxu0 0.0
  %306 = vmatpush1.xpose.msra.mxu0 0.0
  %307 = vmatprep.subr.mxu0 0.0
  %308 = vmatpush1.xpose.msra.mxu0 0.0
  %309 = vmatprep.subr.mxu0 0.0
  %310 = vmatpush1.xpose.msra.mxu0 0.0
  %311 = vmatprep.subr.mxu0 0.0
  %312 = vmatpush1.xpose.msra.mxu0 0.0
  %313 = vmatprep.subr.mxu0 0.0
  %314 = vmatpush1.xpose.msra.mxu0 0.0
  %315 = vmatprep.subr.mxu0 0.0
  %316 = vmatpush1.xpose.msra.mxu0 0.0
  %317 = vmatprep.subr.mxu0 0.0
  %318 = vmatpush1.xpose.msra.mxu0 0.0
  %319 = vmatprep.subr.mxu0 0.0
  %320 = vmatpush1.xpose.msra.mxu0 0.0
  %321 = vmatprep.subr.mxu0 0.0
  %322 = vmatpush1.xpose.msra.mxu0 0.0
  %323 = vmatprep.subr.mxu0 0.0
  %324 = vmatpush1.xpose.msra.mxu0 0.0
  %325 = vmatprep.subr.mxu0 0.0
  %326 = vmatpush1.xpose.msra.mxu0 0.0
  %327 = vmatprep.subr.mxu0 0.0
  %328 = vmatpush1.xpose.msra.mxu0 0.0
  %329 = vmatprep.subr.mxu0 0.0
  %330 = vmatpush1.xpose.msra.mxu0 0.0
  %331 = vmatprep.subr.mxu0 0.0
  %332 = vmatpush1.xpose.msra.mxu0 0.0
  %333 = vmatprep.subr.mxu0 0.0
  %334 = vmatpush1.xpose.msra.mxu0 0.0
  %335 = vmatprep.subr.mxu0 0.0
  %336 = vmatpush1.xpose.msra.mxu0 0.0
  %337 = vmatprep.subr.mxu0 0.0
  %338 = vmatpush1.xpose.msra.mxu0 0.0
  %339 = vmatprep.subr.mxu0 0.0
  %340 = vmatpush1.xpose.msra.mxu0 0.0
  %341 = vmatprep.subr.mxu0 0.0
  %342 = vmatpush1.xpose.msra.mxu0 0.0
  %343 = vmatprep.subr.mxu0 0.0
  %344 = vmatpush1.xpose.msra.mxu0 0.0
  %345 = vmatprep.subr.mxu0 0.0
  %346 = vmatpush1.xpose.msra.mxu0 0.0
  %347 = vmatprep.subr.mxu0 0.0
  %348 = vmatpush1.xpose.msra.mxu0 0.0
  %349 = vmatprep.subr.mxu0 0.0
  %350 = vmatpush1.xpose.msra.mxu0 0.0
  %351 = vmatprep.subr.mxu0 0.0
  %352 = vmatpush1.xpose.msra.mxu0 0.0
  %353 = vmatprep.subr.mxu0 0.0
  %354 = vmatpush1.xpose.msra.mxu0 0.0
  %355 = vmatprep.mubr.f32.mxu0 0.0
  %356 = vmatmul.mubr.f32.gmra.mrb[0].mxu0 %v274
  %v357 = vpop.f32.mrb[0].mxu0
  %v358 = vadd.f32 0.0, %v357
  %v359 = vpop.f32.mrb[0].mxu0
  %360 = vmatprep.mubr.f32.mxu0 0.0
  %361 = vmatmul.mubr.f32.gmra.mrb[0].mxu0 %v277
  %v362 = vpop.f32.mrb[0].mxu0
  %v363 = vadd.f32 0.0, %v362
  %v364 = vpop.f32.mrb[0].mxu0
  %365 = vdwg.mxu0
  %v367 = vsel %vm86, %v44, 0
  %v370 = vsel %vm86, %v45, 0
  %v373 = vsel %vm86, %v66, 0
  %v376 = vsel %vm86, %v67, 0
  %v379 = vsel %vm86, %v68, 0
  %v382 = vsel %vm86, %v69, 0
  %384 = vmatprep.subr.mxu0 0.0
  %385 = vmatpush1.xpose.msra.mxu0 %v373
  %386 = vmatprep.subr.mxu0 0.0
  %387 = vmatpush1.xpose.msra.mxu0 %v376
  %388 = vmatprep.subr.mxu0 0.0
  %389 = vmatpush1.xpose.msra.mxu0 %v379
  %390 = vmatprep.subr.mxu0 0.0
  %391 = vmatpush1.xpose.msra.mxu0 %v382
  %392 = vmatprep.subr.mxu0 0.0
  %393 = vmatpush1.xpose.msra.mxu0 0.0
  %394 = vmatprep.subr.mxu0 0.0
  %395 = vmatpush1.xpose.msra.mxu0 0.0
  %396 = vmatprep.subr.mxu0 0.0
  %397 = vmatpush1.xpose.msra.mxu0 0.0
  %398 = vmatprep.subr.mxu0 0.0
  %399 = vmatpush1.xpose.msra.mxu0 0.0
  %400 = vmatprep.subr.mxu0 0.0
  %401 = vmatpush1.xpose.msra.mxu0 0.0
  %402 = vmatprep.subr.mxu0 0.0
  %403 = vmatpush1.xpose.msra.mxu0 0.0
  %404 = vmatprep.subr.mxu0 0.0
  %405 = vmatpush1.xpose.msra.mxu0 0.0
  %406 = vmatprep.subr.mxu0 0.0
  %407 = vmatpush1.xpose.msra.mxu0 0.0
  %408 = vmatprep.subr.mxu0 0.0
  %409 = vmatpush1.xpose.msra.mxu0 0.0
  %410 = vmatprep.subr.mxu0 0.0
  %411 = vmatpush1.xpose.msra.mxu0 0.0
  %412 = vmatprep.subr.mxu0 0.0
  %413 = vmatpush1.xpose.msra.mxu0 0.0
  %414 = vmatprep.subr.mxu0 0.0
  %415 = vmatpush1.xpose.msra.mxu0 0.0
  %416 = vmatprep.subr.mxu0 0.0
  %417 = vmatpush1.xpose.msra.mxu0 0.0
  %418 = vmatprep.subr.mxu0 0.0
  %419 = vmatpush1.xpose.msra.mxu0 0.0
  %420 = vmatprep.subr.mxu0 0.0
  %421 = vmatpush1.xpose.msra.mxu0 0.0
  %422 = vmatprep.subr.mxu0 0.0
  %423 = vmatpush1.xpose.msra.mxu0 0.0
  %424 = vmatprep.subr.mxu0 0.0
  %425 = vmatpush1.xpose.msra.mxu0 0.0
  %426 = vmatprep.subr.mxu0 0.0
  %427 = vmatpush1.xpose.msra.mxu0 0.0
  %428 = vmatprep.subr.mxu0 0.0
  %429 = vmatpush1.xpose.msra.mxu0 0.0
  %430 = vmatprep.subr.mxu0 0.0
  %431 = vmatpush1.xpose.msra.mxu0 0.0
  %432 = vmatprep.subr.mxu0 0.0
  %433 = vmatpush1.xpose.msra.mxu0 0.0
  %434 = vmatprep.subr.mxu0 0.0
  %435 = vmatpush1.xpose.msra.mxu0 0.0
  %436 = vmatprep.subr.mxu0 0.0
  %437 = vmatpush1.xpose.msra.mxu0 0.0
  %438 = vmatprep.subr.mxu0 0.0
  %439 = vmatpush1.xpose.msra.mxu0 0.0
  %440 = vmatprep.subr.mxu0 0.0
  %441 = vmatpush1.xpose.msra.mxu0 0.0
  %442 = vmatprep.subr.mxu0 0.0
  %443 = vmatpush1.xpose.msra.mxu0 0.0
  %444 = vmatprep.subr.mxu0 0.0
  %445 = vmatpush1.xpose.msra.mxu0 0.0
  %446 = vmatprep.subr.mxu0 0.0
  %447 = vmatpush1.xpose.msra.mxu0 0.0
  %448 = vmatprep.mubr.f32.mxu0 0.0
  %449 = vmatmul.mubr.f32.gmra.mrb[0].mxu0 %v367
  %v450 = vpop.f32.mrb[0].mxu0
  %v451 = vadd.f32 0.0, %v450
  %v452 = vpop.f32.mrb[0].mxu0
  %453 = vmatprep.mubr.f32.mxu0 0.0
  %454 = vmatmul.mubr.f32.gmra.mrb[0].mxu0 %v370
  %v455 = vpop.f32.mrb[0].mxu0
  %v456 = vadd.f32 0.0, %v455
  %v457 = vpop.f32.mrb[0].mxu0
  %458 = vdwg.mxu0
  %v460 = vsel %vm86, %v46, 0
  %v463 = vsel %vm86, %v47, 0
  %v466 = vsel %vm86, %v70, 0
  %v469 = vsel %vm86, %v71, 0
  %v472 = vsel %vm86, %v72, 0
  %v475 = vsel %vm86, %v73, 0
  %477 = vmatprep.subr.mxu0 0.0
  %478 = vmatpush1.xpose.msra.mxu0 %v466
  %479 = vmatprep.subr.mxu0 0.0
  %480 = vmatpush1.xpose.msra.mxu0 %v469
  %481 = vmatprep.subr.mxu0 0.0
  %482 = vmatpush1.xpose.msra.mxu0 %v472
  %483 = vmatprep.subr.mxu0 0.0
  %484 = vmatpush1.xpose.msra.mxu0 %v475
  %485 = vmatprep.subr.mxu0 0.0
  %486 = vmatpush1.xpose.msra.mxu0 0.0
  %487 = vmatprep.subr.mxu0 0.0
  %488 = vmatpush1.xpose.msra.mxu0 0.0
  %489 = vmatprep.subr.mxu0 0.0
  %490 = vmatpush1.xpose.msra.mxu0 0.0
  %491 = vmatprep.subr.mxu0 0.0
  %492 = vmatpush1.xpose.msra.mxu0 0.0
  %493 = vmatprep.subr.mxu0 0.0
  %494 = vmatpush1.xpose.msra.mxu0 0.0
  %495 = vmatprep.subr.mxu0 0.0
  %496 = vmatpush1.xpose.msra.mxu0 0.0
  %497 = vmatprep.subr.mxu0 0.0
  %498 = vmatpush1.xpose.msra.mxu0 0.0
  %499 = vmatprep.subr.mxu0 0.0
  %500 = vmatpush1.xpose.msra.mxu0 0.0
  %501 = vmatprep.subr.mxu0 0.0
  %502 = vmatpush1.xpose.msra.mxu0 0.0
  %503 = vmatprep.subr.mxu0 0.0
  %504 = vmatpush1.xpose.msra.mxu0 0.0
  %505 = vmatprep.subr.mxu0 0.0
  %506 = vmatpush1.xpose.msra.mxu0 0.0
  %507 = vmatprep.subr.mxu0 0.0
  %508 = vmatpush1.xpose.msra.mxu0 0.0
  %509 = vmatprep.subr.mxu0 0.0
  %510 = vmatpush1.xpose.msra.mxu0 0.0
  %511 = vmatprep.subr.mxu0 0.0
  %512 = vmatpush1.xpose.msra.mxu0 0.0
  %513 = vmatprep.subr.mxu0 0.0
  %514 = vmatpush1.xpose.msra.mxu0 0.0
  %515 = vmatprep.subr.mxu0 0.0
  %516 = vmatpush1.xpose.msra.mxu0 0.0
  %517 = vmatprep.subr.mxu0 0.0
  %518 = vmatpush1.xpose.msra.mxu0 0.0
  %519 = vmatprep.subr.mxu0 0.0
  %520 = vmatpush1.xpose.msra.mxu0 0.0
  %521 = vmatprep.subr.mxu0 0.0
  %522 = vmatpush1.xpose.msra.mxu0 0.0
  %523 = vmatprep.subr.mxu0 0.0
  %524 = vmatpush1.xpose.msra.mxu0 0.0
  %525 = vmatprep.subr.mxu0 0.0
  %526 = vmatpush1.xpose.msra.mxu0 0.0
  %527 = vmatprep.subr.mxu0 0.0
  %528 = vmatpush1.xpose.msra.mxu0 0.0
  %529 = vmatprep.subr.mxu0 0.0
  %530 = vmatpush1.xpose.msra.mxu0 0.0
  %531 = vmatprep.subr.mxu0 0.0
  %532 = vmatpush1.xpose.msra.mxu0 0.0
  %533 = vmatprep.subr.mxu0 0.0
  %534 = vmatpush1.xpose.msra.mxu0 0.0
  %535 = vmatprep.subr.mxu0 0.0
  %536 = vmatpush1.xpose.msra.mxu0 0.0
  %537 = vmatprep.subr.mxu0 0.0
  %538 = vmatpush1.xpose.msra.mxu0 0.0
  %539 = vmatprep.subr.mxu0 0.0
  %540 = vmatpush1.xpose.msra.mxu0 0.0
  %541 = vmatprep.mubr.f32.mxu0 0.0
  %542 = vmatmul.mubr.f32.gmra.mrb[0].mxu0 %v460
  %v543 = vpop.f32.mrb[0].mxu0
  %v544 = vadd.f32 0.0, %v543
  %v545 = vpop.f32.mrb[0].mxu0
  %546 = vmatprep.mubr.f32.mxu0 0.0
  %547 = vmatmul.mubr.f32.gmra.mrb[0].mxu0 %v463
  %v548 = vpop.f32.mrb[0].mxu0
  %v549 = vadd.f32 0.0, %v548
  %v550 = vpop.f32.mrb[0].mxu0
  %551 = vdwg.mxu0
  %v553 = vsel %vm86, %v48, 0
  %v556 = vsel %vm86, %v49, 0
  %v559 = vsel %vm86, %v74, 0
  %v562 = vsel %vm86, %v75, 0
  %v565 = vsel %vm86, %v76, 0
  %v568 = vsel %vm86, %v77, 0
  %570 = vmatprep.subr.mxu0 0.0
  %571 = vmatpush1.xpose.msra.mxu0 %v559
  %572 = vmatprep.subr.mxu0 0.0
  %573 = vmatpush1.xpose.msra.mxu0 %v562
  %574 = vmatprep.subr.mxu0 0.0
  %575 = vmatpush1.xpose.msra.mxu0 %v565
  %576 = vmatprep.subr.mxu0 0.0
  %577 = vmatpush1.xpose.msra.mxu0 %v568
  %578 = vmatprep.subr.mxu0 0.0
  %579 = vmatpush1.xpose.msra.mxu0 0.0
  %580 = vmatprep.subr.mxu0 0.0
  %581 = vmatpush1.xpose.msra.mxu0 0.0
  %582 = vmatprep.subr.mxu0 0.0
  %583 = vmatpush1.xpose.msra.mxu0 0.0
  %584 = vmatprep.subr.mxu0 0.0
  %585 = vmatpush1.xpose.msra.mxu0 0.0
  %586 = vmatprep.subr.mxu0 0.0
  %587 = vmatpush1.xpose.msra.mxu0 0.0
  %588 = vmatprep.subr.mxu0 0.0
  %589 = vmatpush1.xpose.msra.mxu0 0.0
  %590 = vmatprep.subr.mxu0 0.0
  %591 = vmatpush1.xpose.msra.mxu0 0.0
  %592 = vmatprep.subr.mxu0 0.0
  %593 = vmatpush1.xpose.msra.mxu0 0.0
  %594 = vmatprep.subr.mxu0 0.0
  %595 = vmatpush1.xpose.msra.mxu0 0.0
  %596 = vmatprep.subr.mxu0 0.0
  %597 = vmatpush1.xpose.msra.mxu0 0.0
  %598 = vmatprep.subr.mxu0 0.0
  %599 = vmatpush1.xpose.msra.mxu0 0.0
  %600 = vmatprep.subr.mxu0 0.0
  %601 = vmatpush1.xpose.msra.mxu0 0.0
  %602 = vmatprep.subr.mxu0 0.0
  %603 = vmatpush1.xpose.msra.mxu0 0.0
  %604 = vmatprep.subr.mxu0 0.0
  %605 = vmatpush1.xpose.msra.mxu0 0.0
  %606 = vmatprep.subr.mxu0 0.0
  %607 = vmatpush1.xpose.msra.mxu0 0.0
  %608 = vmatprep.subr.mxu0 0.0
  %609 = vmatpush1.xpose.msra.mxu0 0.0
  %610 = vmatprep.subr.mxu0 0.0
  %611 = vmatpush1.xpose.msra.mxu0 0.0
  %612 = vmatprep.subr.mxu0 0.0
  %613 = vmatpush1.xpose.msra.mxu0 0.0
  %614 = vmatprep.subr.mxu0 0.0
  %615 = vmatpush1.xpose.msra.mxu0 0.0
  %616 = vmatprep.subr.mxu0 0.0
  %617 = vmatpush1.xpose.msra.mxu0 0.0
  %618 = vmatprep.subr.mxu0 0.0
  %619 = vmatpush1.xpose.msra.mxu0 0.0
  %620 = vmatprep.subr.mxu0 0.0
  %621 = vmatpush1.xpose.msra.mxu0 0.0
  %622 = vmatprep.subr.mxu0 0.0
  %623 = vmatpush1.xpose.msra.mxu0 0.0
  %624 = vmatprep.subr.mxu0 0.0
  %625 = vmatpush1.xpose.msra.mxu0 0.0
  %626 = vmatprep.subr.mxu0 0.0
  %627 = vmatpush1.xpose.msra.mxu0 0.0
  %628 = vmatprep.subr.mxu0 0.0
  %629 = vmatpush1.xpose.msra.mxu0 0.0
  %630 = vmatprep.subr.mxu0 0.0
  %631 = vmatpush1.xpose.msra.mxu0 0.0
  %632 = vmatprep.subr.mxu0 0.0
  %633 = vmatpush1.xpose.msra.mxu0 0.0
  %634 = vmatprep.mubr.f32.mxu0 0.0
  %635 = vmatmul.mubr.f32.gmra.mrb[0].mxu0 %v553
  %v636 = vpop.f32.mrb[0].mxu0
  %v637 = vadd.f32 0.0, %v636
  %v638 = vpop.f32.mrb[0].mxu0
  %639 = vmatprep.mubr.f32.mxu0 0.0
  %640 = vmatmul.mubr.f32.gmra.mrb[0].mxu0 %v556
  %v641 = vpop.f32.mrb[0].mxu0
  %v642 = vadd.f32 0.0, %v641
  %v643 = vpop.f32.mrb[0].mxu0
  %644 = vdwg.mxu0
  %v646 = vsel %vm86, %v50, 0
  %v649 = vsel %vm86, %v51, 0
  %v652 = vsel %vm86, %v78, 0
  %v655 = vsel %vm86, %v79, 0
  %v658 = vsel %vm86, %v80, 0
  %v661 = vsel %vm86, %v81, 0
  %663 = vmatprep.subr.mxu0 0.0
  %664 = vmatpush1.xpose.msra.mxu0 %v652
  %665 = vmatprep.subr.mxu0 0.0
  %666 = vmatpush1.xpose.msra.mxu0 %v655
  %667 = vmatprep.subr.mxu0 0.0
  %668 = vmatpush1.xpose.msra.mxu0 %v658
  %669 = vmatprep.subr.mxu0 0.0
  %670 = vmatpush1.xpose.msra.mxu0 %v661
  %671 = vmatprep.subr.mxu0 0.0
  %672 = vmatpush1.xpose.msra.mxu0 0.0
  %673 = vmatprep.subr.mxu0 0.0
  %674 = vmatpush1.xpose.msra.mxu0 0.0
  %675 = vmatprep.subr.mxu0 0.0
  %676 = vmatpush1.xpose.msra.mxu0 0.0
  %677 = vmatprep.subr.mxu0 0.0
  %678 = vmatpush1.xpose.msra.mxu0 0.0
  %679 = vmatprep.subr.mxu0 0.0
  %680 = vmatpush1.xpose.msra.mxu0 0.0
  %681 = vmatprep.subr.mxu0 0.0
  %682 = vmatpush1.xpose.msra.mxu0 0.0
  %683 = vmatprep.subr.mxu0 0.0
  %684 = vmatpush1.xpose.msra.mxu0 0.0
  %685 = vmatprep.subr.mxu0 0.0
  %686 = vmatpush1.xpose.msra.mxu0 0.0
  %687 = vmatprep.subr.mxu0 0.0
  %688 = vmatpush1.xpose.msra.mxu0 0.0
  %689 = vmatprep.subr.mxu0 0.0
  %690 = vmatpush1.xpose.msra.mxu0 0.0
  %691 = vmatprep.subr.mxu0 0.0
  %692 = vmatpush1.xpose.msra.mxu0 0.0
  %693 = vmatprep.subr.mxu0 0.0
  %694 = vmatpush1.xpose.msra.mxu0 0.0
  %695 = vmatprep.subr.mxu0 0.0
  %696 = vmatpush1.xpose.msra.mxu0 0.0
  %697 = vmatprep.subr.mxu0 0.0
  %698 = vmatpush1.xpose.msra.mxu0 0.0
  %699 = vmatprep.subr.mxu0 0.0
  %700 = vmatpush1.xpose.msra.mxu0 0.0
  %701 = vmatprep.subr.mxu0 0.0
  %702 = vmatpush1.xpose.msra.mxu0 0.0
  %703 = vmatprep.subr.mxu0 0.0
  %704 = vmatpush1.xpose.msra.mxu0 0.0
  %705 = vmatprep.subr.mxu0 0.0
  %706 = vmatpush1.xpose.msra.mxu0 0.0
  %707 = vmatprep.subr.mxu0 0.0
  %708 = vmatpush1.xpose.msra.mxu0 0.0
  %709 = vmatprep.subr.mxu0 0.0
  %710 = vmatpush1.xpose.msra.mxu0 0.0
  %711 = vmatprep.subr.mxu0 0.0
  %712 = vmatpush1.xpose.msra.mxu0 0.0
  %713 = vmatprep.subr.mxu0 0.0
  %714 = vmatpush1.xpose.msra.mxu0 0.0
  %715 = vmatprep.subr.mxu0 0.0
  %716 = vmatpush1.xpose.msra.mxu0 0.0
  %717 = vmatprep.subr.mxu0 0.0
  %718 = vmatpush1.xpose.msra.mxu0 0.0
  %719 = vmatprep.subr.mxu0 0.0
  %720 = vmatpush1.xpose.msra.mxu0 0.0
  %721 = vmatprep.subr.mxu0 0.0
  %722 = vmatpush1.xpose.msra.mxu0 0.0
  %723 = vmatprep.subr.mxu0 0.0
  %724 = vmatpush1.xpose.msra.mxu0 0.0
  %725 = vmatprep.subr.mxu0 0.0
  %726 = vmatpush1.xpose.msra.mxu0 0.0
  %727 = vmatprep.mubr.f32.mxu0 0.0
  %728 = vmatmul.mubr.f32.gmra.mrb[0].mxu0 %v646
  %v729 = vpop.f32.mrb[0].mxu0
  %v730 = vadd.f32 0.0, %v729
  %v731 = vpop.f32.mrb[0].mxu0
  %732 = vmatprep.mubr.f32.mxu0 0.0
  %733 = vmatmul.mubr.f32.gmra.mrb[0].mxu0 %v649
  %v734 = vpop.f32.mrb[0].mxu0
  %v735 = vadd.f32 0.0, %v734
  %v736 = vpop.f32.mrb[0].mxu0
  %737 = vdwg.mxu0
  %v739 = vsel %vm86, %v52, 0
  %v742 = vsel %vm86, %v53, 0
  %v745 = vsel %vm86, %v82, 0
  %v748 = vsel %vm86, %v83, 0
  %v751 = vsel %vm86, %v84, 0
  %v754 = vsel %vm86, %v85, 0
  %756 = vmatprep.subr.mxu0 0.0
  %757 = vmatpush1.xpose.msra.mxu0 %v745
  %758 = vmatprep.subr.mxu0 0.0
  %759 = vmatpush1.xpose.msra.mxu0 %v748
  %760 = vmatprep.subr.mxu0 0.0
  %761 = vmatpush1.xpose.msra.mxu0 %v751
  %762 = vmatprep.subr.mxu0 0.0
  %763 = vmatpush1.xpose.msra.mxu0 %v754
  %764 = vmatprep.subr.mxu0 0.0
  %765 = vmatpush1.xpose.msra.mxu0 0.0
  %766 = vmatprep.subr.mxu0 0.0
  %767 = vmatpush1.xpose.msra.mxu0 0.0
  %768 = vmatprep.subr.mxu0 0.0
  %769 = vmatpush1.xpose.msra.mxu0 0.0
  %770 = vmatprep.subr.mxu0 0.0
  %771 = vmatpush1.xpose.msra.mxu0 0.0
  %772 = vmatprep.subr.mxu0 0.0
  %773 = vmatpush1.xpose.msra.mxu0 0.0
  %774 = vmatprep.subr.mxu0 0.0
  %775 = vmatpush1.xpose.msra.mxu0 0.0
  %776 = vmatprep.subr.mxu0 0.0
  %777 = vmatpush1.xpose.msra.mxu0 0.0
  %778 = vmatprep.subr.mxu0 0.0
  %779 = vmatpush1.xpose.msra.mxu0 0.0
  %780 = vmatprep.subr.mxu0 0.0
  %781 = vmatpush1.xpose.msra.mxu0 0.0
  %782 = vmatprep.subr.mxu0 0.0
  %783 = vmatpush1.xpose.msra.mxu0 0.0
  %784 = vmatprep.subr.mxu0 0.0
  %785 = vmatpush1.xpose.msra.mxu0 0.0
  %786 = vmatprep.subr.mxu0 0.0
  %787 = vmatpush1.xpose.msra.mxu0 0.0
  %788 = vmatprep.subr.mxu0 0.0
  %789 = vmatpush1.xpose.msra.mxu0 0.0
  %790 = vmatprep.subr.mxu0 0.0
  %791 = vmatpush1.xpose.msra.mxu0 0.0
  %792 = vmatprep.subr.mxu0 0.0
  %793 = vmatpush1.xpose.msra.mxu0 0.0
  %794 = vmatprep.subr.mxu0 0.0
  %795 = vmatpush1.xpose.msra.mxu0 0.0
  %796 = vmatprep.subr.mxu0 0.0
  %797 = vmatpush1.xpose.msra.mxu0 0.0
  %798 = vmatprep.subr.mxu0 0.0
  %799 = vmatpush1.xpose.msra.mxu0 0.0
  %800 = vmatprep.subr.mxu0 0.0
  %801 = vmatpush1.xpose.msra.mxu0 0.0
  %802 = vmatprep.subr.mxu0 0.0
  %803 = vmatpush1.xpose.msra.mxu0 0.0
  %804 = vmatprep.subr.mxu0 0.0
  %805 = vmatpush1.xpose.msra.mxu0 0.0
  %806 = vmatprep.subr.mxu0 0.0
  %807 = vmatpush1.xpose.msra.mxu0 0.0
  %808 = vmatprep.subr.mxu0 0.0
  %809 = vmatpush1.xpose.msra.mxu0 0.0
  %810 = vmatprep.subr.mxu0 0.0
  %811 = vmatpush1.xpose.msra.mxu0 0.0
  %812 = vmatprep.subr.mxu0 0.0
  %813 = vmatpush1.xpose.msra.mxu0 0.0
  %814 = vmatprep.subr.mxu0 0.0
  %815 = vmatpush1.xpose.msra.mxu0 0.0
  %816 = vmatprep.subr.mxu0 0.0
  %817 = vmatpush1.xpose.msra.mxu0 0.0
  %818 = vmatprep.subr.mxu0 0.0
  %819 = vmatpush1.xpose.msra.mxu0 0.0
  %820 = vmatprep.mubr.f32.mxu0 0.0
  %821 = vmatmul.mubr.f32.gmra.mrb[0].mxu0 %v739
  %v822 = vpop.f32.mrb[0].mxu0
  %v823 = vadd.f32 0.0, %v822
  %v824 = vpop.f32.mrb[0].mxu0
  %825 = vmatprep.mubr.f32.mxu0 0.0
  %826 = vmatmul.mubr.f32.gmra.mrb[0].mxu0 %v742
  %v827 = vpop.f32.mrb[0].mxu0
  %v828 = vadd.f32 0.0, %v827
  %v829 = vpop.f32.mrb[0].mxu0
  %830 = vdwg.mxu0
  %v831 = vld [vmem:[%s2] sm:$0xff]
  %v832 = vld [vmem:[%s2 + $0x8] sm:$0xff]
  %v833 = vld [vmem:[%s2 + $0x10] sm:$0xff]
  %v834 = vld [vmem:[%s2 + $0x18] sm:$0xff]
  %v835 = vld [vmem:[%s2 + $0x20] sm:$0xff]
  %v836 = vld [vmem:[%s2 + $0x28] sm:$0xff]
  %v837 = vld [vmem:[%s2 + $0x30] sm:$0xff]
  %v838 = vld [vmem:[%s2 + $0x38] sm:$0xff]
  %v839 = vld [vmem:[%s2 + $0x40] sm:$0xff]
  %v840 = vld [vmem:[%s2 + $0x48] sm:$0xff]
  %v841 = vld [vmem:[%s2 + $0x50] sm:$0xff]
  %v842 = vld [vmem:[%s2 + $0x58] sm:$0xff]
  %v843 = vld [vmem:[%s2 + $0x60] sm:$0xff]
  %v844 = vld [vmem:[%s2 + $0x68] sm:$0xff]
  %v845 = vld [vmem:[%s2 + $0x70] sm:$0xff]
  %v846 = vld [vmem:[%s2 + $0x78] sm:$0xff]
  %v847 = vld [vmem:[%s2 + $0x80] sm:$0xff]
  %v848 = vld [vmem:[%s2 + $0x88] sm:$0xff]
  %v849 = vld [vmem:[%s2 + $0x90] sm:$0xff]
  %v850 = vld [vmem:[%s2 + $0x98] sm:$0xff]
  %v851 = vld [vmem:[%s2 + $0xa0] sm:$0xff]
  %v852 = vld [vmem:[%s2 + $0xa8] sm:$0xff]
  %v853 = vld [vmem:[%s2 + $0xb0] sm:$0xff]
  %v854 = vld [vmem:[%s2 + $0xb8] sm:$0xff]
  %v855 = vld [vmem:[%s2 + $0xc0] sm:$0xff]
  %v856 = vld [vmem:[%s2 + $0xc8] sm:$0xff]
  %v857 = vld [vmem:[%s2 + $0xd0] sm:$0xff]
  %v858 = vld [vmem:[%s2 + $0xd8] sm:$0xff]
  %v859 = vld [vmem:[%s2 + $0xe0] sm:$0xff]
  %v860 = vld [vmem:[%s2 + $0xe8] sm:$0xff]
  %v861 = vld [vmem:[%s2 + $0xf0] sm:$0xff]
  %v862 = vld [vmem:[%s2 + $0xf8] sm:$0xff]
  %v864 = vsel %vm86, %v831, 0
  %v867 = vsel %vm86, %v832, 0
  %v870 = vsel %vm86, %v833, 0
  %v873 = vsel %vm86, %v834, 0
  %875 = vmatprep.subr.mxu0 0.0
  %876 = vmatpush1.msra.mxu0 %v172
  %877 = vmatprep.subr.mxu0 0.0
  %878 = vmatpush1.msra.mxu0 %v177
  %879 = vmatprep.subr.mxu0 0.0
  %880 = vmatpush1.msra.mxu0 0.0
  %881 = vmatprep.subr.mxu0 0.0
  %882 = vmatpush1.msra.mxu0 0.0
  %883 = vmatprep.subr.mxu0 0.0
  %884 = vmatpush1.msra.mxu0 0.0
  %885 = vmatprep.subr.mxu0 0.0
  %886 = vmatpush1.msra.mxu0 0.0
  %887 = vmatprep.subr.mxu0 0.0
  %888 = vmatpush1.msra.mxu0 0.0
  %889 = vmatprep.subr.mxu0 0.0
  %890 = vmatpush1.msra.mxu0 0.0
  %891 = vmatprep.subr.mxu0 0.0
  %892 = vmatpush1.msra.mxu0 0.0
  %893 = vmatprep.subr.mxu0 0.0
  %894 = vmatpush1.msra.mxu0 0.0
  %895 = vmatprep.subr.mxu0 0.0
  %896 = vmatpush1.msra.mxu0 0.0
  %897 = vmatprep.subr.mxu0 0.0
  %898 = vmatpush1.msra.mxu0 0.0
  %899 = vmatprep.subr.mxu0 0.0
  %900 = vmatpush1.msra.mxu0 0.0
  %901 = vmatprep.subr.mxu0 0.0
  %902 = vmatpush1.msra.mxu0 0.0
  %903 = vmatprep.subr.mxu0 0.0
  %904 = vmatpush1.msra.mxu0 0.0
  %905 = vmatprep.subr.mxu0 0.0
  %906 = vmatpush1.msra.mxu0 0.0
  %907 = vmatprep.subr.mxu0 0.0
  %908 = vmatpush1.msra.mxu0 0.0
  %909 = vmatprep.subr.mxu0 0.0
  %910 = vmatpush1.msra.mxu0 0.0
  %911 = vmatprep.subr.mxu0 0.0
  %912 = vmatpush1.msra.mxu0 0.0
  %913 = vmatprep.subr.mxu0 0.0
  %914 = vmatpush1.msra.mxu0 0.0
  %915 = vmatprep.subr.mxu0 0.0
  %916 = vmatpush1.msra.mxu0 0.0
  %917 = vmatprep.subr.mxu0 0.0
  %918 = vmatpush1.msra.mxu0 0.0
  %919 = vmatprep.subr.mxu0 0.0
  %920 = vmatpush1.msra.mxu0 0.0
  %921 = vmatprep.subr.mxu0 0.0
  %922 = vmatpush1.msra.mxu0 0.0
  %923 = vmatprep.subr.mxu0 0.0
  %924 = vmatpush1.msra.mxu0 0.0
  %925 = vmatprep.subr.mxu0 0.0
  %926 = vmatpush1.msra.mxu0 0.0
  %927 = vmatprep.subr.mxu0 0.0
  %928 = vmatpush1.msra.mxu0 0.0
  %929 = vmatprep.subr.mxu0 0.0
  %930 = vmatpush1.msra.mxu0 0.0
  %931 = vmatprep.subr.mxu0 0.0
  %932 = vmatpush1.msra.mxu0 0.0
  %933 = vmatprep.subr.mxu0 0.0
  %934 = vmatpush1.msra.mxu0 0.0
  %935 = vmatprep.subr.mxu0 0.0
  %936 = vmatpush1.msra.mxu0 0.0
  %937 = vmatprep.subr.mxu0 0.0
  %938 = vmatpush1.msra.mxu0 0.0
  %939 = vmatprep.mubr.f32.mxu0 0.0
  %940 = vmatmul.mubr.f32.gmra.mrb[0].mxu0 %v864
  %v941 = vpop.f32.mrb[0].mxu0
  %v942 = vadd.f32 0.0, %v941
  %v943 = vpop.f32.mrb[0].mxu0
  %944 = vmatprep.mubr.f32.mxu0 0.0
  %945 = vmatmul.mubr.f32.gmra.mrb[0].mxu0 %v867
  %v946 = vpop.f32.mrb[0].mxu0
  %v947 = vadd.f32 0.0, %v946
  %v948 = vpop.f32.mrb[0].mxu0
  %949 = vmatprep.mubr.f32.mxu0 0.0
  %950 = vmatmul.mubr.f32.gmra.mrb[0].mxu0 %v870
  %v951 = vpop.f32.mrb[0].mxu0
  %v952 = vadd.f32 0.0, %v951
  %v953 = vpop.f32.mrb[0].mxu0
  %954 = vmatprep.mubr.f32.mxu0 0.0
  %955 = vmatmul.mubr.f32.gmra.mrb[0].mxu0 %v873
  %v956 = vpop.f32.mrb[0].mxu0
  %v957 = vadd.f32 0.0, %v956
  %v958 = vpop.f32.mrb[0].mxu0
  %959 = vdwg.mxu0
  %v961 = vsel %vm86, %v835, 0
  %v964 = vsel %vm86, %v836, 0
  %v967 = vsel %vm86, %v837, 0
  %v970 = vsel %vm86, %v838, 0
  %972 = vmatprep.subr.mxu0 0.0
  %973 = vmatpush1.msra.mxu0 %v265
  %974 = vmatprep.subr.mxu0 0.0
  %975 = vmatpush1.msra.mxu0 %v270
  %976 = vmatprep.subr.mxu0 0.0
  %977 = vmatpush1.msra.mxu0 0.0
  %978 = vmatprep.subr.mxu0 0.0
  %979 = vmatpush1.msra.mxu0 0.0
  %980 = vmatprep.subr.mxu0 0.0
  %981 = vmatpush1.msra.mxu0 0.0
  %982 = vmatprep.subr.mxu0 0.0
  %983 = vmatpush1.msra.mxu0 0.0
  %984 = vmatprep.subr.mxu0 0.0
  %985 = vmatpush1.msra.mxu0 0.0
  %986 = vmatprep.subr.mxu0 0.0
  %987 = vmatpush1.msra.mxu0 0.0
  %988 = vmatprep.subr.mxu0 0.0
  %989 = vmatpush1.msra.mxu0 0.0
  %990 = vmatprep.subr.mxu0 0.0
  %991 = vmatpush1.msra.mxu0 0.0
  %992 = vmatprep.subr.mxu0 0.0
  %993 = vmatpush1.msra.mxu0 0.0
  %994 = vmatprep.subr.mxu0 0.0
  %995 = vmatpush1.msra.mxu0 0.0
  %996 = vmatprep.subr.mxu0 0.0
  %997 = vmatpush1.msra.mxu0 0.0
  %998 = vmatprep.subr.mxu0 0.0
  %999 = vmatpush1.msra.mxu0 0.0
  %1000 = vmatprep.subr.mxu0 0.0
  %1001 = vmatpush1.msra.mxu0 0.0
  %1002 = vmatprep.subr.mxu0 0.0
  %1003 = vmatpush1.msra.mxu0 0.0
  %1004 = vmatprep.subr.mxu0 0.0
  %1005 = vmatpush1.msra.mxu0 0.0
  %1006 = vmatprep.subr.mxu0 0.0
  %1007 = vmatpush1.msra.mxu0 0.0
  %1008 = vmatprep.subr.mxu0 0.0
  %1009 = vmatpush1.msra.mxu0 0.0
  %1010 = vmatprep.subr.mxu0 0.0
  %1011 = vmatpush1.msra.mxu0 0.0
  %1012 = vmatprep.subr.mxu0 0.0
  %1013 = vmatpush1.msra.mxu0 0.0
  %1014 = vmatprep.subr.mxu0 0.0
  %1015 = vmatpush1.msra.mxu0 0.0
  %1016 = vmatprep.subr.mxu0 0.0
  %1017 = vmatpush1.msra.mxu0 0.0
  %1018 = vmatprep.subr.mxu0 0.0
  %1019 = vmatpush1.msra.mxu0 0.0
  %1020 = vmatprep.subr.mxu0 0.0
  %1021 = vmatpush1.msra.mxu0 0.0
  %1022 = vmatprep.subr.mxu0 0.0
  %1023 = vmatpush1.msra.mxu0 0.0
  %1024 = vmatprep.subr.mxu0 0.0
  %1025 = vmatpush1.msra.mxu0 0.0
  %1026 = vmatprep.subr.mxu0 0.0
  %1027 = vmatpush1.msra.mxu0 0.0
  %1028 = vmatprep.subr.mxu0 0.0
  %1029 = vmatpush1.msra.mxu0 0.0
  %1030 = vmatprep.subr.mxu0 0.0
  %1031 = vmatpush1.msra.mxu0 0.0
  %1032 = vmatprep.subr.mxu0 0.0
  %1033 = vmatpush1.msra.mxu0 0.0
  %1034 = vmatprep.subr.mxu0 0.0
  %1035 = vmatpush1.msra.mxu0 0.0
  %1036 = vmatprep.mubr.f32.mxu0 0.0
  %1037 = vmatmul.mubr.f32.gmra.mrb[0].mxu0 %v961
  %v1038 = vpop.f32.mrb[0].mxu0
  %v1039 = vadd.f32 0.0, %v1038
  %v1040 = vpop.f32.mrb[0].mxu0
  %1041 = vmatprep.mubr.f32.mxu0 0.0
  %1042 = vmatmul.mubr.f32.gmra.mrb[0].mxu0 %v964
  %v1043 = vpop.f32.mrb[0].mxu0
  %v1044 = vadd.f32 0.0, %v1043
  %v1045 = vpop.f32.mrb[0].mxu0
  %1046 = vmatprep.mubr.f32.mxu0 0.0
  %1047 = vmatmul.mubr.f32.gmra.mrb[0].mxu0 %v967
  %v1048 = vpop.f32.mrb[0].mxu0
  %v1049 = vadd.f32 0.0, %v1048
  %v1050 = vpop.f32.mrb[0].mxu0
  %1051 = vmatprep.mubr.f32.mxu0 0.0
  %1052 = vmatmul.mubr.f32.gmra.mrb[0].mxu0 %v970
  %v1053 = vpop.f32.mrb[0].mxu0
  %v1054 = vadd.f32 0.0, %v1053
  %v1055 = vpop.f32.mrb[0].mxu0
  %1056 = vdwg.mxu0
  %v1058 = vsel %vm86, %v839, 0
  %v1061 = vsel %vm86, %v840, 0
  %v1064 = vsel %vm86, %v841, 0
  %v1067 = vsel %vm86, %v842, 0
  %1069 = vmatprep.subr.mxu0 0.0
  %1070 = vmatpush1.msra.mxu0 %v358
  %1071 = vmatprep.subr.mxu0 0.0
  %1072 = vmatpush1.msra.mxu0 %v363
  %1073 = vmatprep.subr.mxu0 0.0
  %1074 = vmatpush1.msra.mxu0 0.0
  %1075 = vmatprep.subr.mxu0 0.0
  %1076 = vmatpush1.msra.mxu0 0.0
  %1077 = vmatprep.subr.mxu0 0.0
  %1078 = vmatpush1.msra.mxu0 0.0
  %1079 = vmatprep.subr.mxu0 0.0
  %1080 = vmatpush1.msra.mxu0 0.0
  %1081 = vmatprep.subr.mxu0 0.0
  %1082 = vmatpush1.msra.mxu0 0.0
  %1083 = vmatprep.subr.mxu0 0.0
  %1084 = vmatpush1.msra.mxu0 0.0
  %1085 = vmatprep.subr.mxu0 0.0
  %1086 = vmatpush1.msra.mxu0 0.0
  %1087 = vmatprep.subr.mxu0 0.0
  %1088 = vmatpush1.msra.mxu0 0.0
  %1089 = vmatprep.subr.mxu0 0.0
  %1090 = vmatpush1.msra.mxu0 0.0
  %1091 = vmatprep.subr.mxu0 0.0
  %1092 = vmatpush1.msra.mxu0 0.0
  %1093 = vmatprep.subr.mxu0 0.0
  %1094 = vmatpush1.msra.mxu0 0.0
  %1095 = vmatprep.subr.mxu0 0.0
  %1096 = vmatpush1.msra.mxu0 0.0
  %1097 = vmatprep.subr.mxu0 0.0
  %1098 = vmatpush1.msra.mxu0 0.0
  %1099 = vmatprep.subr.mxu0 0.0
  %1100 = vmatpush1.msra.mxu0 0.0
  %1101 = vmatprep.subr.mxu0 0.0
  %1102 = vmatpush1.msra.mxu0 0.0
  %1103 = vmatprep.subr.mxu0 0.0
  %1104 = vmatpush1.msra.mxu0 0.0
  %1105 = vmatprep.subr.mxu0 0.0
  %1106 = vmatpush1.msra.mxu0 0.0
  %1107 = vmatprep.subr.mxu0 0.0
  %1108 = vmatpush1.msra.mxu0 0.0
  %1109 = vmatprep.subr.mxu0 0.0
  %1110 = vmatpush1.msra.mxu0 0.0
  %1111 = vmatprep.subr.mxu0 0.0
  %1112 = vmatpush1.msra.mxu0 0.0
  %1113 = vmatprep.subr.mxu0 0.0
  %1114 = vmatpush1.msra.mxu0 0.0
  %1115 = vmatprep.subr.mxu0 0.0
  %1116 = vmatpush1.msra.mxu0 0.0
  %1117 = vmatprep.subr.mxu0 0.0
  %1118 = vmatpush1.msra.mxu0 0.0
  %1119 = vmatprep.subr.mxu0 0.0
  %1120 = vmatpush1.msra.mxu0 0.0
  %1121 = vmatprep.subr.mxu0 0.0
  %1122 = vmatpush1.msra.mxu0 0.0
  %1123 = vmatprep.subr.mxu0 0.0
  %1124 = vmatpush1.msra.mxu0 0.0
  %1125 = vmatprep.subr.mxu0 0.0
  %1126 = vmatpush1.msra.mxu0 0.0
  %1127 = vmatprep.subr.mxu0 0.0
  %1128 = vmatpush1.msra.mxu0 0.0
  %1129 = vmatprep.subr.mxu0 0.0
  %1130 = vmatpush1.msra.mxu0 0.0
  %1131 = vmatprep.subr.mxu0 0.0
  %1132 = vmatpush1.msra.mxu0 0.0
  %1133 = vmatprep.mubr.f32.mxu0 0.0
  %1134 = vmatmul.mubr.f32.gmra.mrb[0].mxu0 %v1058
  %v1135 = vpop.f32.mrb[0].mxu0
  %v1136 = vadd.f32 0.0, %v1135
  %v1137 = vpop.f32.mrb[0].mxu0
  %1138 = vmatprep.mubr.f32.mxu0 0.0
  %1139 = vmatmul.mubr.f32.gmra.mrb[0].mxu0 %v1061
  %v1140 = vpop.f32.mrb[0].mxu0
  %v1141 = vadd.f32 0.0, %v1140
  %v1142 = vpop.f32.mrb[0].mxu0
  %1143 = vmatprep.mubr.f32.mxu0 0.0
  %1144 = vmatmul.mubr.f32.gmra.mrb[0].mxu0 %v1064
  %v1145 = vpop.f32.mrb[0].mxu0
  %v1146 = vadd.f32 0.0, %v1145
  %v1147 = vpop.f32.mrb[0].mxu0
  %1148 = vmatprep.mubr.f32.mxu0 0.0
  %1149 = vmatmul.mubr.f32.gmra.mrb[0].mxu0 %v1067
  %v1150 = vpop.f32.mrb[0].mxu0
  %v1151 = vadd.f32 0.0, %v1150
  %v1152 = vpop.f32.mrb[0].mxu0
  %1153 = vdwg.mxu0
  %v1155 = vsel %vm86, %v843, 0
  %v1158 = vsel %vm86, %v844, 0
  %v1161 = vsel %vm86, %v845, 0
  %v1164 = vsel %vm86, %v846, 0
  %1166 = vmatprep.subr.mxu0 0.0
  %1167 = vmatpush1.msra.mxu0 %v451
  %1168 = vmatprep.subr.mxu0 0.0
  %1169 = vmatpush1.msra.mxu0 %v456
  %1170 = vmatprep.subr.mxu0 0.0
  %1171 = vmatpush1.msra.mxu0 0.0
  %1172 = vmatprep.subr.mxu0 0.0
  %1173 = vmatpush1.msra.mxu0 0.0
  %1174 = vmatprep.subr.mxu0 0.0
  %1175 = vmatpush1.msra.mxu0 0.0
  %1176 = vmatprep.subr.mxu0 0.0
  %1177 = vmatpush1.msra.mxu0 0.0
  %1178 = vmatprep.subr.mxu0 0.0
  %1179 = vmatpush1.msra.mxu0 0.0
  %1180 = vmatprep.subr.mxu0 0.0
  %1181 = vmatpush1.msra.mxu0 0.0
  %1182 = vmatprep.subr.mxu0 0.0
  %1183 = vmatpush1.msra.mxu0 0.0
  %1184 = vmatprep.subr.mxu0 0.0
  %1185 = vmatpush1.msra.mxu0 0.0
  %1186 = vmatprep.subr.mxu0 0.0
  %1187 = vmatpush1.msra.mxu0 0.0
  %1188 = vmatprep.subr.mxu0 0.0
  %1189 = vmatpush1.msra.mxu0 0.0
  %1190 = vmatprep.subr.mxu0 0.0
  %1191 = vmatpush1.msra.mxu0 0.0
  %1192 = vmatprep.subr.mxu0 0.0
  %1193 = vmatpush1.msra.mxu0 0.0
  %1194 = vmatprep.subr.mxu0 0.0
  %1195 = vmatpush1.msra.mxu0 0.0
  %1196 = vmatprep.subr.mxu0 0.0
  %1197 = vmatpush1.msra.mxu0 0.0
  %1198 = vmatprep.subr.mxu0 0.0
  %1199 = vmatpush1.msra.mxu0 0.0
  %1200 = vmatprep.subr.mxu0 0.0
  %1201 = vmatpush1.msra.mxu0 0.0
  %1202 = vmatprep.subr.mxu0 0.0
  %1203 = vmatpush1.msra.mxu0 0.0
  %1204 = vmatprep.subr.mxu0 0.0
  %1205 = vmatpush1.msra.mxu0 0.0
  %1206 = vmatprep.subr.mxu0 0.0
  %1207 = vmatpush1.msra.mxu0 0.0
  %1208 = vmatprep.subr.mxu0 0.0
  %1209 = vmatpush1.msra.mxu0 0.0
  %1210 = vmatprep.subr.mxu0 0.0
  %1211 = vmatpush1.msra.mxu0 0.0
  %1212 = vmatprep.subr.mxu0 0.0
  %1213 = vmatpush1.msra.mxu0 0.0
  %1214 = vmatprep.subr.mxu0 0.0
  %1215 = vmatpush1.msra.mxu0 0.0
  %1216 = vmatprep.subr.mxu0 0.0
  %1217 = vmatpush1.msra.mxu0 0.0
  %1218 = vmatprep.subr.mxu0 0.0
  %1219 = vmatpush1.msra.mxu0 0.0
  %1220 = vmatprep.subr.mxu0 0.0
  %1221 = vmatpush1.msra.mxu0 0.0
  %1222 = vmatprep.subr.mxu0 0.0
  %1223 = vmatpush1.msra.mxu0 0.0
  %1224 = vmatprep.subr.mxu0 0.0
  %1225 = vmatpush1.msra.mxu0 0.0
  %1226 = vmatprep.subr.mxu0 0.0
  %1227 = vmatpush1.msra.mxu0 0.0
  %1228 = vmatprep.subr.mxu0 0.0
  %1229 = vmatpush1.msra.mxu0 0.0
  %1230 = vmatprep.mubr.f32.mxu0 0.0
  %1231 = vmatmul.mubr.f32.gmra.mrb[0].mxu0 %v1155
  %v1232 = vpop.f32.mrb[0].mxu0
  %v1233 = vadd.f32 0.0, %v1232
  %v1234 = vpop.f32.mrb[0].mxu0
  %1235 = vmatprep.mubr.f32.mxu0 0.0
  %1236 = vmatmul.mubr.f32.gmra.mrb[0].mxu0 %v1158
  %v1237 = vpop.f32.mrb[0].mxu0
  %v1238 = vadd.f32 0.0, %v1237
  %v1239 = vpop.f32.mrb[0].mxu0
  %1240 = vmatprep.mubr.f32.mxu0 0.0
  %1241 = vmatmul.mubr.f32.gmra.mrb[0].mxu0 %v1161
  %v1242 = vpop.f32.mrb[0].mxu0
  %v1243 = vadd.f32 0.0, %v1242
  %v1244 = vpop.f32.mrb[0].mxu0
  %1245 = vmatprep.mubr.f32.mxu0 0.0
  %1246 = vmatmul.mubr.f32.gmra.mrb[0].mxu0 %v1164
  %v1247 = vpop.f32.mrb[0].mxu0
  %v1248 = vadd.f32 0.0, %v1247
  %v1249 = vpop.f32.mrb[0].mxu0
  %1250 = vdwg.mxu0
  %v1252 = vsel %vm86, %v847, 0
  %v1255 = vsel %vm86, %v848, 0
  %v1258 = vsel %vm86, %v849, 0
  %v1261 = vsel %vm86, %v850, 0
  %1263 = vmatprep.subr.mxu0 0.0
  %1264 = vmatpush1.msra.mxu0 %v544
  %1265 = vmatprep.subr.mxu0 0.0
  %1266 = vmatpush1.msra.mxu0 %v549
  %1267 = vmatprep.subr.mxu0 0.0
  %1268 = vmatpush1.msra.mxu0 0.0
  %1269 = vmatprep.subr.mxu0 0.0
  %1270 = vmatpush1.msra.mxu0 0.0
  %1271 = vmatprep.subr.mxu0 0.0
  %1272 = vmatpush1.msra.mxu0 0.0
  %1273 = vmatprep.subr.mxu0 0.0
  %1274 = vmatpush1.msra.mxu0 0.0
  %1275 = vmatprep.subr.mxu0 0.0
  %1276 = vmatpush1.msra.mxu0 0.0
  %1277 = vmatprep.subr.mxu0 0.0
  %1278 = vmatpush1.msra.mxu0 0.0
  %1279 = vmatprep.subr.mxu0 0.0
  %1280 = vmatpush1.msra.mxu0 0.0
  %1281 = vmatprep.subr.mxu0 0.0
  %1282 = vmatpush1.msra.mxu0 0.0
  %1283 = vmatprep.subr.mxu0 0.0
  %1284 = vmatpush1.msra.mxu0 0.0
  %1285 = vmatprep.subr.mxu0 0.0
  %1286 = vmatpush1.msra.mxu0 0.0
  %1287 = vmatprep.subr.mxu0 0.0
  %1288 = vmatpush1.msra.mxu0 0.0
  %1289 = vmatprep.subr.mxu0 0.0
  %1290 = vmatpush1.msra.mxu0 0.0
  %1291 = vmatprep.subr.mxu0 0.0
  %1292 = vmatpush1.msra.mxu0 0.0
  %1293 = vmatprep.subr.mxu0 0.0
  %1294 = vmatpush1.msra.mxu0 0.0
  %1295 = vmatprep.subr.mxu0 0.0
  %1296 = vmatpush1.msra.mxu0 0.0
  %1297 = vmatprep.subr.mxu0 0.0
  %1298 = vmatpush1.msra.mxu0 0.0
  %1299 = vmatprep.subr.mxu0 0.0
  %1300 = vmatpush1.msra.mxu0 0.0
  %1301 = vmatprep.subr.mxu0 0.0
  %1302 = vmatpush1.msra.mxu0 0.0
  %1303 = vmatprep.subr.mxu0 0.0
  %1304 = vmatpush1.msra.mxu0 0.0
  %1305 = vmatprep.subr.mxu0 0.0
  %1306 = vmatpush1.msra.mxu0 0.0
  %1307 = vmatprep.subr.mxu0 0.0
  %1308 = vmatpush1.msra.mxu0 0.0
  %1309 = vmatprep.subr.mxu0 0.0
  %1310 = vmatpush1.msra.mxu0 0.0
  %1311 = vmatprep.subr.mxu0 0.0
  %1312 = vmatpush1.msra.mxu0 0.0
  %1313 = vmatprep.subr.mxu0 0.0
  %1314 = vmatpush1.msra.mxu0 0.0
  %1315 = vmatprep.subr.mxu0 0.0
  %1316 = vmatpush1.msra.mxu0 0.0
  %1317 = vmatprep.subr.mxu0 0.0
  %1318 = vmatpush1.msra.mxu0 0.0
  %1319 = vmatprep.subr.mxu0 0.0
  %1320 = vmatpush1.msra.mxu0 0.0
  %1321 = vmatprep.subr.mxu0 0.0
  %1322 = vmatpush1.msra.mxu0 0.0
  %1323 = vmatprep.subr.mxu0 0.0
  %1324 = vmatpush1.msra.mxu0 0.0
  %1325 = vmatprep.subr.mxu0 0.0
  %1326 = vmatpush1.msra.mxu0 0.0
  %1327 = vmatprep.mubr.f32.mxu0 0.0
  %1328 = vmatmul.mubr.f32.gmra.mrb[0].mxu0 %v1252
  %v1329 = vpop.f32.mrb[0].mxu0
  %v1330 = vadd.f32 0.0, %v1329
  %v1331 = vpop.f32.mrb[0].mxu0
  %1332 = vmatprep.mubr.f32.mxu0 0.0
  %1333 = vmatmul.mubr.f32.gmra.mrb[0].mxu0 %v1255
  %v1334 = vpop.f32.mrb[0].mxu0
  %v1335 = vadd.f32 0.0, %v1334
  %v1336 = vpop.f32.mrb[0].mxu0
  %1337 = vmatprep.mubr.f32.mxu0 0.0
  %1338 = vmatmul.mubr.f32.gmra.mrb[0].mxu0 %v1258
  %v1339 = vpop.f32.mrb[0].mxu0
  %v1340 = vadd.f32 0.0, %v1339
  %v1341 = vpop.f32.mrb[0].mxu0
  %1342 = vmatprep.mubr.f32.mxu0 0.0
  %1343 = vmatmul.mubr.f32.gmra.mrb[0].mxu0 %v1261
  %v1344 = vpop.f32.mrb[0].mxu0
  %v1345 = vadd.f32 0.0, %v1344
  %v1346 = vpop.f32.mrb[0].mxu0
  %1347 = vdwg.mxu0
  %v1349 = vsel %vm86, %v851, 0
  %v1352 = vsel %vm86, %v852, 0
  %v1355 = vsel %vm86, %v853, 0
  %v1358 = vsel %vm86, %v854, 0
  %1360 = vmatprep.subr.mxu0 0.0
  %1361 = vmatpush1.msra.mxu0 %v637
  %1362 = vmatprep.subr.mxu0 0.0
  %1363 = vmatpush1.msra.mxu0 %v642
  %1364 = vmatprep.subr.mxu0 0.0
  %1365 = vmatpush1.msra.mxu0 0.0
  %1366 = vmatprep.subr.mxu0 0.0
  %1367 = vmatpush1.msra.mxu0 0.0
  %1368 = vmatprep.subr.mxu0 0.0
  %1369 = vmatpush1.msra.mxu0 0.0
  %1370 = vmatprep.subr.mxu0 0.0
  %1371 = vmatpush1.msra.mxu0 0.0
  %1372 = vmatprep.subr.mxu0 0.0
  %1373 = vmatpush1.msra.mxu0 0.0
  %1374 = vmatprep.subr.mxu0 0.0
  %1375 = vmatpush1.msra.mxu0 0.0
  %1376 = vmatprep.subr.mxu0 0.0
  %1377 = vmatpush1.msra.mxu0 0.0
  %1378 = vmatprep.subr.mxu0 0.0
  %1379 = vmatpush1.msra.mxu0 0.0
  %1380 = vmatprep.subr.mxu0 0.0
  %1381 = vmatpush1.msra.mxu0 0.0
  %1382 = vmatprep.subr.mxu0 0.0
  %1383 = vmatpush1.msra.mxu0 0.0
  %1384 = vmatprep.subr.mxu0 0.0
  %1385 = vmatpush1.msra.mxu0 0.0
  %1386 = vmatprep.subr.mxu0 0.0
  %1387 = vmatpush1.msra.mxu0 0.0
  %1388 = vmatprep.subr.mxu0 0.0
  %1389 = vmatpush1.msra.mxu0 0.0
  %1390 = vmatprep.subr.mxu0 0.0
  %1391 = vmatpush1.msra.mxu0 0.0
  %1392 = vmatprep.subr.mxu0 0.0
  %1393 = vmatpush1.msra.mxu0 0.0
  %1394 = vmatprep.subr.mxu0 0.0
  %1395 = vmatpush1.msra.mxu0 0.0
  %1396 = vmatprep.subr.mxu0 0.0
  %1397 = vmatpush1.msra.mxu0 0.0
  %1398 = vmatprep.subr.mxu0 0.0
  %1399 = vmatpush1.msra.mxu0 0.0
  %1400 = vmatprep.subr.mxu0 0.0
  %1401 = vmatpush1.msra.mxu0 0.0
  %1402 = vmatprep.subr.mxu0 0.0
  %1403 = vmatpush1.msra.mxu0 0.0
  %1404 = vmatprep.subr.mxu0 0.0
  %1405 = vmatpush1.msra.mxu0 0.0
  %1406 = vmatprep.subr.mxu0 0.0
  %1407 = vmatpush1.msra.mxu0 0.0
  %1408 = vmatprep.subr.mxu0 0.0
  %1409 = vmatpush1.msra.mxu0 0.0
  %1410 = vmatprep.subr.mxu0 0.0
  %1411 = vmatpush1.msra.mxu0 0.0
  %1412 = vmatprep.subr.mxu0 0.0
  %1413 = vmatpush1.msra.mxu0 0.0
  %1414 = vmatprep.subr.mxu0 0.0
  %1415 = vmatpush1.msra.mxu0 0.0
  %1416 = vmatprep.subr.mxu0 0.0
  %1417 = vmatpush1.msra.mxu0 0.0
  %1418 = vmatprep.subr.mxu0 0.0
  %1419 = vmatpush1.msra.mxu0 0.0
  %1420 = vmatprep.subr.mxu0 0.0
  %1421 = vmatpush1.msra.mxu0 0.0
  %1422 = vmatprep.subr.mxu0 0.0
  %1423 = vmatpush1.msra.mxu0 0.0
  %1424 = vmatprep.mubr.f32.mxu0 0.0
  %1425 = vmatmul.mubr.f32.gmra.mrb[0].mxu0 %v1349
  %v1426 = vpop.f32.mrb[0].mxu0
  %v1427 = vadd.f32 0.0, %v1426
  %v1428 = vpop.f32.mrb[0].mxu0
  %1429 = vmatprep.mubr.f32.mxu0 0.0
  %1430 = vmatmul.mubr.f32.gmra.mrb[0].mxu0 %v1352
  %v1431 = vpop.f32.mrb[0].mxu0
  %v1432 = vadd.f32 0.0, %v1431
  %v1433 = vpop.f32.mrb[0].mxu0
  %1434 = vmatprep.mubr.f32.mxu0 0.0
  %1435 = vmatmul.mubr.f32.gmra.mrb[0].mxu0 %v1355
  %v1436 = vpop.f32.mrb[0].mxu0
  %v1437 = vadd.f32 0.0, %v1436
  %v1438 = vpop.f32.mrb[0].mxu0
  %1439 = vmatprep.mubr.f32.mxu0 0.0
  %1440 = vmatmul.mubr.f32.gmra.mrb[0].mxu0 %v1358
  %v1441 = vpop.f32.mrb[0].mxu0
  %v1442 = vadd.f32 0.0, %v1441
  %v1443 = vpop.f32.mrb[0].mxu0
  %1444 = vdwg.mxu0
  %v1446 = vsel %vm86, %v855, 0
  %v1449 = vsel %vm86, %v856, 0
  %v1452 = vsel %vm86, %v857, 0
  %v1455 = vsel %vm86, %v858, 0
  %1457 = vmatprep.subr.mxu0 0.0
  %1458 = vmatpush1.msra.mxu0 %v730
  %1459 = vmatprep.subr.mxu0 0.0
  %1460 = vmatpush1.msra.mxu0 %v735
  %1461 = vmatprep.subr.mxu0 0.0
  %1462 = vmatpush1.msra.mxu0 0.0
  %1463 = vmatprep.subr.mxu0 0.0
  %1464 = vmatpush1.msra.mxu0 0.0
  %1465 = vmatprep.subr.mxu0 0.0
  %1466 = vmatpush1.msra.mxu0 0.0
  %1467 = vmatprep.subr.mxu0 0.0
  %1468 = vmatpush1.msra.mxu0 0.0
  %1469 = vmatprep.subr.mxu0 0.0
  %1470 = vmatpush1.msra.mxu0 0.0
  %1471 = vmatprep.subr.mxu0 0.0
  %1472 = vmatpush1.msra.mxu0 0.0
  %1473 = vmatprep.subr.mxu0 0.0
  %1474 = vmatpush1.msra.mxu0 0.0
  %1475 = vmatprep.subr.mxu0 0.0
  %1476 = vmatpush1.msra.mxu0 0.0
  %1477 = vmatprep.subr.mxu0 0.0
  %1478 = vmatpush1.msra.mxu0 0.0
  %1479 = vmatprep.subr.mxu0 0.0
  %1480 = vmatpush1.msra.mxu0 0.0
  %1481 = vmatprep.subr.mxu0 0.0
  %1482 = vmatpush1.msra.mxu0 0.0
  %1483 = vmatprep.subr.mxu0 0.0
  %1484 = vmatpush1.msra.mxu0 0.0
  %1485 = vmatprep.subr.mxu0 0.0
  %1486 = vmatpush1.msra.mxu0 0.0
  %1487 = vmatprep.subr.mxu0 0.0
  %1488 = vmatpush1.msra.mxu0 0.0
  %1489 = vmatprep.subr.mxu0 0.0
  %1490 = vmatpush1.msra.mxu0 0.0
  %1491 = vmatprep.subr.mxu0 0.0
  %1492 = vmatpush1.msra.mxu0 0.0
  %1493 = vmatprep.subr.mxu0 0.0
  %1494 = vmatpush1.msra.mxu0 0.0
  %1495 = vmatprep.subr.mxu0 0.0
  %1496 = vmatpush1.msra.mxu0 0.0
  %1497 = vmatprep.subr.mxu0 0.0
  %1498 = vmatpush1.msra.mxu0 0.0
  %1499 = vmatprep.subr.mxu0 0.0
  %1500 = vmatpush1.msra.mxu0 0.0
  %1501 = vmatprep.subr.mxu0 0.0
  %1502 = vmatpush1.msra.mxu0 0.0
  %1503 = vmatprep.subr.mxu0 0.0
  %1504 = vmatpush1.msra.mxu0 0.0
  %1505 = vmatprep.subr.mxu0 0.0
  %1506 = vmatpush1.msra.mxu0 0.0
  %1507 = vmatprep.subr.mxu0 0.0
  %1508 = vmatpush1.msra.mxu0 0.0
  %1509 = vmatprep.subr.mxu0 0.0
  %1510 = vmatpush1.msra.mxu0 0.0
  %1511 = vmatprep.subr.mxu0 0.0
  %1512 = vmatpush1.msra.mxu0 0.0
  %1513 = vmatprep.subr.mxu0 0.0
  %1514 = vmatpush1.msra.mxu0 0.0
  %1515 = vmatprep.subr.mxu0 0.0
  %1516 = vmatpush1.msra.mxu0 0.0
  %1517 = vmatprep.subr.mxu0 0.0
  %1518 = vmatpush1.msra.mxu0 0.0
  %1519 = vmatprep.subr.mxu0 0.0
  %1520 = vmatpush1.msra.mxu0 0.0
  %1521 = vmatprep.mubr.f32.mxu0 0.0
  %1522 = vmatmul.mubr.f32.gmra.mrb[0].mxu0 %v1446
  %v1523 = vpop.f32.mrb[0].mxu0
  %v1524 = vadd.f32 0.0, %v1523
  %v1525 = vpop.f32.mrb[0].mxu0
  %1526 = vmatprep.mubr.f32.mxu0 0.0
  %1527 = vmatmul.mubr.f32.gmra.mrb[0].mxu0 %v1449
  %v1528 = vpop.f32.mrb[0].mxu0
  %v1529 = vadd.f32 0.0, %v1528
  %v1530 = vpop.f32.mrb[0].mxu0
  %1531 = vmatprep.mubr.f32.mxu0 0.0
  %1532 = vmatmul.mubr.f32.gmra.mrb[0].mxu0 %v1452
  %v1533 = vpop.f32.mrb[0].mxu0
  %v1534 = vadd.f32 0.0, %v1533
  %v1535 = vpop.f32.mrb[0].mxu0
  %1536 = vmatprep.mubr.f32.mxu0 0.0
  %1537 = vmatmul.mubr.f32.gmra.mrb[0].mxu0 %v1455
  %v1538 = vpop.f32.mrb[0].mxu0
  %v1539 = vadd.f32 0.0, %v1538
  %v1540 = vpop.f32.mrb[0].mxu0
  %1541 = vdwg.mxu0
  %v1543 = vsel %vm86, %v859, 0
  %v1546 = vsel %vm86, %v860, 0
  %v1549 = vsel %vm86, %v861, 0
  %v1552 = vsel %vm86, %v862, 0
  %1554 = vmatprep.subr.mxu0 0.0
  %1555 = vmatpush1.msra.mxu0 %v823
  %1556 = vmatprep.subr.mxu0 0.0
  %1557 = vmatpush1.msra.mxu0 %v828
  %1558 = vmatprep.subr.mxu0 0.0
  %1559 = vmatpush1.msra.mxu0 0.0
  %1560 = vmatprep.subr.mxu0 0.0
  %1561 = vmatpush1.msra.mxu0 0.0
  %1562 = vmatprep.subr.mxu0 0.0
  %1563 = vmatpush1.msra.mxu0 0.0
  %1564 = vmatprep.subr.mxu0 0.0
  %1565 = vmatpush1.msra.mxu0 0.0
  %1566 = vmatprep.subr.mxu0 0.0
  %1567 = vmatpush1.msra.mxu0 0.0
  %1568 = vmatprep.subr.mxu0 0.0
  %1569 = vmatpush1.msra.mxu0 0.0
  %1570 = vmatprep.subr.mxu0 0.0
  %1571 = vmatpush1.msra.mxu0 0.0
  %1572 = vmatprep.subr.mxu0 0.0
  %1573 = vmatpush1.msra.mxu0 0.0
  %1574 = vmatprep.subr.mxu0 0.0
  %1575 = vmatpush1.msra.mxu0 0.0
  %1576 = vmatprep.subr.mxu0 0.0
  %1577 = vmatpush1.msra.mxu0 0.0
  %1578 = vmatprep.subr.mxu0 0.0
  %1579 = vmatpush1.msra.mxu0 0.0
  %1580 = vmatprep.subr.mxu0 0.0
  %1581 = vmatpush1.msra.mxu0 0.0
  %1582 = vmatprep.subr.mxu0 0.0
  %1583 = vmatpush1.msra.mxu0 0.0
  %1584 = vmatprep.subr.mxu0 0.0
  %1585 = vmatpush1.msra.mxu0 0.0
  %1586 = vmatprep.subr.mxu0 0.0
  %1587 = vmatpush1.msra.mxu0 0.0
  %1588 = vmatprep.subr.mxu0 0.0
  %1589 = vmatpush1.msra.mxu0 0.0
  %1590 = vmatprep.subr.mxu0 0.0
  %1591 = vmatpush1.msra.mxu0 0.0
  %1592 = vmatprep.subr.mxu0 0.0
  %1593 = vmatpush1.msra.mxu0 0.0
  %1594 = vmatprep.subr.mxu0 0.0
  %1595 = vmatpush1.msra.mxu0 0.0
  %1596 = vmatprep.subr.mxu0 0.0
  %1597 = vmatpush1.msra.mxu0 0.0
  %1598 = vmatprep.subr.mxu0 0.0
  %1599 = vmatpush1.msra.mxu0 0.0
  %1600 = vmatprep.subr.mxu0 0.0
  %1601 = vmatpush1.msra.mxu0 0.0
  %1602 = vmatprep.subr.mxu0 0.0
  %1603 = vmatpush1.msra.mxu0 0.0
  %1604 = vmatprep.subr.mxu0 0.0
  %1605 = vmatpush1.msra.mxu0 0.0
  %1606 = vmatprep.subr.mxu0 0.0
  %1607 = vmatpush1.msra.mxu0 0.0
  %1608 = vmatprep.subr.mxu0 0.0
  %1609 = vmatpush1.msra.mxu0 0.0
  %1610 = vmatprep.subr.mxu0 0.0
  %1611 = vmatpush1.msra.mxu0 0.0
  %1612 = vmatprep.subr.mxu0 0.0
  %1613 = vmatpush1.msra.mxu0 0.0
  %1614 = vmatprep.subr.mxu0 0.0
  %1615 = vmatpush1.msra.mxu0 0.0
  %1616 = vmatprep.subr.mxu0 0.0
  %1617 = vmatpush1.msra.mxu0 0.0
  %1618 = vmatprep.mubr.f32.mxu0 0.0
  %1619 = vmatmul.mubr.f32.gmra.mrb[0].mxu0 %v1543
  %v1620 = vpop.f32.mrb[0].mxu0
  %v1621 = vadd.f32 0.0, %v1620
  %v1622 = vpop.f32.mrb[0].mxu0
  %1623 = vmatprep.mubr.f32.mxu0 0.0
  %1624 = vmatmul.mubr.f32.gmra.mrb[0].mxu0 %v1546
  %v1625 = vpop.f32.mrb[0].mxu0
  %v1626 = vadd.f32 0.0, %v1625
  %v1627 = vpop.f32.mrb[0].mxu0
  %1628 = vmatprep.mubr.f32.mxu0 0.0
  %1629 = vmatmul.mubr.f32.gmra.mrb[0].mxu0 %v1549
  %v1630 = vpop.f32.mrb[0].mxu0
  %v1631 = vadd.f32 0.0, %v1630
  %v1632 = vpop.f32.mrb[0].mxu0
  %1633 = vmatprep.mubr.f32.mxu0 0.0
  %1634 = vmatmul.mubr.f32.gmra.mrb[0].mxu0 %v1552
  %v1635 = vpop.f32.mrb[0].mxu0
  %v1636 = vadd.f32 0.0, %v1635
  %v1637 = vpop.f32.mrb[0].mxu0
  %1638 = vdwg.mxu0
  %vm1639 = vcmask 261120
  %1640 = vst.msk [vmem:[#allocation2] sm:$0xff] %vm1639, %v942
  %1641 = vst.msk [vmem:[#allocation2 + $0x8] sm:$0xff] %vm1639, %v947
  %1642 = vst.msk [vmem:[#allocation2 + $0x10] sm:$0xff] %vm1639, %v952
  %1643 = vst.msk [vmem:[#allocation2 + $0x18] sm:$0xff] %vm1639, %v957
  %1644 = vst.msk [vmem:[#allocation2 + $0x20] sm:$0xff] %vm1639, %v1039
  %1645 = vst.msk [vmem:[#allocation2 + $0x28] sm:$0xff] %vm1639, %v1044
  %1646 = vst.msk [vmem:[#allocation2 + $0x30] sm:$0xff] %vm1639, %v1049
  %1647 = vst.msk [vmem:[#allocation2 + $0x38] sm:$0xff] %vm1639, %v1054
  %1648 = vst.msk [vmem:[#allocation2 + $0x40] sm:$0xff] %vm1639, %v1136
  %1649 = vst.msk [vmem:[#allocation2 + $0x48] sm:$0xff] %vm1639, %v1141
  %1650 = vst.msk [vmem:[#allocation2 + $0x50] sm:$0xff] %vm1639, %v1146
  %1651 = vst.msk [vmem:[#allocation2 + $0x58] sm:$0xff] %vm1639, %v1151
  %1652 = vst.msk [vmem:[#allocation2 + $0x60] sm:$0xff] %vm1639, %v1233
  %1653 = vst.msk [vmem:[#allocation2 + $0x68] sm:$0xff] %vm1639, %v1238
  %1654 = vst.msk [vmem:[#allocation2 + $0x70] sm:$0xff] %vm1639, %v1243
  %1655 = vst.msk [vmem:[#allocation2 + $0x78] sm:$0xff] %vm1639, %v1248
  %1656 = vst.msk [vmem:[#allocation2 + $0x80] sm:$0xff] %vm1639, %v1330
  %1657 = vst.msk [vmem:[#allocation2 + $0x88] sm:$0xff] %vm1639, %v1335
  %1658 = vst.msk [vmem:[#allocation2 + $0x90] sm:$0xff] %vm1639, %v1340
  %1659 = vst.msk [vmem:[#allocation2 + $0x98] sm:$0xff] %vm1639, %v1345
  %1660 = vst.msk [vmem:[#allocation2 + $0xa0] sm:$0xff] %vm1639, %v1427
  %1661 = vst.msk [vmem:[#allocation2 + $0xa8] sm:$0xff] %vm1639, %v1432
  %1662 = vst.msk [vmem:[#allocation2 + $0xb0] sm:$0xff] %vm1639, %v1437
  %1663 = vst.msk [vmem:[#allocation2 + $0xb8] sm:$0xff] %vm1639, %v1442
  %1664 = vst.msk [vmem:[#allocation2 + $0xc0] sm:$0xff] %vm1639, %v1524
  %1665 = vst.msk [vmem:[#allocation2 + $0xc8] sm:$0xff] %vm1639, %v1529
  %1666 = vst.msk [vmem:[#allocation2 + $0xd0] sm:$0xff] %vm1639, %v1534
  %1667 = vst.msk [vmem:[#allocation2 + $0xd8] sm:$0xff] %vm1639, %v1539
  %1668 = vst.msk [vmem:[#allocation2 + $0xe0] sm:$0xff] %vm1639, %v1621
  %1669 = vst.msk [vmem:[#allocation2 + $0xe8] sm:$0xff] %vm1639, %v1626
  %1670 = vst.msk [vmem:[#allocation2 + $0xf0] sm:$0xff] %vm1639, %v1631
  %1671 = vst.msk [vmem:[#allocation2 + $0xf8] sm:$0xff] %vm1639, %v1636
  %v1672 = vld [vmem:[#allocation2] sm:$0x1]
  %v1673 = vld [vmem:[#allocation2 + $0x20] sm:$0x1]
  %v1674 = vld [vmem:[#allocation2 + $0x40] sm:$0x1]
  %v1675 = vld [vmem:[#allocation2 + $0x60] sm:$0x1]
  %v1676 = vld [vmem:[#allocation2 + $0x80] sm:$0x1]
  %v1677 = vld [vmem:[#allocation2 + $0xa0] sm:$0x1]
  %v1678 = vld [vmem:[#allocation2 + $0xc0] sm:$0x1]
  %v1679 = vld [vmem:[#allocation2 + $0xe0] sm:$0x1]
  %v1688 = vrot.slane %v1673, 7
  %vm1689 = vcmask 1041409
  %v1690 = vsel %vm1689, %v1688, %v1672
  %v1691 = vrot.slane %v1674, 6
  %vm1692 = vcmask 1042434
  %v1693 = vsel %vm1692, %v1691, %v1690
  %v1694 = vrot.slane %v1675, 5
  %vm1695 = vcmask 1043459
  %v1696 = vsel %vm1695, %v1694, %v1693
  %v1697 = vrot.slane %v1676, 4
  %vm1698 = vcmask 1044484
  %v1699 = vsel %vm1698, %v1697, %v1696
  %v1700 = vrot.slane %v1677, 3
  %vm1701 = vcmask 1045509
  %v1702 = vsel %vm1701, %v1700, %v1699
  %v1703 = vrot.slane %v1678, 2
  %vm1704 = vcmask 1046534
  %v1705 = vsel %vm1704, %v1703, %v1702
  %v1706 = vrot.slane %v1679, 1
  %vm1707 = vcmask 1047559
  %v1708 = vsel %vm1707, %v1706, %v1705
  %1710 = vst.msk [vmem:[#allocation3] sm:$0xff] %vm1639, %v1708
  %v1711 = vld [vmem:[#allocation2 + $0x1] sm:$0x1]
  %v1712 = vld [vmem:[#allocation2 + $0x21] sm:$0x1]
  %v1713 = vld [vmem:[#allocation2 + $0x41] sm:$0x1]
  %v1714 = vld [vmem:[#allocation2 + $0x61] sm:$0x1]
  %v1715 = vld [vmem:[#allocation2 + $0x81] sm:$0x1]
  %v1716 = vld [vmem:[#allocation2 + $0xa1] sm:$0x1]
  %v1717 = vld [vmem:[#allocation2 + $0xc1] sm:$0x1]
  %v1718 = vld [vmem:[#allocation2 + $0xe1] sm:$0x1]
  %v1727 = vrot.slane %v1712, 7
  %v1728 = vsel %vm1689, %v1727, %v1711
  %v1729 = vrot.slane %v1713, 6
  %v1730 = vsel %vm1692, %v1729, %v1728
  %v1731 = vrot.slane %v1714, 5
  %v1732 = vsel %vm1695, %v1731, %v1730
  %v1733 = vrot.slane %v1715, 4
  %v1734 = vsel %vm1698, %v1733, %v1732
  %v1735 = vrot.slane %v1716, 3
  %v1736 = vsel %vm1701, %v1735, %v1734
  %v1737 = vrot.slane %v1717, 2
  %v1738 = vsel %vm1704, %v1737, %v1736
  %v1739 = vrot.slane %v1718, 1
  %v1740 = vsel %vm1707, %v1739, %v1738
  %1741 = vrot.lane.b32.xlu0 %v1740, 32
  %v1742 = vpop.permute.xlu0 %1741
  %vm1744 = vcmask 523520
  %1745 = vst.msk [vmem:[#allocation3] sm:$0xff] %vm1744, %v1742
  %v1746 = vld [vmem:[#allocation2 + $0x2] sm:$0x1]
  %v1747 = vld [vmem:[#allocation2 + $0x22] sm:$0x1]
  %v1748 = vld [vmem:[#allocation2 + $0x42] sm:$0x1]
  %v1749 = vld [vmem:[#allocation2 + $0x62] sm:$0x1]
  %v1750 = vld [vmem:[#allocation2 + $0x82] sm:$0x1]
  %v1751 = vld [vmem:[#allocation2 + $0xa2] sm:$0x1]
  %v1752 = vld [vmem:[#allocation2 + $0xc2] sm:$0x1]
  %v1753 = vld [vmem:[#allocation2 + $0xe2] sm:$0x1]
  %v1762 = vrot.slane %v1747, 7
  %v1763 = vsel %vm1689, %v1762, %v1746
  %v1764 = vrot.slane %v1748, 6
  %v1765 = vsel %vm1692, %v1764, %v1763
  %v1766 = vrot.slane %v1749, 5
  %v1767 = vsel %vm1695, %v1766, %v1765
  %v1768 = vrot.slane %v1750, 4
  %v1769 = vsel %vm1698, %v1768, %v1767
  %v1770 = vrot.slane %v1751, 3
  %v1771 = vsel %vm1701, %v1770, %v1769
  %v1772 = vrot.slane %v1752, 2
  %v1773 = vsel %vm1704, %v1772, %v1771
  %v1774 = vrot.slane %v1753, 1
  %v1775 = vsel %vm1707, %v1774, %v1773
  %1776 = vrot.lane.b32.xlu0 %v1775, 64
  %v1777 = vpop.permute.xlu0 %1776
  %vm1779 = vcmask 785920
  %1780 = vst.msk [vmem:[#allocation3] sm:$0xff] %vm1779, %v1777
  %v1781 = vld [vmem:[#allocation2 + $0x3] sm:$0x1]
  %v1782 = vld [vmem:[#allocation2 + $0x23] sm:$0x1]
  %v1783 = vld [vmem:[#allocation2 + $0x43] sm:$0x1]
  %v1784 = vld [vmem:[#allocation2 + $0x63] sm:$0x1]
  %v1785 = vld [vmem:[#allocation2 + $0x83] sm:$0x1]
  %v1786 = vld [vmem:[#allocation2 + $0xa3] sm:$0x1]
  %v1787 = vld [vmem:[#allocation2 + $0xc3] sm:$0x1]
  %v1788 = vld [vmem:[#allocation2 + $0xe3] sm:$0x1]
  %v1797 = vrot.slane %v1782, 7
  %v1798 = vsel %vm1689, %v1797, %v1781
  %v1799 = vrot.slane %v1783, 6
  %v1800 = vsel %vm1692, %v1799, %v1798
  %v1801 = vrot.slane %v1784, 5
  %v1802 = vsel %vm1695, %v1801, %v1800
  %v1803 = vrot.slane %v1785, 4
  %v1804 = vsel %vm1698, %v1803, %v1802
  %v1805 = vrot.slane %v1786, 3
  %v1806 = vsel %vm1701, %v1805, %v1804
  %v1807 = vrot.slane %v1787, 2
  %v1808 = vsel %vm1704, %v1807, %v1806
  %v1809 = vrot.slane %v1788, 1
  %v1810 = vsel %vm1707, %v1809, %v1808
  %1811 = vrot.lane.b32.xlu0 %v1810, 96
  %v1812 = vpop.permute.xlu0 %1811
  %vm1814 = vcmask 1048320
  %1815 = vst.msk [vmem:[#allocation3] sm:$0xff] %vm1814, %v1812
  %v1816 = vld [vmem:[#allocation2 + $0x4] sm:$0x1]
  %v1817 = vld [vmem:[#allocation2 + $0x24] sm:$0x1]
  %v1818 = vld [vmem:[#allocation2 + $0x44] sm:$0x1]
  %v1819 = vld [vmem:[#allocation2 + $0x64] sm:$0x1]
  %v1820 = vld [vmem:[#allocation2 + $0x84] sm:$0x1]
  %v1821 = vld [vmem:[#allocation2 + $0xa4] sm:$0x1]
  %v1822 = vld [vmem:[#allocation2 + $0xc4] sm:$0x1]
  %v1823 = vld [vmem:[#allocation2 + $0xe4] sm:$0x1]
  %v1832 = vrot.slane %v1817, 7
  %v1833 = vsel %vm1689, %v1832, %v1816
  %v1834 = vrot.slane %v1818, 6
  %v1835 = vsel %vm1692, %v1834, %v1833
  %v1836 = vrot.slane %v1819, 5
  %v1837 = vsel %vm1695, %v1836, %v1835
  %v1838 = vrot.slane %v1820, 4
  %v1839 = vsel %vm1698, %v1838, %v1837
  %v1840 = vrot.slane %v1821, 3
  %v1841 = vsel %vm1701, %v1840, %v1839
  %v1842 = vrot.slane %v1822, 2
  %v1843 = vsel %vm1704, %v1842, %v1841
  %v1844 = vrot.slane %v1823, 1
  %v1845 = vsel %vm1707, %v1844, %v1843
  %1847 = vst.msk [vmem:[#allocation3 + $0x8] sm:$0xff] %vm1639, %v1845
  %v1848 = vld [vmem:[#allocation2 + $0x5] sm:$0x1]
  %v1849 = vld [vmem:[#allocation2 + $0x25] sm:$0x1]
  %v1850 = vld [vmem:[#allocation2 + $0x45] sm:$0x1]
  %v1851 = vld [vmem:[#allocation2 + $0x65] sm:$0x1]
  %v1852 = vld [vmem:[#allocation2 + $0x85] sm:$0x1]
  %v1853 = vld [vmem:[#allocation2 + $0xa5] sm:$0x1]
  %v1854 = vld [vmem:[#allocation2 + $0xc5] sm:$0x1]
  %v1855 = vld [vmem:[#allocation2 + $0xe5] sm:$0x1]
  %v1864 = vrot.slane %v1849, 7
  %v1865 = vsel %vm1689, %v1864, %v1848
  %v1866 = vrot.slane %v1850, 6
  %v1867 = vsel %vm1692, %v1866, %v1865
  %v1868 = vrot.slane %v1851, 5
  %v1869 = vsel %vm1695, %v1868, %v1867
  %v1870 = vrot.slane %v1852, 4
  %v1871 = vsel %vm1698, %v1870, %v1869
  %v1872 = vrot.slane %v1853, 3
  %v1873 = vsel %vm1701, %v1872, %v1871
  %v1874 = vrot.slane %v1854, 2
  %v1875 = vsel %vm1704, %v1874, %v1873
  %v1876 = vrot.slane %v1855, 1
  %v1877 = vsel %vm1707, %v1876, %v1875
  %1878 = vrot.lane.b32.xlu0 %v1877, 32
  %v1879 = vpop.permute.xlu0 %1878
  %1881 = vst.msk [vmem:[#allocation3 + $0x8] sm:$0xff] %vm1744, %v1879
  %v1882 = vld [vmem:[#allocation2 + $0x6] sm:$0x1]
  %v1883 = vld [vmem:[#allocation2 + $0x26] sm:$0x1]
  %v1884 = vld [vmem:[#allocation2 + $0x46] sm:$0x1]
  %v1885 = vld [vmem:[#allocation2 + $0x66] sm:$0x1]
  %v1886 = vld [vmem:[#allocation2 + $0x86] sm:$0x1]
  %v1887 = vld [vmem:[#allocation2 + $0xa6] sm:$0x1]
  %v1888 = vld [vmem:[#allocation2 + $0xc6] sm:$0x1]
  %v1889 = vld [vmem:[#allocation2 + $0xe6] sm:$0x1]
  %v1898 = vrot.slane %v1883, 7
  %v1899 = vsel %vm1689, %v1898, %v1882
  %v1900 = vrot.slane %v1884, 6
  %v1901 = vsel %vm1692, %v1900, %v1899
  %v1902 = vrot.slane %v1885, 5
  %v1903 = vsel %vm1695, %v1902, %v1901
  %v1904 = vrot.slane %v1886, 4
  %v1905 = vsel %vm1698, %v1904, %v1903
  %v1906 = vrot.slane %v1887, 3
  %v1907 = vsel %vm1701, %v1906, %v1905
  %v1908 = vrot.slane %v1888, 2
  %v1909 = vsel %vm1704, %v1908, %v1907
  %v1910 = vrot.slane %v1889, 1
  %v1911 = vsel %vm1707, %v1910, %v1909
  %1912 = vrot.lane.b32.xlu0 %v1911, 64
  %v1913 = vpop.permute.xlu0 %1912
  %1915 = vst.msk [vmem:[#allocation3 + $0x8] sm:$0xff] %vm1779, %v1913
  %v1916 = vld [vmem:[#allocation2 + $0x7] sm:$0x1]
  %v1917 = vld [vmem:[#allocation2 + $0x27] sm:$0x1]
  %v1918 = vld [vmem:[#allocation2 + $0x47] sm:$0x1]
  %v1919 = vld [vmem:[#allocation2 + $0x67] sm:$0x1]
  %v1920 = vld [vmem:[#allocation2 + $0x87] sm:$0x1]
  %v1921 = vld [vmem:[#allocation2 + $0xa7] sm:$0x1]
  %v1922 = vld [vmem:[#allocation2 + $0xc7] sm:$0x1]
  %v1923 = vld [vmem:[#allocation2 + $0xe7] sm:$0x1]
  %v1932 = vrot.slane %v1917, 7
  %v1933 = vsel %vm1689, %v1932, %v1916
  %v1934 = vrot.slane %v1918, 6
  %v1935 = vsel %vm1692, %v1934, %v1933
  %v1936 = vrot.slane %v1919, 5
  %v1937 = vsel %vm1695, %v1936, %v1935
  %v1938 = vrot.slane %v1920, 4
  %v1939 = vsel %vm1698, %v1938, %v1937
  %v1940 = vrot.slane %v1921, 3
  %v1941 = vsel %vm1701, %v1940, %v1939
  %v1942 = vrot.slane %v1922, 2
  %v1943 = vsel %vm1704, %v1942, %v1941
  %v1944 = vrot.slane %v1923, 1
  %v1945 = vsel %vm1707, %v1944, %v1943
  %1946 = vrot.lane.b32.xlu0 %v1945, 96
  %v1947 = vpop.permute.xlu0 %1946
  %1949 = vst.msk [vmem:[#allocation3 + $0x8] sm:$0xff] %vm1814, %v1947
  %v1950 = vld [vmem:[#allocation2 + $0x8] sm:$0x1]
  %v1951 = vld [vmem:[#allocation2 + $0x28] sm:$0x1]
  %v1952 = vld [vmem:[#allocation2 + $0x48] sm:$0x1]
  %v1953 = vld [vmem:[#allocation2 + $0x68] sm:$0x1]
  %v1954 = vld [vmem:[#allocation2 + $0x88] sm:$0x1]
  %v1955 = vld [vmem:[#allocation2 + $0xa8] sm:$0x1]
  %v1956 = vld [vmem:[#allocation2 + $0xc8] sm:$0x1]
  %v1957 = vld [vmem:[#allocation2 + $0xe8] sm:$0x1]
  %v1966 = vrot.slane %v1951, 7
  %v1967 = vsel %vm1689, %v1966, %v1950
  %v1968 = vrot.slane %v1952, 6
  %v1969 = vsel %vm1692, %v1968, %v1967
  %v1970 = vrot.slane %v1953, 5
  %v1971 = vsel %vm1695, %v1970, %v1969
  %v1972 = vrot.slane %v1954, 4
  %v1973 = vsel %vm1698, %v1972, %v1971
  %v1974 = vrot.slane %v1955, 3
  %v1975 = vsel %vm1701, %v1974, %v1973
  %v1976 = vrot.slane %v1956, 2
  %v1977 = vsel %vm1704, %v1976, %v1975
  %v1978 = vrot.slane %v1957, 1
  %v1979 = vsel %vm1707, %v1978, %v1977
  %1981 = vst.msk [vmem:[#allocation3 + $0x10] sm:$0xff] %vm1639, %v1979
  %v1982 = vld [vmem:[#allocation2 + $0x9] sm:$0x1]
  %v1983 = vld [vmem:[#allocation2 + $0x29] sm:$0x1]
  %v1984 = vld [vmem:[#allocation2 + $0x49] sm:$0x1]
  %v1985 = vld [vmem:[#allocation2 + $0x69] sm:$0x1]
  %v1986 = vld [vmem:[#allocation2 + $0x89] sm:$0x1]
  %v1987 = vld [vmem:[#allocation2 + $0xa9] sm:$0x1]
  %v1988 = vld [vmem:[#allocation2 + $0xc9] sm:$0x1]
  %v1989 = vld [vmem:[#allocation2 + $0xe9] sm:$0x1]
  %v1998 = vrot.slane %v1983, 7
  %v1999 = vsel %vm1689, %v1998, %v1982
  %v2000 = vrot.slane %v1984, 6
  %v2001 = vsel %vm1692, %v2000, %v1999
  %v2002 = vrot.slane %v1985, 5
  %v2003 = vsel %vm1695, %v2002, %v2001
  %v2004 = vrot.slane %v1986, 4
  %v2005 = vsel %vm1698, %v2004, %v2003
  %v2006 = vrot.slane %v1987, 3
  %v2007 = vsel %vm1701, %v2006, %v2005
  %v2008 = vrot.slane %v1988, 2
  %v2009 = vsel %vm1704, %v2008, %v2007
  %v2010 = vrot.slane %v1989, 1
  %v2011 = vsel %vm1707, %v2010, %v2009
  %2012 = vrot.lane.b32.xlu0 %v2011, 32
  %v2013 = vpop.permute.xlu0 %2012
  %2015 = vst.msk [vmem:[#allocation3 + $0x10] sm:$0xff] %vm1744, %v2013
  %v2016 = vld [vmem:[#allocation2 + $0xa] sm:$0x1]
  %v2017 = vld [vmem:[#allocation2 + $0x2a] sm:$0x1]
  %v2018 = vld [vmem:[#allocation2 + $0x4a] sm:$0x1]
  %v2019 = vld [vmem:[#allocation2 + $0x6a] sm:$0x1]
  %v2020 = vld [vmem:[#allocation2 + $0x8a] sm:$0x1]
  %v2021 = vld [vmem:[#allocation2 + $0xaa] sm:$0x1]
  %v2022 = vld [vmem:[#allocation2 + $0xca] sm:$0x1]
  %v2023 = vld [vmem:[#allocation2 + $0xea] sm:$0x1]
  %v2032 = vrot.slane %v2017, 7
  %v2033 = vsel %vm1689, %v2032, %v2016
  %v2034 = vrot.slane %v2018, 6
  %v2035 = vsel %vm1692, %v2034, %v2033
  %v2036 = vrot.slane %v2019, 5
  %v2037 = vsel %vm1695, %v2036, %v2035
  %v2038 = vrot.slane %v2020, 4
  %v2039 = vsel %vm1698, %v2038, %v2037
  %v2040 = vrot.slane %v2021, 3
  %v2041 = vsel %vm1701, %v2040, %v2039
  %v2042 = vrot.slane %v2022, 2
  %v2043 = vsel %vm1704, %v2042, %v2041
  %v2044 = vrot.slane %v2023, 1
  %v2045 = vsel %vm1707, %v2044, %v2043
  %2046 = vrot.lane.b32.xlu0 %v2045, 64
  %v2047 = vpop.permute.xlu0 %2046
  %2049 = vst.msk [vmem:[#allocation3 + $0x10] sm:$0xff] %vm1779, %v2047
  %v2050 = vld [vmem:[#allocation2 + $0xb] sm:$0x1]
  %v2051 = vld [vmem:[#allocation2 + $0x2b] sm:$0x1]
  %v2052 = vld [vmem:[#allocation2 + $0x4b] sm:$0x1]
  %v2053 = vld [vmem:[#allocation2 + $0x6b] sm:$0x1]
  %v2054 = vld [vmem:[#allocation2 + $0x8b] sm:$0x1]
  %v2055 = vld [vmem:[#allocation2 + $0xab] sm:$0x1]
  %v2056 = vld [vmem:[#allocation2 + $0xcb] sm:$0x1]
  %v2057 = vld [vmem:[#allocation2 + $0xeb] sm:$0x1]
  %v2066 = vrot.slane %v2051, 7
  %v2067 = vsel %vm1689, %v2066, %v2050
  %v2068 = vrot.slane %v2052, 6
  %v2069 = vsel %vm1692, %v2068, %v2067
  %v2070 = vrot.slane %v2053, 5
  %v2071 = vsel %vm1695, %v2070, %v2069
  %v2072 = vrot.slane %v2054, 4
  %v2073 = vsel %vm1698, %v2072, %v2071
  %v2074 = vrot.slane %v2055, 3
  %v2075 = vsel %vm1701, %v2074, %v2073
  %v2076 = vrot.slane %v2056, 2
  %v2077 = vsel %vm1704, %v2076, %v2075
  %v2078 = vrot.slane %v2057, 1
  %v2079 = vsel %vm1707, %v2078, %v2077
  %2080 = vrot.lane.b32.xlu0 %v2079, 96
  %v2081 = vpop.permute.xlu0 %2080
  %2083 = vst.msk [vmem:[#allocation3 + $0x10] sm:$0xff] %vm1814, %v2081
  %v2084 = vld [vmem:[#allocation2 + $0xc] sm:$0x1]
  %v2085 = vld [vmem:[#allocation2 + $0x2c] sm:$0x1]
  %v2086 = vld [vmem:[#allocation2 + $0x4c] sm:$0x1]
  %v2087 = vld [vmem:[#allocation2 + $0x6c] sm:$0x1]
  %v2088 = vld [vmem:[#allocation2 + $0x8c] sm:$0x1]
  %v2089 = vld [vmem:[#allocation2 + $0xac] sm:$0x1]
  %v2090 = vld [vmem:[#allocation2 + $0xcc] sm:$0x1]
  %v2091 = vld [vmem:[#allocation2 + $0xec] sm:$0x1]
  %v2100 = vrot.slane %v2085, 7
  %v2101 = vsel %vm1689, %v2100, %v2084
  %v2102 = vrot.slane %v2086, 6
  %v2103 = vsel %vm1692, %v2102, %v2101
  %v2104 = vrot.slane %v2087, 5
  %v2105 = vsel %vm1695, %v2104, %v2103
  %v2106 = vrot.slane %v2088, 4
  %v2107 = vsel %vm1698, %v2106, %v2105
  %v2108 = vrot.slane %v2089, 3
  %v2109 = vsel %vm1701, %v2108, %v2107
  %v2110 = vrot.slane %v2090, 2
  %v2111 = vsel %vm1704, %v2110, %v2109
  %v2112 = vrot.slane %v2091, 1
  %v2113 = vsel %vm1707, %v2112, %v2111
  %2115 = vst.msk [vmem:[#allocation3 + $0x18] sm:$0xff] %vm1639, %v2113
  %v2116 = vld [vmem:[#allocation2 + $0xd] sm:$0x1]
  %v2117 = vld [vmem:[#allocation2 + $0x2d] sm:$0x1]
  %v2118 = vld [vmem:[#allocation2 + $0x4d] sm:$0x1]
  %v2119 = vld [vmem:[#allocation2 + $0x6d] sm:$0x1]
  %v2120 = vld [vmem:[#allocation2 + $0x8d] sm:$0x1]
  %v2121 = vld [vmem:[#allocation2 + $0xad] sm:$0x1]
  %v2122 = vld [vmem:[#allocation2 + $0xcd] sm:$0x1]
  %v2123 = vld [vmem:[#allocation2 + $0xed] sm:$0x1]
  %v2132 = vrot.slane %v2117, 7
  %v2133 = vsel %vm1689, %v2132, %v2116
  %v2134 = vrot.slane %v2118, 6
  %v2135 = vsel %vm1692, %v2134, %v2133
  %v2136 = vrot.slane %v2119, 5
  %v2137 = vsel %vm1695, %v2136, %v2135
  %v2138 = vrot.slane %v2120, 4
  %v2139 = vsel %vm1698, %v2138, %v2137
  %v2140 = vrot.slane %v2121, 3
  %v2141 = vsel %vm1701, %v2140, %v2139
  %v2142 = vrot.slane %v2122, 2
  %v2143 = vsel %vm1704, %v2142, %v2141
  %v2144 = vrot.slane %v2123, 1
  %v2145 = vsel %vm1707, %v2144, %v2143
  %2146 = vrot.lane.b32.xlu0 %v2145, 32
  %v2147 = vpop.permute.xlu0 %2146
  %2149 = vst.msk [vmem:[#allocation3 + $0x18] sm:$0xff] %vm1744, %v2147
  %v2150 = vld [vmem:[#allocation2 + $0xe] sm:$0x1]
  %v2151 = vld [vmem:[#allocation2 + $0x2e] sm:$0x1]
  %v2152 = vld [vmem:[#allocation2 + $0x4e] sm:$0x1]
  %v2153 = vld [vmem:[#allocation2 + $0x6e] sm:$0x1]
  %v2154 = vld [vmem:[#allocation2 + $0x8e] sm:$0x1]
  %v2155 = vld [vmem:[#allocation2 + $0xae] sm:$0x1]
  %v2156 = vld [vmem:[#allocation2 + $0xce] sm:$0x1]
  %v2157 = vld [vmem:[#allocation2 + $0xee] sm:$0x1]
  %v2166 = vrot.slane %v2151, 7
  %v2167 = vsel %vm1689, %v2166, %v2150
  %v2168 = vrot.slane %v2152, 6
  %v2169 = vsel %vm1692, %v2168, %v2167
  %v2170 = vrot.slane %v2153, 5
  %v2171 = vsel %vm1695, %v2170, %v2169
  %v2172 = vrot.slane %v2154, 4
  %v2173 = vsel %vm1698, %v2172, %v2171
  %v2174 = vrot.slane %v2155, 3
  %v2175 = vsel %vm1701, %v2174, %v2173
  %v2176 = vrot.slane %v2156, 2
  %v2177 = vsel %vm1704, %v2176, %v2175
  %v2178 = vrot.slane %v2157, 1
  %v2179 = vsel %vm1707, %v2178, %v2177
  %2180 = vrot.lane.b32.xlu0 %v2179, 64
  %v2181 = vpop.permute.xlu0 %2180
  %2183 = vst.msk [vmem:[#allocation3 + $0x18] sm:$0xff] %vm1779, %v2181
  %v2184 = vld [vmem:[#allocation2 + $0xf] sm:$0x1]
  %v2185 = vld [vmem:[#allocation2 + $0x2f] sm:$0x1]
  %v2186 = vld [vmem:[#allocation2 + $0x4f] sm:$0x1]
  %v2187 = vld [vmem:[#allocation2 + $0x6f] sm:$0x1]
  %v2188 = vld [vmem:[#allocation2 + $0x8f] sm:$0x1]
  %v2189 = vld [vmem:[#allocation2 + $0xaf] sm:$0x1]
  %v2190 = vld [vmem:[#allocation2 + $0xcf] sm:$0x1]
  %v2191 = vld [vmem:[#allocation2 + $0xef] sm:$0x1]
  %v2200 = vrot.slane %v2185, 7
  %v2201 = vsel %vm1689, %v2200, %v2184
  %v2202 = vrot.slane %v2186, 6
  %v2203 = vsel %vm1692, %v2202, %v2201
  %v2204 = vrot.slane %v2187, 5
  %v2205 = vsel %vm1695, %v2204, %v2203
  %v2206 = vrot.slane %v2188, 4
  %v2207 = vsel %vm1698, %v2206, %v2205
  %v2208 = vrot.slane %v2189, 3
  %v2209 = vsel %vm1701, %v2208, %v2207
  %v2210 = vrot.slane %v2190, 2
  %v2211 = vsel %vm1704, %v2210, %v2209
  %v2212 = vrot.slane %v2191, 1
  %v2213 = vsel %vm1707, %v2212, %v2211
  %2214 = vrot.lane.b32.xlu0 %v2213, 96
  %v2215 = vpop.permute.xlu0 %2214
  %2217 = vst.msk [vmem:[#allocation3 + $0x18] sm:$0xff] %vm1814, %v2215
  %v2218 = vld [vmem:[#allocation2 + $0x10] sm:$0x1]
  %v2219 = vld [vmem:[#allocation2 + $0x30] sm:$0x1]
  %v2220 = vld [vmem:[#allocation2 + $0x50] sm:$0x1]
  %v2221 = vld [vmem:[#allocation2 + $0x70] sm:$0x1]
  %v2222 = vld [vmem:[#allocation2 + $0x90] sm:$0x1]
  %v2223 = vld [vmem:[#allocation2 + $0xb0] sm:$0x1]
  %v2224 = vld [vmem:[#allocation2 + $0xd0] sm:$0x1]
  %v2225 = vld [vmem:[#allocation2 + $0xf0] sm:$0x1]
  %v2234 = vrot.slane %v2219, 7
  %v2235 = vsel %vm1689, %v2234, %v2218
  %v2236 = vrot.slane %v2220, 6
  %v2237 = vsel %vm1692, %v2236, %v2235
  %v2238 = vrot.slane %v2221, 5
  %v2239 = vsel %vm1695, %v2238, %v2237
  %v2240 = vrot.slane %v2222, 4
  %v2241 = vsel %vm1698, %v2240, %v2239
  %v2242 = vrot.slane %v2223, 3
  %v2243 = vsel %vm1701, %v2242, %v2241
  %v2244 = vrot.slane %v2224, 2
  %v2245 = vsel %vm1704, %v2244, %v2243
  %v2246 = vrot.slane %v2225, 1
  %v2247 = vsel %vm1707, %v2246, %v2245
  %2249 = vst.msk [vmem:[#allocation3 + $0x20] sm:$0xff] %vm1639, %v2247
  %v2250 = vld [vmem:[#allocation2 + $0x11] sm:$0x1]
  %v2251 = vld [vmem:[#allocation2 + $0x31] sm:$0x1]
  %v2252 = vld [vmem:[#allocation2 + $0x51] sm:$0x1]
  %v2253 = vld [vmem:[#allocation2 + $0x71] sm:$0x1]
  %v2254 = vld [vmem:[#allocation2 + $0x91] sm:$0x1]
  %v2255 = vld [vmem:[#allocation2 + $0xb1] sm:$0x1]
  %v2256 = vld [vmem:[#allocation2 + $0xd1] sm:$0x1]
  %v2257 = vld [vmem:[#allocation2 + $0xf1] sm:$0x1]
  %v2266 = vrot.slane %v2251, 7
  %v2267 = vsel %vm1689, %v2266, %v2250
  %v2268 = vrot.slane %v2252, 6
  %v2269 = vsel %vm1692, %v2268, %v2267
  %v2270 = vrot.slane %v2253, 5
  %v2271 = vsel %vm1695, %v2270, %v2269
  %v2272 = vrot.slane %v2254, 4
  %v2273 = vsel %vm1698, %v2272, %v2271
  %v2274 = vrot.slane %v2255, 3
  %v2275 = vsel %vm1701, %v2274, %v2273
  %v2276 = vrot.slane %v2256, 2
  %v2277 = vsel %vm1704, %v2276, %v2275
  %v2278 = vrot.slane %v2257, 1
  %v2279 = vsel %vm1707, %v2278, %v2277
  %2280 = vrot.lane.b32.xlu0 %v2279, 32
  %v2281 = vpop.permute.xlu0 %2280
  %2283 = vst.msk [vmem:[#allocation3 + $0x20] sm:$0xff] %vm1744, %v2281
  %v2284 = vld [vmem:[#allocation2 + $0x12] sm:$0x1]
  %v2285 = vld [vmem:[#allocation2 + $0x32] sm:$0x1]
  %v2286 = vld [vmem:[#allocation2 + $0x52] sm:$0x1]
  %v2287 = vld [vmem:[#allocation2 + $0x72] sm:$0x1]
  %v2288 = vld [vmem:[#allocation2 + $0x92] sm:$0x1]
  %v2289 = vld [vmem:[#allocation2 + $0xb2] sm:$0x1]
  %v2290 = vld [vmem:[#allocation2 + $0xd2] sm:$0x1]
  %v2291 = vld [vmem:[#allocation2 + $0xf2] sm:$0x1]
  %v2300 = vrot.slane %v2285, 7
  %v2301 = vsel %vm1689, %v2300, %v2284
  %v2302 = vrot.slane %v2286, 6
  %v2303 = vsel %vm1692, %v2302, %v2301
  %v2304 = vrot.slane %v2287, 5
  %v2305 = vsel %vm1695, %v2304, %v2303
  %v2306 = vrot.slane %v2288, 4
  %v2307 = vsel %vm1698, %v2306, %v2305
  %v2308 = vrot.slane %v2289, 3
  %v2309 = vsel %vm1701, %v2308, %v2307
  %v2310 = vrot.slane %v2290, 2
  %v2311 = vsel %vm1704, %v2310, %v2309
  %v2312 = vrot.slane %v2291, 1
  %v2313 = vsel %vm1707, %v2312, %v2311
  %2314 = vrot.lane.b32.xlu0 %v2313, 64
  %v2315 = vpop.permute.xlu0 %2314
  %2317 = vst.msk [vmem:[#allocation3 + $0x20] sm:$0xff] %vm1779, %v2315
  %v2318 = vld [vmem:[#allocation2 + $0x13] sm:$0x1]
  %v2319 = vld [vmem:[#allocation2 + $0x33] sm:$0x1]
  %v2320 = vld [vmem:[#allocation2 + $0x53] sm:$0x1]
  %v2321 = vld [vmem:[#allocation2 + $0x73] sm:$0x1]
  %v2322 = vld [vmem:[#allocation2 + $0x93] sm:$0x1]
  %v2323 = vld [vmem:[#allocation2 + $0xb3] sm:$0x1]
  %v2324 = vld [vmem:[#allocation2 + $0xd3] sm:$0x1]
  %v2325 = vld [vmem:[#allocation2 + $0xf3] sm:$0x1]
  %v2334 = vrot.slane %v2319, 7
  %v2335 = vsel %vm1689, %v2334, %v2318
  %v2336 = vrot.slane %v2320, 6
  %v2337 = vsel %vm1692, %v2336, %v2335
  %v2338 = vrot.slane %v2321, 5
  %v2339 = vsel %vm1695, %v2338, %v2337
  %v2340 = vrot.slane %v2322, 4
  %v2341 = vsel %vm1698, %v2340, %v2339
  %v2342 = vrot.slane %v2323, 3
  %v2343 = vsel %vm1701, %v2342, %v2341
  %v2344 = vrot.slane %v2324, 2
  %v2345 = vsel %vm1704, %v2344, %v2343
  %v2346 = vrot.slane %v2325, 1
  %v2347 = vsel %vm1707, %v2346, %v2345
  %2348 = vrot.lane.b32.xlu0 %v2347, 96
  %v2349 = vpop.permute.xlu0 %2348
  %2351 = vst.msk [vmem:[#allocation3 + $0x20] sm:$0xff] %vm1814, %v2349
  %v2352 = vld [vmem:[#allocation2 + $0x14] sm:$0x1]
  %v2353 = vld [vmem:[#allocation2 + $0x34] sm:$0x1]
  %v2354 = vld [vmem:[#allocation2 + $0x54] sm:$0x1]
  %v2355 = vld [vmem:[#allocation2 + $0x74] sm:$0x1]
  %v2356 = vld [vmem:[#allocation2 + $0x94] sm:$0x1]
  %v2357 = vld [vmem:[#allocation2 + $0xb4] sm:$0x1]
  %v2358 = vld [vmem:[#allocation2 + $0xd4] sm:$0x1]
  %v2359 = vld [vmem:[#allocation2 + $0xf4] sm:$0x1]
  %v2368 = vrot.slane %v2353, 7
  %v2369 = vsel %vm1689, %v2368, %v2352
  %v2370 = vrot.slane %v2354, 6
  %v2371 = vsel %vm1692, %v2370, %v2369
  %v2372 = vrot.slane %v2355, 5
  %v2373 = vsel %vm1695, %v2372, %v2371
  %v2374 = vrot.slane %v2356, 4
  %v2375 = vsel %vm1698, %v2374, %v2373
  %v2376 = vrot.slane %v2357, 3
  %v2377 = vsel %vm1701, %v2376, %v2375
  %v2378 = vrot.slane %v2358, 2
  %v2379 = vsel %vm1704, %v2378, %v2377
  %v2380 = vrot.slane %v2359, 1
  %v2381 = vsel %vm1707, %v2380, %v2379
  %2383 = vst.msk [vmem:[#allocation3 + $0x28] sm:$0xff] %vm1639, %v2381
  %v2384 = vld [vmem:[#allocation2 + $0x15] sm:$0x1]
  %v2385 = vld [vmem:[#allocation2 + $0x35] sm:$0x1]
  %v2386 = vld [vmem:[#allocation2 + $0x55] sm:$0x1]
  %v2387 = vld [vmem:[#allocation2 + $0x75] sm:$0x1]
  %v2388 = vld [vmem:[#allocation2 + $0x95] sm:$0x1]
  %v2389 = vld [vmem:[#allocation2 + $0xb5] sm:$0x1]
  %v2390 = vld [vmem:[#allocation2 + $0xd5] sm:$0x1]
  %v2391 = vld [vmem:[#allocation2 + $0xf5] sm:$0x1]
  %v2400 = vrot.slane %v2385, 7
  %v2401 = vsel %vm1689, %v2400, %v2384
  %v2402 = vrot.slane %v2386, 6
  %v2403 = vsel %vm1692, %v2402, %v2401
  %v2404 = vrot.slane %v2387, 5
  %v2405 = vsel %vm1695, %v2404, %v2403
  %v2406 = vrot.slane %v2388, 4
  %v2407 = vsel %vm1698, %v2406, %v2405
  %v2408 = vrot.slane %v2389, 3
  %v2409 = vsel %vm1701, %v2408, %v2407
  %v2410 = vrot.slane %v2390, 2
  %v2411 = vsel %vm1704, %v2410, %v2409
  %v2412 = vrot.slane %v2391, 1
  %v2413 = vsel %vm1707, %v2412, %v2411
  %2414 = vrot.lane.b32.xlu0 %v2413, 32
  %v2415 = vpop.permute.xlu0 %2414
  %2417 = vst.msk [vmem:[#allocation3 + $0x28] sm:$0xff] %vm1744, %v2415
  %v2418 = vld [vmem:[#allocation2 + $0x16] sm:$0x1]
  %v2419 = vld [vmem:[#allocation2 + $0x36] sm:$0x1]
  %v2420 = vld [vmem:[#allocation2 + $0x56] sm:$0x1]
  %v2421 = vld [vmem:[#allocation2 + $0x76] sm:$0x1]
  %v2422 = vld [vmem:[#allocation2 + $0x96] sm:$0x1]
  %v2423 = vld [vmem:[#allocation2 + $0xb6] sm:$0x1]
  %v2424 = vld [vmem:[#allocation2 + $0xd6] sm:$0x1]
  %v2425 = vld [vmem:[#allocation2 + $0xf6] sm:$0x1]
  %v2434 = vrot.slane %v2419, 7
  %v2435 = vsel %vm1689, %v2434, %v2418
  %v2436 = vrot.slane %v2420, 6
  %v2437 = vsel %vm1692, %v2436, %v2435
  %v2438 = vrot.slane %v2421, 5
  %v2439 = vsel %vm1695, %v2438, %v2437
  %v2440 = vrot.slane %v2422, 4
  %v2441 = vsel %vm1698, %v2440, %v2439
  %v2442 = vrot.slane %v2423, 3
  %v2443 = vsel %vm1701, %v2442, %v2441
  %v2444 = vrot.slane %v2424, 2
  %v2445 = vsel %vm1704, %v2444, %v2443
  %v2446 = vrot.slane %v2425, 1
  %v2447 = vsel %vm1707, %v2446, %v2445
  %2448 = vrot.lane.b32.xlu0 %v2447, 64
  %v2449 = vpop.permute.xlu0 %2448
  %2451 = vst.msk [vmem:[#allocation3 + $0x28] sm:$0xff] %vm1779, %v2449
  %v2452 = vld [vmem:[#allocation2 + $0x17] sm:$0x1]
  %v2453 = vld [vmem:[#allocation2 + $0x37] sm:$0x1]
  %v2454 = vld [vmem:[#allocation2 + $0x57] sm:$0x1]
  %v2455 = vld [vmem:[#allocation2 + $0x77] sm:$0x1]
  %v2456 = vld [vmem:[#allocation2 + $0x97] sm:$0x1]
  %v2457 = vld [vmem:[#allocation2 + $0xb7] sm:$0x1]
  %v2458 = vld [vmem:[#allocation2 + $0xd7] sm:$0x1]
  %v2459 = vld [vmem:[#allocation2 + $0xf7] sm:$0x1]
  %v2468 = vrot.slane %v2453, 7
  %v2469 = vsel %vm1689, %v2468, %v2452
  %v2470 = vrot.slane %v2454, 6
  %v2471 = vsel %vm1692, %v2470, %v2469
  %v2472 = vrot.slane %v2455, 5
  %v2473 = vsel %vm1695, %v2472, %v2471
  %v2474 = vrot.slane %v2456, 4
  %v2475 = vsel %vm1698, %v2474, %v2473
  %v2476 = vrot.slane %v2457, 3
  %v2477 = vsel %vm1701, %v2476, %v2475
  %v2478 = vrot.slane %v2458, 2
  %v2479 = vsel %vm1704, %v2478, %v2477
  %v2480 = vrot.slane %v2459, 1
  %v2481 = vsel %vm1707, %v2480, %v2479
  %2482 = vrot.lane.b32.xlu0 %v2481, 96
  %v2483 = vpop.permute.xlu0 %2482
  %2485 = vst.msk [vmem:[#allocation3 + $0x28] sm:$0xff] %vm1814, %v2483
  %v2486 = vld [vmem:[#allocation2 + $0x18] sm:$0x1]
  %v2487 = vld [vmem:[#allocation2 + $0x38] sm:$0x1]
  %v2488 = vld [vmem:[#allocation2 + $0x58] sm:$0x1]
  %v2489 = vld [vmem:[#allocation2 + $0x78] sm:$0x1]
  %v2490 = vld [vmem:[#allocation2 + $0x98] sm:$0x1]
  %v2491 = vld [vmem:[#allocation2 + $0xb8] sm:$0x1]
  %v2492 = vld [vmem:[#allocation2 + $0xd8] sm:$0x1]
  %v2493 = vld [vmem:[#allocation2 + $0xf8] sm:$0x1]
  %v2502 = vrot.slane %v2487, 7
  %v2503 = vsel %vm1689, %v2502, %v2486
  %v2504 = vrot.slane %v2488, 6
  %v2505 = vsel %vm1692, %v2504, %v2503
  %v2506 = vrot.slane %v2489, 5
  %v2507 = vsel %vm1695, %v2506, %v2505
  %v2508 = vrot.slane %v2490, 4
  %v2509 = vsel %vm1698, %v2508, %v2507
  %v2510 = vrot.slane %v2491, 3
  %v2511 = vsel %vm1701, %v2510, %v2509
  %v2512 = vrot.slane %v2492, 2
  %v2513 = vsel %vm1704, %v2512, %v2511
  %v2514 = vrot.slane %v2493, 1
  %v2515 = vsel %vm1707, %v2514, %v2513
  %2517 = vst.msk [vmem:[#allocation3 + $0x30] sm:$0xff] %vm1639, %v2515
  %v2518 = vld [vmem:[#allocation2 + $0x19] sm:$0x1]
  %v2519 = vld [vmem:[#allocation2 + $0x39] sm:$0x1]
  %v2520 = vld [vmem:[#allocation2 + $0x59] sm:$0x1]
  %v2521 = vld [vmem:[#allocation2 + $0x79] sm:$0x1]
  %v2522 = vld [vmem:[#allocation2 + $0x99] sm:$0x1]
  %v2523 = vld [vmem:[#allocation2 + $0xb9] sm:$0x1]
  %v2524 = vld [vmem:[#allocation2 + $0xd9] sm:$0x1]
  %v2525 = vld [vmem:[#allocation2 + $0xf9] sm:$0x1]
  %v2534 = vrot.slane %v2519, 7
  %v2535 = vsel %vm1689, %v2534, %v2518
  %v2536 = vrot.slane %v2520, 6
  %v2537 = vsel %vm1692, %v2536, %v2535
  %v2538 = vrot.slane %v2521, 5
  %v2539 = vsel %vm1695, %v2538, %v2537
  %v2540 = vrot.slane %v2522, 4
  %v2541 = vsel %vm1698, %v2540, %v2539
  %v2542 = vrot.slane %v2523, 3
  %v2543 = vsel %vm1701, %v2542, %v2541
  %v2544 = vrot.slane %v2524, 2
  %v2545 = vsel %vm1704, %v2544, %v2543
  %v2546 = vrot.slane %v2525, 1
  %v2547 = vsel %vm1707, %v2546, %v2545
  %2548 = vrot.lane.b32.xlu0 %v2547, 32
  %v2549 = vpop.permute.xlu0 %2548
  %2551 = vst.msk [vmem:[#allocation3 + $0x30] sm:$0xff] %vm1744, %v2549
  %v2552 = vld [vmem:[#allocation2 + $0x1a] sm:$0x1]
  %v2553 = vld [vmem:[#allocation2 + $0x3a] sm:$0x1]
  %v2554 = vld [vmem:[#allocation2 + $0x5a] sm:$0x1]
  %v2555 = vld [vmem:[#allocation2 + $0x7a] sm:$0x1]
  %v2556 = vld [vmem:[#allocation2 + $0x9a] sm:$0x1]
  %v2557 = vld [vmem:[#allocation2 + $0xba] sm:$0x1]
  %v2558 = vld [vmem:[#allocation2 + $0xda] sm:$0x1]
  %v2559 = vld [vmem:[#allocation2 + $0xfa] sm:$0x1]
  %v2568 = vrot.slane %v2553, 7
  %v2569 = vsel %vm1689, %v2568, %v2552
  %v2570 = vrot.slane %v2554, 6
  %v2571 = vsel %vm1692, %v2570, %v2569
  %v2572 = vrot.slane %v2555, 5
  %v2573 = vsel %vm1695, %v2572, %v2571
  %v2574 = vrot.slane %v2556, 4
  %v2575 = vsel %vm1698, %v2574, %v2573
  %v2576 = vrot.slane %v2557, 3
  %v2577 = vsel %vm1701, %v2576, %v2575
  %v2578 = vrot.slane %v2558, 2
  %v2579 = vsel %vm1704, %v2578, %v2577
  %v2580 = vrot.slane %v2559, 1
  %v2581 = vsel %vm1707, %v2580, %v2579
  %2582 = vrot.lane.b32.xlu0 %v2581, 64
  %v2583 = vpop.permute.xlu0 %2582
  %2585 = vst.msk [vmem:[#allocation3 + $0x30] sm:$0xff] %vm1779, %v2583
  %v2586 = vld [vmem:[#allocation2 + $0x1b] sm:$0x1]
  %v2587 = vld [vmem:[#allocation2 + $0x3b] sm:$0x1]
  %v2588 = vld [vmem:[#allocation2 + $0x5b] sm:$0x1]
  %v2589 = vld [vmem:[#allocation2 + $0x7b] sm:$0x1]
  %v2590 = vld [vmem:[#allocation2 + $0x9b] sm:$0x1]
  %v2591 = vld [vmem:[#allocation2 + $0xbb] sm:$0x1]
  %v2592 = vld [vmem:[#allocation2 + $0xdb] sm:$0x1]
  %v2593 = vld [vmem:[#allocation2 + $0xfb] sm:$0x1]
  %v2602 = vrot.slane %v2587, 7
  %v2603 = vsel %vm1689, %v2602, %v2586
  %v2604 = vrot.slane %v2588, 6
  %v2605 = vsel %vm1692, %v2604, %v2603
  %v2606 = vrot.slane %v2589, 5
  %v2607 = vsel %vm1695, %v2606, %v2605
  %v2608 = vrot.slane %v2590, 4
  %v2609 = vsel %vm1698, %v2608, %v2607
  %v2610 = vrot.slane %v2591, 3
  %v2611 = vsel %vm1701, %v2610, %v2609
  %v2612 = vrot.slane %v2592, 2
  %v2613 = vsel %vm1704, %v2612, %v2611
  %v2614 = vrot.slane %v2593, 1
  %v2615 = vsel %vm1707, %v2614, %v2613
  %2616 = vrot.lane.b32.xlu0 %v2615, 96
  %v2617 = vpop.permute.xlu0 %2616
  %2619 = vst.msk [vmem:[#allocation3 + $0x30] sm:$0xff] %vm1814, %v2617
  %v2620 = vld [vmem:[#allocation2 + $0x1c] sm:$0x1]
  %v2621 = vld [vmem:[#allocation2 + $0x3c] sm:$0x1]
  %v2622 = vld [vmem:[#allocation2 + $0x5c] sm:$0x1]
  %v2623 = vld [vmem:[#allocation2 + $0x7c] sm:$0x1]
  %v2624 = vld [vmem:[#allocation2 + $0x9c] sm:$0x1]
  %v2625 = vld [vmem:[#allocation2 + $0xbc] sm:$0x1]
  %v2626 = vld [vmem:[#allocation2 + $0xdc] sm:$0x1]
  %v2627 = vld [vmem:[#allocation2 + $0xfc] sm:$0x1]
  %v2636 = vrot.slane %v2621, 7
  %v2637 = vsel %vm1689, %v2636, %v2620
  %v2638 = vrot.slane %v2622, 6
  %v2639 = vsel %vm1692, %v2638, %v2637
  %v2640 = vrot.slane %v2623, 5
  %v2641 = vsel %vm1695, %v2640, %v2639
  %v2642 = vrot.slane %v2624, 4
  %v2643 = vsel %vm1698, %v2642, %v2641
  %v2644 = vrot.slane %v2625, 3
  %v2645 = vsel %vm1701, %v2644, %v2643
  %v2646 = vrot.slane %v2626, 2
  %v2647 = vsel %vm1704, %v2646, %v2645
  %v2648 = vrot.slane %v2627, 1
  %v2649 = vsel %vm1707, %v2648, %v2647
  %2651 = vst.msk [vmem:[#allocation3 + $0x38] sm:$0xff] %vm1639, %v2649
  %v2652 = vld [vmem:[#allocation2 + $0x1d] sm:$0x1]
  %v2653 = vld [vmem:[#allocation2 + $0x3d] sm:$0x1]
  %v2654 = vld [vmem:[#allocation2 + $0x5d] sm:$0x1]
  %v2655 = vld [vmem:[#allocation2 + $0x7d] sm:$0x1]
  %v2656 = vld [vmem:[#allocation2 + $0x9d] sm:$0x1]
  %v2657 = vld [vmem:[#allocation2 + $0xbd] sm:$0x1]
  %v2658 = vld [vmem:[#allocation2 + $0xdd] sm:$0x1]
  %v2659 = vld [vmem:[#allocation2 + $0xfd] sm:$0x1]
  %v2668 = vrot.slane %v2653, 7
  %v2669 = vsel %vm1689, %v2668, %v2652
  %v2670 = vrot.slane %v2654, 6
  %v2671 = vsel %vm1692, %v2670, %v2669
  %v2672 = vrot.slane %v2655, 5
  %v2673 = vsel %vm1695, %v2672, %v2671
  %v2674 = vrot.slane %v2656, 4
  %v2675 = vsel %vm1698, %v2674, %v2673
  %v2676 = vrot.slane %v2657, 3
  %v2677 = vsel %vm1701, %v2676, %v2675
  %v2678 = vrot.slane %v2658, 2
  %v2679 = vsel %vm1704, %v2678, %v2677
  %v2680 = vrot.slane %v2659, 1
  %v2681 = vsel %vm1707, %v2680, %v2679
  %2682 = vrot.lane.b32.xlu0 %v2681, 32
  %v2683 = vpop.permute.xlu0 %2682
  %2685 = vst.msk [vmem:[#allocation3 + $0x38] sm:$0xff] %vm1744, %v2683
  %v2686 = vld [vmem:[#allocation2 + $0x1e] sm:$0x1]
  %v2687 = vld [vmem:[#allocation2 + $0x3e] sm:$0x1]
  %v2688 = vld [vmem:[#allocation2 + $0x5e] sm:$0x1]
  %v2689 = vld [vmem:[#allocation2 + $0x7e] sm:$0x1]
  %v2690 = vld [vmem:[#allocation2 + $0x9e] sm:$0x1]
  %v2691 = vld [vmem:[#allocation2 + $0xbe] sm:$0x1]
  %v2692 = vld [vmem:[#allocation2 + $0xde] sm:$0x1]
  %v2693 = vld [vmem:[#allocation2 + $0xfe] sm:$0x1]
  %v2702 = vrot.slane %v2687, 7
  %v2703 = vsel %vm1689, %v2702, %v2686
  %v2704 = vrot.slane %v2688, 6
  %v2705 = vsel %vm1692, %v2704, %v2703
  %v2706 = vrot.slane %v2689, 5
  %v2707 = vsel %vm1695, %v2706, %v2705
  %v2708 = vrot.slane %v2690, 4
  %v2709 = vsel %vm1698, %v2708, %v2707
  %v2710 = vrot.slane %v2691, 3
  %v2711 = vsel %vm1701, %v2710, %v2709
  %v2712 = vrot.slane %v2692, 2
  %v2713 = vsel %vm1704, %v2712, %v2711
  %v2714 = vrot.slane %v2693, 1
  %v2715 = vsel %vm1707, %v2714, %v2713
  %2716 = vrot.lane.b32.xlu0 %v2715, 64
  %v2717 = vpop.permute.xlu0 %2716
  %2719 = vst.msk [vmem:[#allocation3 + $0x38] sm:$0xff] %vm1779, %v2717
  %v2720 = vld [vmem:[#allocation2 + $0x1f] sm:$0x1]
  %v2721 = vld [vmem:[#allocation2 + $0x3f] sm:$0x1]
  %v2722 = vld [vmem:[#allocation2 + $0x5f] sm:$0x1]
  %v2723 = vld [vmem:[#allocation2 + $0x7f] sm:$0x1]
  %v2724 = vld [vmem:[#allocation2 + $0x9f] sm:$0x1]
  %v2725 = vld [vmem:[#allocation2 + $0xbf] sm:$0x1]
  %v2726 = vld [vmem:[#allocation2 + $0xdf] sm:$0x1]
  %v2727 = vld [vmem:[#allocation2 + $0xff] sm:$0x1]
  %v2736 = vrot.slane %v2721, 7
  %v2737 = vsel %vm1689, %v2736, %v2720
  %v2738 = vrot.slane %v2722, 6
  %v2739 = vsel %vm1692, %v2738, %v2737
  %v2740 = vrot.slane %v2723, 5
  %v2741 = vsel %vm1695, %v2740, %v2739
  %v2742 = vrot.slane %v2724, 4
  %v2743 = vsel %vm1698, %v2742, %v2741
  %v2744 = vrot.slane %v2725, 3
  %v2745 = vsel %vm1701, %v2744, %v2743
  %v2746 = vrot.slane %v2726, 2
  %v2747 = vsel %vm1704, %v2746, %v2745
  %v2748 = vrot.slane %v2727, 1
  %v2749 = vsel %vm1707, %v2748, %v2747
  %2750 = vrot.lane.b32.xlu0 %v2749, 96
  %v2751 = vpop.permute.xlu0 %2750
  %2753 = vst.msk [vmem:[#allocation3 + $0x38] sm:$0xff] %vm1814, %v2751
  %v2754 = vld [vmem:[#allocation3] sm:$0xff]
  %v2755 = vld [vmem:[#allocation3 + $0x8] sm:$0xff]
  %v2756 = vld [vmem:[#allocation3 + $0x10] sm:$0xff]
  %v2757 = vld [vmem:[#allocation3 + $0x18] sm:$0xff]
  %v2758 = vld [vmem:[#allocation3 + $0x20] sm:$0xff]
  %v2759 = vld [vmem:[#allocation3 + $0x28] sm:$0xff]
  %v2760 = vld [vmem:[#allocation3 + $0x30] sm:$0xff]
  %v2761 = vld [vmem:[#allocation3 + $0x38] sm:$0xff]
  %v2762 = vld [vmem:[%s3] ss:$4 sm:$0xff]
  %s2763 = scalar_lea.vmem %s3, 1
  %v2764 = vld [vmem:[%s2763] ss:$4 sm:$0xff]
  %s2765 = scalar_lea.vmem %s3, 2
  %v2766 = vld [vmem:[%s2765] ss:$4 sm:$0xff]
  %s2767 = scalar_lea.vmem %s3, 3
  %v2768 = vld [vmem:[%s2767] ss:$4 sm:$0xff]
  %2770 = vrot.lane.b32.xlu0 %v2761, 33
  %v2771 = vpop.permute.xlu0 %2770
  %2780 = vrot.lane.b32.xlu0 %v2754, 33
  %v2781 = vpop.permute.xlu0 %2780
  %2782 = vrot.lane.b32.xlu0 %v2755, 33
  %v2783 = vpop.permute.xlu0 %2782
  %2784 = vrot.lane.b32.xlu0 %v2756, 33
  %v2785 = vpop.permute.xlu0 %2784
  %2786 = vrot.lane.b32.xlu0 %v2757, 33
  %v2787 = vpop.permute.xlu0 %2786
  %2788 = vrot.lane.b32.xlu0 %v2758, 33
  %v2789 = vpop.permute.xlu0 %2788
  %2790 = vrot.lane.b32.xlu0 %v2759, 33
  %v2791 = vpop.permute.xlu0 %2790
  %2792 = vrot.lane.b32.xlu0 %v2760, 33
  %v2793 = vpop.permute.xlu0 %2792
  %vm2794 = vcmask 269312
  %v2795 = vsel %vm2794, %v2781, %v2783
  %v2796 = vsel %vm2794, %v2783, %v2785
  %v2797 = vsel %vm2794, %v2785, %v2787
  %v2798 = vsel %vm2794, %v2787, %v2789
  %v2799 = vsel %vm2794, %v2789, %v2791
  %v2800 = vsel %vm2794, %v2791, %v2793
  %v2801 = vsel %vm2794, %v2793, %v2771
  %v2810 = vsel %vm2794, %v2771, %v2781
  %v2811 = vmul.f32 %v2762, %v2766
  %v2813 = vlaneseq
  %v2814 = vshrl.u32 %v2813, 7
  %v2815 = vsub.s32 0, %v2814
  %v2816 = vrot.slane %v2811, %v2815
  %v2817 = vlaneseq
  %v2818 = vshrl.u32 %v2817, 7
  %v2819 = vsub.s32 1, %v2818
  %v2820 = vrot.slane %v2811, %v2819
  %v2821 = vlaneseq
  %v2822 = vshrl.u32 %v2821, 7
  %v2823 = vsub.s32 2, %v2822
  %v2824 = vrot.slane %v2811, %v2823
  %v2825 = vlaneseq
  %v2826 = vshrl.u32 %v2825, 7
  %v2827 = vsub.s32 3, %v2826
  %v2828 = vrot.slane %v2811, %v2827
  %v2829 = vlaneseq
  %v2830 = vshrl.u32 %v2829, 7
  %v2831 = vsub.s32 4, %v2830
  %v2832 = vrot.slane %v2811, %v2831
  %v2833 = vlaneseq
  %v2834 = vshrl.u32 %v2833, 7
  %v2835 = vsub.s32 5, %v2834
  %v2836 = vrot.slane %v2811, %v2835
  %v2837 = vlaneseq
  %v2838 = vshrl.u32 %v2837, 7
  %v2839 = vsub.s32 6, %v2838
  %v2840 = vrot.slane %v2811, %v2839
  %v2841 = vlaneseq
  %v2842 = vshrl.u32 %v2841, 7
  %v2843 = vsub.s32 7, %v2842
  %v2844 = vrot.slane %v2811, %v2843
  %v2853 = vmul.f32 %v2810, %v2816
  %v2854 = vmul.f32 %v2795, %v2820
  %v2855 = vmul.f32 %v2796, %v2824
  %v2856 = vmul.f32 %v2797, %v2828
  %v2857 = vmul.f32 %v2798, %v2832
  %v2858 = vmul.f32 %v2799, %v2836
  %v2859 = vmul.f32 %v2800, %v2840
  %v2860 = vmul.f32 %v2801, %v2844
  %2861 = vrot.lane.b32.xlu0 %v2761, 32
  %v2862 = vpop.permute.xlu0 %2861
  %2864 = vrot.lane.b32.xlu0 %v2754, 32
  %v2865 = vpop.permute.xlu0 %2864
  %2866 = vrot.lane.b32.xlu0 %v2755, 32
  %v2867 = vpop.permute.xlu0 %2866
  %2868 = vrot.lane.b32.xlu0 %v2756, 32
  %v2869 = vpop.permute.xlu0 %2868
  %2870 = vrot.lane.b32.xlu0 %v2757, 32
  %v2871 = vpop.permute.xlu0 %2870
  %2872 = vrot.lane.b32.xlu0 %v2758, 32
  %v2873 = vpop.permute.xlu0 %2872
  %2874 = vrot.lane.b32.xlu0 %v2759, 32
  %v2875 = vpop.permute.xlu0 %2874
  %2876 = vrot.lane.b32.xlu0 %v2760, 32
  %v2877 = vpop.permute.xlu0 %2876
  %v2878 = vsel %vm1639, %v2865, %v2867
  %v2879 = vsel %vm1639, %v2867, %v2869
  %v2880 = vsel %vm1639, %v2869, %v2871
  %v2881 = vsel %vm1639, %v2871, %v2873
  %v2882 = vsel %vm1639, %v2873, %v2875
  %v2883 = vsel %vm1639, %v2875, %v2877
  %v2884 = vsel %vm1639, %v2877, %v2862
  %v2893 = vsel %vm1639, %v2862, %v2865
  %v2895 = vlaneseq
  %v2896 = vshrl.u32 %v2895, 7
  %v2897 = vsub.s32 0, %v2896
  %v2898 = vrot.slane %v2762, %v2897
  %v2899 = vlaneseq
  %v2900 = vshrl.u32 %v2899, 7
  %v2901 = vsub.s32 1, %v2900
  %v2902 = vrot.slane %v2762, %v2901
  %v2903 = vlaneseq
  %v2904 = vshrl.u32 %v2903, 7
  %v2905 = vsub.s32 2, %v2904
  %v2906 = vrot.slane %v2762, %v2905
  %v2907 = vlaneseq
  %v2908 = vshrl.u32 %v2907, 7
  %v2909 = vsub.s32 3, %v2908
  %v2910 = vrot.slane %v2762, %v2909
  %v2911 = vlaneseq
  %v2912 = vshrl.u32 %v2911, 7
  %v2913 = vsub.s32 4, %v2912
  %v2914 = vrot.slane %v2762, %v2913
  %v2915 = vlaneseq
  %v2916 = vshrl.u32 %v2915, 7
  %v2917 = vsub.s32 5, %v2916
  %v2918 = vrot.slane %v2762, %v2917
  %v2919 = vlaneseq
  %v2920 = vshrl.u32 %v2919, 7
  %v2921 = vsub.s32 6, %v2920
  %v2922 = vrot.slane %v2762, %v2921
  %v2923 = vlaneseq
  %v2924 = vshrl.u32 %v2923, 7
  %v2925 = vsub.s32 7, %v2924
  %v2926 = vrot.slane %v2762, %v2925
  %v2935 = vmul.f32 %v2893, %v2898
  %v2936 = vmul.f32 %v2878, %v2902
  %v2937 = vmul.f32 %v2879, %v2906
  %v2938 = vmul.f32 %v2880, %v2910
  %v2939 = vmul.f32 %v2881, %v2914
  %v2940 = vmul.f32 %v2882, %v2918
  %v2941 = vmul.f32 %v2883, %v2922
  %v2942 = vmul.f32 %v2884, %v2926
  %2943 = vrot.lane.b32.xlu0 %v2761, 31
  %v2944 = vpop.permute.xlu0 %2943
  %2946 = vrot.lane.b32.xlu0 %v2754, 31
  %v2947 = vpop.permute.xlu0 %2946
  %2948 = vrot.lane.b32.xlu0 %v2755, 31
  %v2949 = vpop.permute.xlu0 %2948
  %2950 = vrot.lane.b32.xlu0 %v2756, 31
  %v2951 = vpop.permute.xlu0 %2950
  %2952 = vrot.lane.b32.xlu0 %v2757, 31
  %v2953 = vpop.permute.xlu0 %2952
  %2954 = vrot.lane.b32.xlu0 %v2758, 31
  %v2955 = vpop.permute.xlu0 %2954
  %2956 = vrot.lane.b32.xlu0 %v2759, 31
  %v2957 = vpop.permute.xlu0 %2956
  %2958 = vrot.lane.b32.xlu0 %v2760, 31
  %v2959 = vpop.permute.xlu0 %2958
  %vm2960 = vcmask 252928
  %v2961 = vsel %vm2960, %v2947, %v2949
  %v2962 = vsel %vm2960, %v2949, %v2951
  %v2963 = vsel %vm2960, %v2951, %v2953
  %v2964 = vsel %vm2960, %v2953, %v2955
  %v2965 = vsel %vm2960, %v2955, %v2957
  %v2966 = vsel %vm2960, %v2957, %v2959
  %v2967 = vsel %vm2960, %v2959, %v2944
  %v2976 = vsel %vm2960, %v2944, %v2947
  %v2977 = vmul.f32 %v2762, %v2768
  %v2979 = vlaneseq
  %v2980 = vshrl.u32 %v2979, 7
  %v2981 = vsub.s32 0, %v2980
  %v2982 = vrot.slane %v2977, %v2981
  %v2983 = vlaneseq
  %v2984 = vshrl.u32 %v2983, 7
  %v2985 = vsub.s32 1, %v2984
  %v2986 = vrot.slane %v2977, %v2985
  %v2987 = vlaneseq
  %v2988 = vshrl.u32 %v2987, 7
  %v2989 = vsub.s32 2, %v2988
  %v2990 = vrot.slane %v2977, %v2989
  %v2991 = vlaneseq
  %v2992 = vshrl.u32 %v2991, 7
  %v2993 = vsub.s32 3, %v2992
  %v2994 = vrot.slane %v2977, %v2993
  %v2995 = vlaneseq
  %v2996 = vshrl.u32 %v2995, 7
  %v2997 = vsub.s32 4, %v2996
  %v2998 = vrot.slane %v2977, %v2997
  %v2999 = vlaneseq
  %v3000 = vshrl.u32 %v2999, 7
  %v3001 = vsub.s32 5, %v3000
  %v3002 = vrot.slane %v2977, %v3001
  %v3003 = vlaneseq
  %v3004 = vshrl.u32 %v3003, 7
  %v3005 = vsub.s32 6, %v3004
  %v3006 = vrot.slane %v2977, %v3005
  %v3007 = vlaneseq
  %v3008 = vshrl.u32 %v3007, 7
  %v3009 = vsub.s32 7, %v3008
  %v3010 = vrot.slane %v2977, %v3009
  %v3019 = vmul.f32 %v2976, %v2982
  %v3020 = vmul.f32 %v2961, %v2986
  %v3021 = vmul.f32 %v2962, %v2990
  %v3022 = vmul.f32 %v2963, %v2994
  %v3023 = vmul.f32 %v2964, %v2998
  %v3024 = vmul.f32 %v2965, %v3002
  %v3025 = vmul.f32 %v2966, %v3006
  %v3026 = vmul.f32 %v2967, %v3010
  %3027 = vrot.lane.b32.xlu0 %v2761, 1
  %v3028 = vpop.permute.xlu0 %3027
  %3030 = vrot.lane.b32.xlu0 %v2754, 1
  %v3031 = vpop.permute.xlu0 %3030
  %3032 = vrot.lane.b32.xlu0 %v2755, 1
  %v3033 = vpop.permute.xlu0 %3032
  %3034 = vrot.lane.b32.xlu0 %v2756, 1
  %v3035 = vpop.permute.xlu0 %3034
  %3036 = vrot.lane.b32.xlu0 %v2757, 1
  %v3037 = vpop.permute.xlu0 %3036
  %3038 = vrot.lane.b32.xlu0 %v2758, 1
  %v3039 = vpop.permute.xlu0 %3038
  %3040 = vrot.lane.b32.xlu0 %v2759, 1
  %v3041 = vpop.permute.xlu0 %3040
  %3042 = vrot.lane.b32.xlu0 %v2760, 1
  %v3043 = vpop.permute.xlu0 %3042
  %vm3044 = vcmask 7168
  %v3045 = vsel %vm3044, %v3031, %v3033
  %v3046 = vsel %vm3044, %v3033, %v3035
  %v3047 = vsel %vm3044, %v3035, %v3037
  %v3048 = vsel %vm3044, %v3037, %v3039
  %v3049 = vsel %vm3044, %v3039, %v3041
  %v3050 = vsel %vm3044, %v3041, %v3043
  %v3051 = vsel %vm3044, %v3043, %v3028
  %v3060 = vsel %vm3044, %v3028, %v3031
  %v3062 = vlaneseq
  %v3063 = vshrl.u32 %v3062, 7
  %v3064 = vsub.s32 0, %v3063
  %v3065 = vrot.slane %v2766, %v3064
  %v3066 = vlaneseq
  %v3067 = vshrl.u32 %v3066, 7
  %v3068 = vsub.s32 1, %v3067
  %v3069 = vrot.slane %v2766, %v3068
  %v3070 = vlaneseq
  %v3071 = vshrl.u32 %v3070, 7
  %v3072 = vsub.s32 2, %v3071
  %v3073 = vrot.slane %v2766, %v3072
  %v3074 = vlaneseq
  %v3075 = vshrl.u32 %v3074, 7
  %v3076 = vsub.s32 3, %v3075
  %v3077 = vrot.slane %v2766, %v3076
  %v3078 = vlaneseq
  %v3079 = vshrl.u32 %v3078, 7
  %v3080 = vsub.s32 4, %v3079
  %v3081 = vrot.slane %v2766, %v3080
  %v3082 = vlaneseq
  %v3083 = vshrl.u32 %v3082, 7
  %v3084 = vsub.s32 5, %v3083
  %v3085 = vrot.slane %v2766, %v3084
  %v3086 = vlaneseq
  %v3087 = vshrl.u32 %v3086, 7
  %v3088 = vsub.s32 6, %v3087
  %v3089 = vrot.slane %v2766, %v3088
  %v3090 = vlaneseq
  %v3091 = vshrl.u32 %v3090, 7
  %v3092 = vsub.s32 7, %v3091
  %v3093 = vrot.slane %v2766, %v3092
  %v3102 = vmul.f32 %v3060, %v3065
  %v3103 = vmul.f32 %v3045, %v3069
  %v3104 = vmul.f32 %v3046, %v3073
  %v3105 = vmul.f32 %v3047, %v3077
  %v3106 = vmul.f32 %v3048, %v3081
  %v3107 = vmul.f32 %v3049, %v3085
  %v3108 = vmul.f32 %v3050, %v3089
  %v3109 = vmul.f32 %v3051, %v3093
  %3110 = vrot.lane.b32.xlu0 %v2754, 127
  %v3111 = vpop.permute.xlu0 %3110
  %3112 = vrot.lane.b32.xlu0 %v2755, 127
  %v3113 = vpop.permute.xlu0 %3112
  %3114 = vrot.lane.b32.xlu0 %v2756, 127
  %v3115 = vpop.permute.xlu0 %3114
  %3116 = vrot.lane.b32.xlu0 %v2757, 127
  %v3117 = vpop.permute.xlu0 %3116
  %3118 = vrot.lane.b32.xlu0 %v2758, 127
  %v3119 = vpop.permute.xlu0 %3118
  %3120 = vrot.lane.b32.xlu0 %v2759, 127
  %v3121 = vpop.permute.xlu0 %3120
  %3122 = vrot.lane.b32.xlu0 %v2760, 127
  %v3123 = vpop.permute.xlu0 %3122
  %3124 = vrot.lane.b32.xlu0 %v2761, 127
  %v3125 = vpop.permute.xlu0 %3124
  %vm3126 = vcmask 1039360
  %v3127 = vsel %vm3126, %v3111, %v3113
  %v3128 = vsel %vm3126, %v3113, %v3115
  %v3129 = vsel %vm3126, %v3115, %v3117
  %v3130 = vsel %vm3126, %v3117, %v3119
  %v3131 = vsel %vm3126, %v3119, %v3121
  %v3132 = vsel %vm3126, %v3121, %v3123
  %v3133 = vsel %vm3126, %v3123, %v3125
  %v3143 = vsel %vm3126, %v3125, %v3111
  %v3145 = vlaneseq
  %v3146 = vshrl.u32 %v3145, 7
  %v3147 = vsub.s32 0, %v3146
  %v3148 = vrot.slane %v2768, %v3147
  %v3149 = vlaneseq
  %v3150 = vshrl.u32 %v3149, 7
  %v3151 = vsub.s32 1, %v3150
  %v3152 = vrot.slane %v2768, %v3151
  %v3153 = vlaneseq
  %v3154 = vshrl.u32 %v3153, 7
  %v3155 = vsub.s32 2, %v3154
  %v3156 = vrot.slane %v2768, %v3155
  %v3157 = vlaneseq
  %v3158 = vshrl.u32 %v3157, 7
  %v3159 = vsub.s32 3, %v3158
  %v3160 = vrot.slane %v2768, %v3159
  %v3161 = vlaneseq
  %v3162 = vshrl.u32 %v3161, 7
  %v3163 = vsub.s32 4, %v3162
  %v3164 = vrot.slane %v2768, %v3163
  %v3165 = vlaneseq
  %v3166 = vshrl.u32 %v3165, 7
  %v3167 = vsub.s32 5, %v3166
  %v3168 = vrot.slane %v2768, %v3167
  %v3169 = vlaneseq
  %v3170 = vshrl.u32 %v3169, 7
  %v3171 = vsub.s32 6, %v3170
  %v3172 = vrot.slane %v2768, %v3171
  %v3173 = vlaneseq
  %v3174 = vshrl.u32 %v3173, 7
  %v3175 = vsub.s32 7, %v3174
  %v3176 = vrot.slane %v2768, %v3175
  %v3185 = vmul.f32 %v3127, %v3148
  %v3186 = vmul.f32 %v3128, %v3152
  %v3187 = vmul.f32 %v3129, %v3156
  %v3188 = vmul.f32 %v3130, %v3160
  %v3189 = vmul.f32 %v3131, %v3164
  %v3190 = vmul.f32 %v3132, %v3168
  %v3191 = vmul.f32 %v3133, %v3172
  %v3192 = vmul.f32 %v3143, %v3176
  %3193 = vrot.lane.b32.xlu0 %v2754, 97
  %v3194 = vpop.permute.xlu0 %3193
  %3195 = vrot.lane.b32.xlu0 %v2755, 97
  %v3196 = vpop.permute.xlu0 %3195
  %3197 = vrot.lane.b32.xlu0 %v2756, 97
  %v3198 = vpop.permute.xlu0 %3197
  %3199 = vrot.lane.b32.xlu0 %v2757, 97
  %v3200 = vpop.permute.xlu0 %3199
  %3201 = vrot.lane.b32.xlu0 %v2758, 97
  %v3202 = vpop.permute.xlu0 %3201
  %3203 = vrot.lane.b32.xlu0 %v2759, 97
  %v3204 = vpop.permute.xlu0 %3203
  %3205 = vrot.lane.b32.xlu0 %v2760, 97
  %v3206 = vpop.permute.xlu0 %3205
  %3207 = vrot.lane.b32.xlu0 %v2761, 97
  %v3208 = vpop.permute.xlu0 %3207
  %vm3209 = vcmask 793600
  %v3210 = vsel %vm3209, %v3194, %v3196
  %v3211 = vsel %vm3209, %v3196, %v3198
  %v3212 = vsel %vm3209, %v3198, %v3200
  %v3213 = vsel %vm3209, %v3200, %v3202
  %v3214 = vsel %vm3209, %v3202, %v3204
  %v3215 = vsel %vm3209, %v3204, %v3206
  %v3216 = vsel %vm3209, %v3206, %v3208
  %v3226 = vsel %vm3209, %v3208, %v3194
  %v3227 = vmul.f32 %v2764, %v2766
  %v3229 = vlaneseq
  %v3230 = vshrl.u32 %v3229, 7
  %v3231 = vsub.s32 0, %v3230
  %v3232 = vrot.slane %v3227, %v3231
  %v3233 = vlaneseq
  %v3234 = vshrl.u32 %v3233, 7
  %v3235 = vsub.s32 1, %v3234
  %v3236 = vrot.slane %v3227, %v3235
  %v3237 = vlaneseq
  %v3238 = vshrl.u32 %v3237, 7
  %v3239 = vsub.s32 2, %v3238
  %v3240 = vrot.slane %v3227, %v3239
  %v3241 = vlaneseq
  %v3242 = vshrl.u32 %v3241, 7
  %v3243 = vsub.s32 3, %v3242
  %v3244 = vrot.slane %v3227, %v3243
  %v3245 = vlaneseq
  %v3246 = vshrl.u32 %v3245, 7
  %v3247 = vsub.s32 4, %v3246
  %v3248 = vrot.slane %v3227, %v3247
  %v3249 = vlaneseq
  %v3250 = vshrl.u32 %v3249, 7
  %v3251 = vsub.s32 5, %v3250
  %v3252 = vrot.slane %v3227, %v3251
  %v3253 = vlaneseq
  %v3254 = vshrl.u32 %v3253, 7
  %v3255 = vsub.s32 6, %v3254
  %v3256 = vrot.slane %v3227, %v3255
  %v3257 = vlaneseq
  %v3258 = vshrl.u32 %v3257, 7
  %v3259 = vsub.s32 7, %v3258
  %v3260 = vrot.slane %v3227, %v3259
  %v3269 = vmul.f32 %v3210, %v3232
  %v3270 = vmul.f32 %v3211, %v3236
  %v3271 = vmul.f32 %v3212, %v3240
  %v3272 = vmul.f32 %v3213, %v3244
  %v3273 = vmul.f32 %v3214, %v3248
  %v3274 = vmul.f32 %v3215, %v3252
  %v3275 = vmul.f32 %v3216, %v3256
  %v3276 = vmul.f32 %v3226, %v3260
  %3277 = vrot.lane.b32.xlu0 %v2754, 96
  %v3278 = vpop.permute.xlu0 %3277
  %3279 = vrot.lane.b32.xlu0 %v2755, 96
  %v3280 = vpop.permute.xlu0 %3279
  %3281 = vrot.lane.b32.xlu0 %v2756, 96
  %v3282 = vpop.permute.xlu0 %3281
  %3283 = vrot.lane.b32.xlu0 %v2757, 96
  %v3284 = vpop.permute.xlu0 %3283
  %3285 = vrot.lane.b32.xlu0 %v2758, 96
  %v3286 = vpop.permute.xlu0 %3285
  %3287 = vrot.lane.b32.xlu0 %v2759, 96
  %v3288 = vpop.permute.xlu0 %3287
  %3289 = vrot.lane.b32.xlu0 %v2760, 96
  %v3290 = vpop.permute.xlu0 %3289
  %3291 = vrot.lane.b32.xlu0 %v2761, 96
  %v3292 = vpop.permute.xlu0 %3291
  %vm3293 = vcmask 785408
  %v3294 = vsel %vm3293, %v3278, %v3280
  %v3295 = vsel %vm3293, %v3280, %v3282
  %v3296 = vsel %vm3293, %v3282, %v3284
  %v3297 = vsel %vm3293, %v3284, %v3286
  %v3298 = vsel %vm3293, %v3286, %v3288
  %v3299 = vsel %vm3293, %v3288, %v3290
  %v3300 = vsel %vm3293, %v3290, %v3292
  %v3310 = vsel %vm3293, %v3292, %v3278
  %v3312 = vlaneseq
  %v3313 = vshrl.u32 %v3312, 7
  %v3314 = vsub.s32 0, %v3313
  %v3315 = vrot.slane %v2764, %v3314
  %v3316 = vlaneseq
  %v3317 = vshrl.u32 %v3316, 7
  %v3318 = vsub.s32 1, %v3317
  %v3319 = vrot.slane %v2764, %v3318
  %v3320 = vlaneseq
  %v3321 = vshrl.u32 %v3320, 7
  %v3322 = vsub.s32 2, %v3321
  %v3323 = vrot.slane %v2764, %v3322
  %v3324 = vlaneseq
  %v3325 = vshrl.u32 %v3324, 7
  %v3326 = vsub.s32 3, %v3325
  %v3327 = vrot.slane %v2764, %v3326
  %v3328 = vlaneseq
  %v3329 = vshrl.u32 %v3328, 7
  %v3330 = vsub.s32 4, %v3329
  %v3331 = vrot.slane %v2764, %v3330
  %v3332 = vlaneseq
  %v3333 = vshrl.u32 %v3332, 7
  %v3334 = vsub.s32 5, %v3333
  %v3335 = vrot.slane %v2764, %v3334
  %v3336 = vlaneseq
  %v3337 = vshrl.u32 %v3336, 7
  %v3338 = vsub.s32 6, %v3337
  %v3339 = vrot.slane %v2764, %v3338
  %v3340 = vlaneseq
  %v3341 = vshrl.u32 %v3340, 7
  %v3342 = vsub.s32 7, %v3341
  %v3343 = vrot.slane %v2764, %v3342
  %v3352 = vmul.f32 %v3294, %v3315
  %v3353 = vmul.f32 %v3295, %v3319
  %v3354 = vmul.f32 %v3296, %v3323
  %v3355 = vmul.f32 %v3297, %v3327
  %v3356 = vmul.f32 %v3298, %v3331
  %v3357 = vmul.f32 %v3299, %v3335
  %v3358 = vmul.f32 %v3300, %v3339
  %v3359 = vmul.f32 %v3310, %v3343
  %3360 = vrot.lane.b32.xlu0 %v2754, 95
  %v3361 = vpop.permute.xlu0 %3360
  %3362 = vrot.lane.b32.xlu0 %v2755, 95
  %v3363 = vpop.permute.xlu0 %3362
  %3364 = vrot.lane.b32.xlu0 %v2756, 95
  %v3365 = vpop.permute.xlu0 %3364
  %3366 = vrot.lane.b32.xlu0 %v2757, 95
  %v3367 = vpop.permute.xlu0 %3366
  %3368 = vrot.lane.b32.xlu0 %v2758, 95
  %v3369 = vpop.permute.xlu0 %3368
  %3370 = vrot.lane.b32.xlu0 %v2759, 95
  %v3371 = vpop.permute.xlu0 %3370
  %3372 = vrot.lane.b32.xlu0 %v2760, 95
  %v3373 = vpop.permute.xlu0 %3372
  %3374 = vrot.lane.b32.xlu0 %v2761, 95
  %v3375 = vpop.permute.xlu0 %3374
  %vm3376 = vcmask 777216
  %v3377 = vsel %vm3376, %v3361, %v3363
  %v3378 = vsel %vm3376, %v3363, %v3365
  %v3379 = vsel %vm3376, %v3365, %v3367
  %v3380 = vsel %vm3376, %v3367, %v3369
  %v3381 = vsel %vm3376, %v3369, %v3371
  %v3382 = vsel %vm3376, %v3371, %v3373
  %v3383 = vsel %vm3376, %v3373, %v3375
  %v3393 = vsel %vm3376, %v3375, %v3361
  %v3394 = vmul.f32 %v2764, %v2768
  %v3396 = vlaneseq
  %v3397 = vshrl.u32 %v3396, 7
  %v3398 = vsub.s32 0, %v3397
  %v3399 = vrot.slane %v3394, %v3398
  %v3400 = vlaneseq
  %v3401 = vshrl.u32 %v3400, 7
  %v3402 = vsub.s32 1, %v3401
  %v3403 = vrot.slane %v3394, %v3402
  %v3404 = vlaneseq
  %v3405 = vshrl.u32 %v3404, 7
  %v3406 = vsub.s32 2, %v3405
  %v3407 = vrot.slane %v3394, %v3406
  %v3408 = vlaneseq
  %v3409 = vshrl.u32 %v3408, 7
  %v3410 = vsub.s32 3, %v3409
  %v3411 = vrot.slane %v3394, %v3410
  %v3412 = vlaneseq
  %v3413 = vshrl.u32 %v3412, 7
  %v3414 = vsub.s32 4, %v3413
  %v3415 = vrot.slane %v3394, %v3414
  %v3416 = vlaneseq
  %v3417 = vshrl.u32 %v3416, 7
  %v3418 = vsub.s32 5, %v3417
  %v3419 = vrot.slane %v3394, %v3418
  %v3420 = vlaneseq
  %v3421 = vshrl.u32 %v3420, 7
  %v3422 = vsub.s32 6, %v3421
  %v3423 = vrot.slane %v3394, %v3422
  %v3424 = vlaneseq
  %v3425 = vshrl.u32 %v3424, 7
  %v3426 = vsub.s32 7, %v3425
  %v3427 = vrot.slane %v3394, %v3426
  %v3436 = vmul.f32 %v3377, %v3399
  %v3437 = vmul.f32 %v3378, %v3403
  %v3438 = vmul.f32 %v3379, %v3407
  %v3439 = vmul.f32 %v3380, %v3411
  %v3440 = vmul.f32 %v3381, %v3415
  %v3441 = vmul.f32 %v3382, %v3419
  %v3442 = vmul.f32 %v3383, %v3423
  %v3443 = vmul.f32 %v3393, %v3427
  %v3444 = vld [vmem:[%s5] sm:$0xff]
  %v3445 = vld [vmem:[%s6] sm:$0xff]
  %3447 = vset.pattern.permute.xlu0 0
  %3448 = vperm.xlu0 %3447, %v3445
  %v3449 = vpop.permute.xlu0 %3448
  %vm3451 = vcmask 588800
  %v3453 = vsel %vm3451, %v3444, 0
  %3455 = vmatprep.subr.mxu0 %v2854
  %3456 = vmatpush1.msra.mxu0 %v2853
  %3457 = vmatprep.subr.mxu0 %v2936
  %3458 = vmatpush1.msra.mxu0 %v2935
  %3459 = vmatprep.subr.mxu0 %v3020
  %3460 = vmatpush1.msra.mxu0 %v3019
  %3461 = vmatprep.subr.mxu0 %v3103
  %3462 = vmatpush1.msra.mxu0 %v3102
  %3463 = vmatprep.subr.mxu0 %v2755
  %3464 = vmatpush1.msra.mxu0 %v2754
  %3465 = vmatprep.subr.mxu0 %v3186
  %3466 = vmatpush1.msra.mxu0 %v3185
  %3467 = vmatprep.subr.mxu0 %v3270
  %3468 = vmatpush1.msra.mxu0 %v3269
  %3469 = vmatprep.subr.mxu0 %v3353
  %3470 = vmatpush1.msra.mxu0 %v3352
  %3471 = vmatprep.subr.mxu0 %v3437
  %3472 = vmatpush1.msra.mxu0 %v3436
  %3473 = vmatprep.subr.mxu0 0.0
  %3474 = vmatpush1.msra.mxu0 0.0
  %3475 = vmatprep.subr.mxu0 0.0
  %3476 = vmatpush1.msra.mxu0 0.0
  %3477 = vmatprep.subr.mxu0 0.0
  %3478 = vmatpush1.msra.mxu0 0.0
  %3479 = vmatprep.subr.mxu0 0.0
  %3480 = vmatpush1.msra.mxu0 0.0
  %3481 = vmatprep.subr.mxu0 0.0
  %3482 = vmatpush1.msra.mxu0 0.0
  %3483 = vmatprep.subr.mxu0 0.0
  %3484 = vmatpush1.msra.mxu0 0.0
  %3485 = vmatprep.subr.mxu0 0.0
  %3486 = vmatpush1.msra.mxu0 0.0
  %3487 = vmatprep.subr.mxu0 0.0
  %3488 = vmatpush1.msra.mxu0 0.0
  %3489 = vmatprep.subr.mxu0 0.0
  %3490 = vmatpush1.msra.mxu0 0.0
  %3491 = vmatprep.subr.mxu0 0.0
  %3492 = vmatpush1.msra.mxu0 0.0
  %3493 = vmatprep.subr.mxu0 0.0
  %3494 = vmatpush1.msra.mxu0 0.0
  %3495 = vmatprep.subr.mxu0 0.0
  %3496 = vmatpush1.msra.mxu0 0.0
  %3497 = vmatprep.subr.mxu0 0.0
  %3498 = vmatpush1.msra.mxu0 0.0
  %3499 = vmatprep.subr.mxu0 0.0
  %3500 = vmatpush1.msra.mxu0 0.0
  %3501 = vmatprep.subr.mxu0 0.0
  %3502 = vmatpush1.msra.mxu0 0.0
  %3503 = vmatprep.subr.mxu0 0.0
  %3504 = vmatpush1.msra.mxu0 0.0
  %3505 = vmatprep.subr.mxu0 0.0
  %3506 = vmatpush1.msra.mxu0 0.0
  %3507 = vmatprep.subr.mxu0 0.0
  %3508 = vmatpush1.msra.mxu0 0.0
  %3509 = vmatprep.subr.mxu0 0.0
  %3510 = vmatpush1.msra.mxu0 0.0
  %3511 = vmatprep.subr.mxu0 0.0
  %3512 = vmatpush1.msra.mxu0 0.0
  %3513 = vmatprep.subr.mxu0 0.0
  %3514 = vmatpush1.msra.mxu0 0.0
  %3515 = vmatprep.subr.mxu0 0.0
  %3516 = vmatpush1.msra.mxu0 0.0
  %3517 = vmatprep.subr.mxu0 0.0
  %3518 = vmatpush1.msra.mxu0 0.0
  %3519 = vmatprep.mubr.f32.mxu0 0.0
  %3520 = vmatmul.mubr.f32.gmra.mrb[0].mxu0 %v3453
  %v3521 = vpop.f32.mrb[0].mxu0
  %v3522 = vadd.f32 %v3449, %v3521
  %v3523 = vpop.f32.mrb[0].mxu0
  %v3524 = vadd.f32 %v3449, %v3523
  %3525 = vdwg.mxu0
  %3526 = vmatprep.subr.mxu0 %v2856
  %3527 = vmatpush1.msra.mxu0 %v2855
  %3528 = vmatprep.subr.mxu0 %v2938
  %3529 = vmatpush1.msra.mxu0 %v2937
  %3530 = vmatprep.subr.mxu0 %v3022
  %3531 = vmatpush1.msra.mxu0 %v3021
  %3532 = vmatprep.subr.mxu0 %v3105
  %3533 = vmatpush1.msra.mxu0 %v3104
  %3534 = vmatprep.subr.mxu0 %v2757
  %3535 = vmatpush1.msra.mxu0 %v2756
  %3536 = vmatprep.subr.mxu0 %v3188
  %3537 = vmatpush1.msra.mxu0 %v3187
  %3538 = vmatprep.subr.mxu0 %v3272
  %3539 = vmatpush1.msra.mxu0 %v3271
  %3540 = vmatprep.subr.mxu0 %v3355
  %3541 = vmatpush1.msra.mxu0 %v3354
  %3542 = vmatprep.subr.mxu0 %v3439
  %3543 = vmatpush1.msra.mxu0 %v3438
  %3544 = vmatprep.subr.mxu0 0.0
  %3545 = vmatpush1.msra.mxu0 0.0
  %3546 = vmatprep.subr.mxu0 0.0
  %3547 = vmatpush1.msra.mxu0 0.0
  %3548 = vmatprep.subr.mxu0 0.0
  %3549 = vmatpush1.msra.mxu0 0.0
  %3550 = vmatprep.subr.mxu0 0.0
  %3551 = vmatpush1.msra.mxu0 0.0
  %3552 = vmatprep.subr.mxu0 0.0
  %3553 = vmatpush1.msra.mxu0 0.0
  %3554 = vmatprep.subr.mxu0 0.0
  %3555 = vmatpush1.msra.mxu0 0.0
  %3556 = vmatprep.subr.mxu0 0.0
  %3557 = vmatpush1.msra.mxu0 0.0
  %3558 = vmatprep.subr.mxu0 0.0
  %3559 = vmatpush1.msra.mxu0 0.0
  %3560 = vmatprep.subr.mxu0 0.0
  %3561 = vmatpush1.msra.mxu0 0.0
  %3562 = vmatprep.subr.mxu0 0.0
  %3563 = vmatpush1.msra.mxu0 0.0
  %3564 = vmatprep.subr.mxu0 0.0
  %3565 = vmatpush1.msra.mxu0 0.0
  %3566 = vmatprep.subr.mxu0 0.0
  %3567 = vmatpush1.msra.mxu0 0.0
  %3568 = vmatprep.subr.mxu0 0.0
  %3569 = vmatpush1.msra.mxu0 0.0
  %3570 = vmatprep.subr.mxu0 0.0
  %3571 = vmatpush1.msra.mxu0 0.0
  %3572 = vmatprep.subr.mxu0 0.0
  %3573 = vmatpush1.msra.mxu0 0.0
  %3574 = vmatprep.subr.mxu0 0.0
  %3575 = vmatpush1.msra.mxu0 0.0
  %3576 = vmatprep.subr.mxu0 0.0
  %3577 = vmatpush1.msra.mxu0 0.0
  %3578 = vmatprep.subr.mxu0 0.0
  %3579 = vmatpush1.msra.mxu0 0.0
  %3580 = vmatprep.subr.mxu0 0.0
  %3581 = vmatpush1.msra.mxu0 0.0
  %3582 = vmatprep.subr.mxu0 0.0
  %3583 = vmatpush1.msra.mxu0 0.0
  %3584 = vmatprep.subr.mxu0 0.0
  %3585 = vmatpush1.msra.mxu0 0.0
  %3586 = vmatprep.subr.mxu0 0.0
  %3587 = vmatpush1.msra.mxu0 0.0
  %3588 = vmatprep.subr.mxu0 0.0
  %3589 = vmatpush1.msra.mxu0 0.0
  %3590 = vmatprep.mubr.f32.mxu0 0.0
  %3591 = vmatmul.mubr.f32.gmra.mrb[0].mxu0 %v3453
  %v3592 = vpop.f32.mrb[0].mxu0
  %v3593 = vadd.f32 %v3449, %v3592
  %v3594 = vpop.f32.mrb[0].mxu0
  %v3595 = vadd.f32 %v3449, %v3594
  %3596 = vdwg.mxu0
  %3597 = vmatprep.subr.mxu0 %v2858
  %3598 = vmatpush1.msra.mxu0 %v2857
  %3599 = vmatprep.subr.mxu0 %v2940
  %3600 = vmatpush1.msra.mxu0 %v2939
  %3601 = vmatprep.subr.mxu0 %v3024
  %3602 = vmatpush1.msra.mxu0 %v3023
  %3603 = vmatprep.subr.mxu0 %v3107
  %3604 = vmatpush1.msra.mxu0 %v3106
  %3605 = vmatprep.subr.mxu0 %v2759
  %3606 = vmatpush1.msra.mxu0 %v2758
  %3607 = vmatprep.subr.mxu0 %v3190
  %3608 = vmatpush1.msra.mxu0 %v3189
  %3609 = vmatprep.subr.mxu0 %v3274
  %3610 = vmatpush1.msra.mxu0 %v3273
  %3611 = vmatprep.subr.mxu0 %v3357
  %3612 = vmatpush1.msra.mxu0 %v3356
  %3613 = vmatprep.subr.mxu0 %v3441
  %3614 = vmatpush1.msra.mxu0 %v3440
  %3615 = vmatprep.subr.mxu0 0.0
  %3616 = vmatpush1.msra.mxu0 0.0
  %3617 = vmatprep.subr.mxu0 0.0
  %3618 = vmatpush1.msra.mxu0 0.0
  %3619 = vmatprep.subr.mxu0 0.0
  %3620 = vmatpush1.msra.mxu0 0.0
  %3621 = vmatprep.subr.mxu0 0.0
  %3622 = vmatpush1.msra.mxu0 0.0
  %3623 = vmatprep.subr.mxu0 0.0
  %3624 = vmatpush1.msra.mxu0 0.0
  %3625 = vmatprep.subr.mxu0 0.0
  %3626 = vmatpush1.msra.mxu0 0.0
  %3627 = vmatprep.subr.mxu0 0.0
  %3628 = vmatpush1.msra.mxu0 0.0
  %3629 = vmatprep.subr.mxu0 0.0
  %3630 = vmatpush1.msra.mxu0 0.0
  %3631 = vmatprep.subr.mxu0 0.0
  %3632 = vmatpush1.msra.mxu0 0.0
  %3633 = vmatprep.subr.mxu0 0.0
  %3634 = vmatpush1.msra.mxu0 0.0
  %3635 = vmatprep.subr.mxu0 0.0
  %3636 = vmatpush1.msra.mxu0 0.0
  %3637 = vmatprep.subr.mxu0 0.0
  %3638 = vmatpush1.msra.mxu0 0.0
  %3639 = vmatprep.subr.mxu0 0.0
  %3640 = vmatpush1.msra.mxu0 0.0
  %3641 = vmatprep.subr.mxu0 0.0
  %3642 = vmatpush1.msra.mxu0 0.0
  %3643 = vmatprep.subr.mxu0 0.0
  %3644 = vmatpush1.msra.mxu0 0.0
  %3645 = vmatprep.subr.mxu0 0.0
  %3646 = vmatpush1.msra.mxu0 0.0
  %3647 = vmatprep.subr.mxu0 0.0
  %3648 = vmatpush1.msra.mxu0 0.0
  %3649 = vmatprep.subr.mxu0 0.0
  %3650 = vmatpush1.msra.mxu0 0.0
  %3651 = vmatprep.subr.mxu0 0.0
  %3652 = vmatpush1.msra.mxu0 0.0
  %3653 = vmatprep.subr.mxu0 0.0
  %3654 = vmatpush1.msra.mxu0 0.0
  %3655 = vmatprep.subr.mxu0 0.0
  %3656 = vmatpush1.msra.mxu0 0.0
  %3657 = vmatprep.subr.mxu0 0.0
  %3658 = vmatpush1.msra.mxu0 0.0
  %3659 = vmatprep.subr.mxu0 0.0
  %3660 = vmatpush1.msra.mxu0 0.0
  %3661 = vmatprep.mubr.f32.mxu0 0.0
  %3662 = vmatmul.mubr.f32.gmra.mrb[0].mxu0 %v3453
  %v3663 = vpop.f32.mrb[0].mxu0
  %v3664 = vadd.f32 %v3449, %v3663
  %v3665 = vpop.f32.mrb[0].mxu0
  %v3666 = vadd.f32 %v3449, %v3665
  %3667 = vdwg.mxu0
  %3668 = vmatprep.subr.mxu0 %v2860
  %3669 = vmatpush1.msra.mxu0 %v2859
  %3670 = vmatprep.subr.mxu0 %v2942
  %3671 = vmatpush1.msra.mxu0 %v2941
  %3672 = vmatprep.subr.mxu0 %v3026
  %3673 = vmatpush1.msra.mxu0 %v3025
  %3674 = vmatprep.subr.mxu0 %v3109
  %3675 = vmatpush1.msra.mxu0 %v3108
  %3676 = vmatprep.subr.mxu0 %v2761
  %3677 = vmatpush1.msra.mxu0 %v2760
  %3678 = vmatprep.subr.mxu0 %v3192
  %3679 = vmatpush1.msra.mxu0 %v3191
  %3680 = vmatprep.subr.mxu0 %v3276
  %3681 = vmatpush1.msra.mxu0 %v3275
  %3682 = vmatprep.subr.mxu0 %v3359
  %3683 = vmatpush1.msra.mxu0 %v3358
  %3684 = vmatprep.subr.mxu0 %v3443
  %3685 = vmatpush1.msra.mxu0 %v3442
  %3686 = vmatprep.subr.mxu0 0.0
  %3687 = vmatpush1.msra.mxu0 0.0
  %3688 = vmatprep.subr.mxu0 0.0
  %3689 = vmatpush1.msra.mxu0 0.0
  %3690 = vmatprep.subr.mxu0 0.0
  %3691 = vmatpush1.msra.mxu0 0.0
  %3692 = vmatprep.subr.mxu0 0.0
  %3693 = vmatpush1.msra.mxu0 0.0
  %3694 = vmatprep.subr.mxu0 0.0
  %3695 = vmatpush1.msra.mxu0 0.0
  %3696 = vmatprep.subr.mxu0 0.0
  %3697 = vmatpush1.msra.mxu0 0.0
  %3698 = vmatprep.subr.mxu0 0.0
  %3699 = vmatpush1.msra.mxu0 0.0
  %3700 = vmatprep.subr.mxu0 0.0
  %3701 = vmatpush1.msra.mxu0 0.0
  %3702 = vmatprep.subr.mxu0 0.0
  %3703 = vmatpush1.msra.mxu0 0.0
  %3704 = vmatprep.subr.mxu0 0.0
  %3705 = vmatpush1.msra.mxu0 0.0
  %3706 = vmatprep.subr.mxu0 0.0
  %3707 = vmatpush1.msra.mxu0 0.0
  %3708 = vmatprep.subr.mxu0 0.0
  %3709 = vmatpush1.msra.mxu0 0.0
  %3710 = vmatprep.subr.mxu0 0.0
  %3711 = vmatpush1.msra.mxu0 0.0
  %3712 = vmatprep.subr.mxu0 0.0
  %3713 = vmatpush1.msra.mxu0 0.0
  %3714 = vmatprep.subr.mxu0 0.0
  %3715 = vmatpush1.msra.mxu0 0.0
  %3716 = vmatprep.subr.mxu0 0.0
  %3717 = vmatpush1.msra.mxu0 0.0
  %3718 = vmatprep.subr.mxu0 0.0
  %3719 = vmatpush1.msra.mxu0 0.0
  %3720 = vmatprep.subr.mxu0 0.0
  %3721 = vmatpush1.msra.mxu0 0.0
  %3722 = vmatprep.subr.mxu0 0.0
  %3723 = vmatpush1.msra.mxu0 0.0
  %3724 = vmatprep.subr.mxu0 0.0
  %3725 = vmatpush1.msra.mxu0 0.0
  %3726 = vmatprep.subr.mxu0 0.0
  %3727 = vmatpush1.msra.mxu0 0.0
  %3728 = vmatprep.subr.mxu0 0.0
  %3729 = vmatpush1.msra.mxu0 0.0
  %3730 = vmatprep.subr.mxu0 0.0
  %3731 = vmatpush1.msra.mxu0 0.0
  %3732 = vmatprep.mubr.f32.mxu0 0.0
  %3733 = vmatmul.mubr.f32.gmra.mrb[0].mxu0 %v3453
  %v3734 = vpop.f32.mrb[0].mxu0
  %v3735 = vadd.f32 %v3449, %v3734
  %v3736 = vpop.f32.mrb[0].mxu0
  %v3737 = vadd.f32 %v3449, %v3736
  %3738 = vdwg.mxu0
  %v3739 = vadd.f32 %v3522, %v3524
  %v3740 = vadd.f32 %v3739, %v3593
  %v3741 = vadd.f32 %v3740, %v3595
  %v3742 = vadd.f32 %v3741, %v3664
  %v3743 = vadd.f32 %v3742, %v3666
  %v3744 = vadd.f32 %v3743, %v3735
  %v3745 = vadd.f32 %v3744, %v3737
  %3746 = vadd.xlane.f32.xlu0 %v3745
  %v3747 = vpop.xlane.xlu0 %3746
  %v3748 = vld [vmem:[%s4] sm:$0xff]
  %vm3749 = vcmask 64512
  %v3751 = vsel %vm3749, %v3748, 0
  %3753 = vmatprep.subr.mxu0 0.0
  %3754 = vmatpush1.msra.mxu0 %v3747
  %3755 = vmatprep.subr.mxu0 0.0
  %3756 = vmatpush1.msra.mxu0 0.0
  %3757 = vmatprep.subr.mxu0 0.0
  %3758 = vmatpush1.msra.mxu0 0.0
  %3759 = vmatprep.subr.mxu0 0.0
  %3760 = vmatpush1.msra.mxu0 0.0
  %3761 = vmatprep.subr.mxu0 0.0
  %3762 = vmatpush1.msra.mxu0 0.0
  %3763 = vmatprep.subr.mxu0 0.0
  %3764 = vmatpush1.msra.mxu0 0.0
  %3765 = vmatprep.subr.mxu0 0.0
  %3766 = vmatpush1.msra.mxu0 0.0
  %3767 = vmatprep.subr.mxu0 0.0
  %3768 = vmatpush1.msra.mxu0 0.0
  %3769 = vmatprep.subr.mxu0 0.0
  %3770 = vmatpush1.msra.mxu0 0.0
  %3771 = vmatprep.subr.mxu0 0.0
  %3772 = vmatpush1.msra.mxu0 0.0
  %3773 = vmatprep.subr.mxu0 0.0
  %3774 = vmatpush1.msra.mxu0 0.0
  %3775 = vmatprep.subr.mxu0 0.0
  %3776 = vmatpush1.msra.mxu0 0.0
  %3777 = vmatprep.subr.mxu0 0.0
  %3778 = vmatpush1.msra.mxu0 0.0
  %3779 = vmatprep.subr.mxu0 0.0
  %3780 = vmatpush1.msra.mxu0 0.0
  %3781 = vmatprep.subr.mxu0 0.0
  %3782 = vmatpush1.msra.mxu0 0.0
  %3783 = vmatprep.subr.mxu0 0.0
  %3784 = vmatpush1.msra.mxu0 0.0
  %3785 = vmatprep.subr.mxu0 0.0
  %3786 = vmatpush1.msra.mxu0 0.0
  %3787 = vmatprep.subr.mxu0 0.0
  %3788 = vmatpush1.msra.mxu0 0.0
  %3789 = vmatprep.subr.mxu0 0.0
  %3790 = vmatpush1.msra.mxu0 0.0
  %3791 = vmatprep.subr.mxu0 0.0
  %3792 = vmatpush1.msra.mxu0 0.0
  %3793 = vmatprep.subr.mxu0 0.0
  %3794 = vmatpush1.msra.mxu0 0.0
  %3795 = vmatprep.subr.mxu0 0.0
  %3796 = vmatpush1.msra.mxu0 0.0
  %3797 = vmatprep.subr.mxu0 0.0
  %3798 = vmatpush1.msra.mxu0 0.0
  %3799 = vmatprep.subr.mxu0 0.0
  %3800 = vmatpush1.msra.mxu0 0.0
  %3801 = vmatprep.subr.mxu0 0.0
  %3802 = vmatpush1.msra.mxu0 0.0
  %3803 = vmatprep.subr.mxu0 0.0
  %3804 = vmatpush1.msra.mxu0 0.0
  %3805 = vmatprep.subr.mxu0 0.0
  %3806 = vmatpush1.msra.mxu0 0.0
  %3807 = vmatprep.subr.mxu0 0.0
  %3808 = vmatpush1.msra.mxu0 0.0
  %3809 = vmatprep.subr.mxu0 0.0
  %3810 = vmatpush1.msra.mxu0 0.0
  %3811 = vmatprep.subr.mxu0 0.0
  %3812 = vmatpush1.msra.mxu0 0.0
  %3813 = vmatprep.subr.mxu0 0.0
  %3814 = vmatpush1.msra.mxu0 0.0
  %3815 = vmatprep.subr.mxu0 0.0
  %3816 = vmatpush1.msra.mxu0 0.0
  %3817 = vmatprep.mubr.f32.mxu0 0.0
  %3818 = vmatmul.mubr.f32.gmra.mrb[0].mxu0 %v3751
  %v3819 = vpop.f32.mrb[0].mxu0
  %v3820 = vadd.f32 0.0, %v3819
  %v3821 = vpop.f32.mrb[0].mxu0
  %3822 = vdwg.mxu0
  %3824 = vset.pattern.permute.xlu0 0
  %3825 = vperm.xlu0 %3824, %v3820
  %v3826 = vpop.permute.xlu0 %3825
  %v3828 = vsub.f32 %v3522, %v3826
  %v3829 = vsub.f32 %v3524, %v3826
  %v3830 = vsub.f32 %v3593, %v3826
  %v3831 = vsub.f32 %v3595, %v3826
  %v3832 = vsub.f32 %v3664, %v3826
  %v3833 = vsub.f32 %v3666, %v3826
  %v3834 = vsub.f32 %v3735, %v3826
  %v3835 = vsub.f32 %v3737, %v3826
  %v3836 = vmul.f32 %v3828, %v3828
  %v3837 = vmul.f32 %v3829, %v3829
  %v3838 = vmul.f32 %v3830, %v3830
  %v3839 = vmul.f32 %v3831, %v3831
  %v3840 = vmul.f32 %v3832, %v3832
  %v3841 = vmul.f32 %v3833, %v3833
  %v3842 = vmul.f32 %v3834, %v3834
  %v3843 = vmul.f32 %v3835, %v3835
  %v3844 = vadd.f32 %v3836, %v3837
  %v3845 = vadd.f32 %v3844, %v3838
  %v3846 = vadd.f32 %v3845, %v3839
  %v3847 = vadd.f32 %v3846, %v3840
  %v3848 = vadd.f32 %v3847, %v3841
  %v3849 = vadd.f32 %v3848, %v3842
  %v3850 = vadd.f32 %v3849, %v3843
  %3851 = vadd.xlane.f32.xlu0 %v3850
  %v3852 = vpop.xlane.xlu0 %3851
  %v3853 = vld [vmem:[%s7] sm:$0xff]
  %3854 = vmatprep.subr.mxu0 0.0
  %3855 = vmatpush1.msra.mxu0 %v3852
  %3856 = vmatprep.subr.mxu0 0.0
  %3857 = vmatpush1.msra.mxu0 0.0
  %3858 = vmatprep.subr.mxu0 0.0
  %3859 = vmatpush1.msra.mxu0 0.0
  %3860 = vmatprep.subr.mxu0 0.0
  %3861 = vmatpush1.msra.mxu0 0.0
  %3862 = vmatprep.subr.mxu0 0.0
  %3863 = vmatpush1.msra.mxu0 0.0
  %3864 = vmatprep.subr.mxu0 0.0
  %3865 = vmatpush1.msra.mxu0 0.0
  %3866 = vmatprep.subr.mxu0 0.0
  %3867 = vmatpush1.msra.mxu0 0.0
  %3868 = vmatprep.subr.mxu0 0.0
  %3869 = vmatpush1.msra.mxu0 0.0
  %3870 = vmatprep.subr.mxu0 0.0
  %3871 = vmatpush1.msra.mxu0 0.0
  %3872 = vmatprep.subr.mxu0 0.0
  %3873 = vmatpush1.msra.mxu0 0.0
  %3874 = vmatprep.subr.mxu0 0.0
  %3875 = vmatpush1.msra.mxu0 0.0
  %3876 = vmatprep.subr.mxu0 0.0
  %3877 = vmatpush1.msra.mxu0 0.0
  %3878 = vmatprep.subr.mxu0 0.0
  %3879 = vmatpush1.msra.mxu0 0.0
  %3880 = vmatprep.subr.mxu0 0.0
  %3881 = vmatpush1.msra.mxu0 0.0
  %3882 = vmatprep.subr.mxu0 0.0
  %3883 = vmatpush1.msra.mxu0 0.0
  %3884 = vmatprep.subr.mxu0 0.0
  %3885 = vmatpush1.msra.mxu0 0.0
  %3886 = vmatprep.subr.mxu0 0.0
  %3887 = vmatpush1.msra.mxu0 0.0
  %3888 = vmatprep.subr.mxu0 0.0
  %3889 = vmatpush1.msra.mxu0 0.0
  %3890 = vmatprep.subr.mxu0 0.0
  %3891 = vmatpush1.msra.mxu0 0.0
  %3892 = vmatprep.subr.mxu0 0.0
  %3893 = vmatpush1.msra.mxu0 0.0
  %3894 = vmatprep.subr.mxu0 0.0
  %3895 = vmatpush1.msra.mxu0 0.0
  %3896 = vmatprep.subr.mxu0 0.0
  %3897 = vmatpush1.msra.mxu0 0.0
  %3898 = vmatprep.subr.mxu0 0.0
  %3899 = vmatpush1.msra.mxu0 0.0
  %3900 = vmatprep.subr.mxu0 0.0
  %3901 = vmatpush1.msra.mxu0 0.0
  %3902 = vmatprep.subr.mxu0 0.0
  %3903 = vmatpush1.msra.mxu0 0.0
  %3904 = vmatprep.subr.mxu0 0.0
  %3905 = vmatpush1.msra.mxu0 0.0
  %3906 = vmatprep.subr.mxu0 0.0
  %3907 = vmatpush1.msra.mxu0 0.0
  %3908 = vmatprep.subr.mxu0 0.0
  %3909 = vmatpush1.msra.mxu0 0.0
  %3910 = vmatprep.subr.mxu0 0.0
  %3911 = vmatpush1.msra.mxu0 0.0
  %3912 = vmatprep.subr.mxu0 0.0
  %3913 = vmatpush1.msra.mxu0 0.0
  %3914 = vmatprep.subr.mxu0 0.0
  %3915 = vmatpush1.msra.mxu0 0.0
  %3916 = vmatprep.subr.mxu0 0.0
  %3917 = vmatpush1.msra.mxu0 0.0
  %3918 = vmatprep.mubr.f32.mxu0 0.0
  %3919 = vmatmul.mubr.f32.gmra.mrb[0].mxu0 %v3751
  %v3920 = vpop.f32.mrb[0].mxu0
  %v3921 = vadd.f32 1e-05, %v3920
  %v3922 = vpop.f32.mrb[0].mxu0
  %3923 = vdwg.mxu0
  %v3924 = vrsqrt.pop %v3921
  %v3925 = vmul.f32 %v3853, %v3924
  %v3926 = vld [vmem:[%s8] sm:$0xff]
  %v3927 = vmul.f32 %v3820, %v3925
  %v3928 = vsub.f32 %v3926, %v3927
  %3930 = vset.pattern.permute.xlu0 0
  %3931 = vperm.xlu0 %3930, %v3925
  %v3932 = vpop.permute.xlu0 %3931
  %v3934 = vmul.f32 %v3522, %v3932
  %v3935 = vmul.f32 %v3524, %v3932
  %v3936 = vmul.f32 %v3593, %v3932
  %v3937 = vmul.f32 %v3595, %v3932
  %v3938 = vmul.f32 %v3664, %v3932
  %v3939 = vmul.f32 %v3666, %v3932
  %v3940 = vmul.f32 %v3735, %v3932
  %v3941 = vmul.f32 %v3737, %v3932
  %3943 = vset.pattern.permute.xlu0 0
  %3944 = vperm.xlu0 %3943, %v3928
  %v3945 = vpop.permute.xlu0 %3944
  %v3947 = vadd.f32 %v3934, %v3945
  %v3948 = vadd.f32 %v3935, %v3945
  %v3949 = vadd.f32 %v3936, %v3945
  %v3950 = vadd.f32 %v3937, %v3945
  %v3951 = vadd.f32 %v3938, %v3945
  %v3952 = vadd.f32 %v3939, %v3945
  %v3953 = vadd.f32 %v3940, %v3945
  %v3954 = vadd.f32 %v3941, %v3945
  %v3955 = vmax.f32 %v3947, 0.0
  %v3956 = vmax.f32 %v3948, 0.0
  %v3957 = vmax.f32 %v3949, 0.0
  %v3958 = vmax.f32 %v3950, 0.0
  %v3959 = vmax.f32 %v3951, 0.0
  %v3960 = vmax.f32 %v3952, 0.0
  %v3961 = vmax.f32 %v3953, 0.0
  %v3962 = vmax.f32 %v3954, 0.0
  %v3963 = vadd.f32 %v2754, %v3955
  %v3964 = vadd.f32 %v2755, %v3956
  %v3965 = vadd.f32 %v2756, %v3957
  %v3966 = vadd.f32 %v2757, %v3958
  %v3967 = vadd.f32 %v2758, %v3959
  %v3968 = vadd.f32 %v2759, %v3960
  %v3969 = vadd.f32 %v2760, %v3961
  %v3970 = vadd.f32 %v2761, %v3962
  %v3971 = vld [vmem:[%s9] sm:$0xff]
  %v3972 = vld [vmem:[%s9 + $0x8] sm:$0xff]
  %v3973 = vld [vmem:[%s10] sm:$0xff]
  %v3974 = vld [vmem:[%s10 + $0x8] sm:$0xff]
  %3976 = vset.pattern.permute.xlu0 0
  %3977 = vperm.xlu0 %3976, %v3973
  %v3978 = vpop.permute.xlu0 %3977
  %3981 = vset.pattern.permute.xlu0 0
  %3982 = vperm.xlu0 %3981, %v3974
  %v3983 = vpop.permute.xlu0 %3982
  %v3986 = vsel %vm3749, %v3971, 0
  %v3989 = vsel %vm3749, %v3972, 0
  %3991 = vmatprep.subr.mxu0 %v3964
  %3992 = vmatpush1.msra.mxu0 %v3963
  %3993 = vmatprep.subr.mxu0 0.0
  %3994 = vmatpush1.msra.mxu0 0.0
  %3995 = vmatprep.subr.mxu0 0.0
  %3996 = vmatpush1.msra.mxu0 0.0
  %3997 = vmatprep.subr.mxu0 0.0
  %3998 = vmatpush1.msra.mxu0 0.0
  %3999 = vmatprep.subr.mxu0 0.0
  %4000 = vmatpush1.msra.mxu0 0.0
  %4001 = vmatprep.subr.mxu0 0.0
  %4002 = vmatpush1.msra.mxu0 0.0
  %4003 = vmatprep.subr.mxu0 0.0
  %4004 = vmatpush1.msra.mxu0 0.0
  %4005 = vmatprep.subr.mxu0 0.0
  %4006 = vmatpush1.msra.mxu0 0.0
  %4007 = vmatprep.subr.mxu0 0.0
  %4008 = vmatpush1.msra.mxu0 0.0
  %4009 = vmatprep.subr.mxu0 0.0
  %4010 = vmatpush1.msra.mxu0 0.0
  %4011 = vmatprep.subr.mxu0 0.0
  %4012 = vmatpush1.msra.mxu0 0.0
  %4013 = vmatprep.subr.mxu0 0.0
  %4014 = vmatpush1.msra.mxu0 0.0
  %4015 = vmatprep.subr.mxu0 0.0
  %4016 = vmatpush1.msra.mxu0 0.0
  %4017 = vmatprep.subr.mxu0 0.0
  %4018 = vmatpush1.msra.mxu0 0.0
  %4019 = vmatprep.subr.mxu0 0.0
  %4020 = vmatpush1.msra.mxu0 0.0
  %4021 = vmatprep.subr.mxu0 0.0
  %4022 = vmatpush1.msra.mxu0 0.0
  %4023 = vmatprep.subr.mxu0 0.0
  %4024 = vmatpush1.msra.mxu0 0.0
  %4025 = vmatprep.subr.mxu0 0.0
  %4026 = vmatpush1.msra.mxu0 0.0
  %4027 = vmatprep.subr.mxu0 0.0
  %4028 = vmatpush1.msra.mxu0 0.0
  %4029 = vmatprep.subr.mxu0 0.0
  %4030 = vmatpush1.msra.mxu0 0.0
  %4031 = vmatprep.subr.mxu0 0.0
  %4032 = vmatpush1.msra.mxu0 0.0
  %4033 = vmatprep.subr.mxu0 0.0
  %4034 = vmatpush1.msra.mxu0 0.0
  %4035 = vmatprep.subr.mxu0 0.0
  %4036 = vmatpush1.msra.mxu0 0.0
  %4037 = vmatprep.subr.mxu0 0.0
  %4038 = vmatpush1.msra.mxu0 0.0
  %4039 = vmatprep.subr.mxu0 0.0
  %4040 = vmatpush1.msra.mxu0 0.0
  %4041 = vmatprep.subr.mxu0 0.0
  %4042 = vmatpush1.msra.mxu0 0.0
  %4043 = vmatprep.subr.mxu0 0.0
  %4044 = vmatpush1.msra.mxu0 0.0
  %4045 = vmatprep.subr.mxu0 0.0
  %4046 = vmatpush1.msra.mxu0 0.0
  %4047 = vmatprep.subr.mxu0 0.0
  %4048 = vmatpush1.msra.mxu0 0.0
  %4049 = vmatprep.subr.mxu0 0.0
  %4050 = vmatpush1.msra.mxu0 0.0
  %4051 = vmatprep.subr.mxu0 0.0
  %4052 = vmatpush1.msra.mxu0 0.0
  %4053 = vmatprep.subr.mxu0 0.0
  %4054 = vmatpush1.msra.mxu0 0.0
  %4055 = vmatprep.mubr.f32.mxu0 0.0
  %4056 = vmatmul.mubr.f32.gmra.mrb[0].mxu0 %v3986
  %v4057 = vpop.f32.mrb[0].mxu0
  %v4058 = vadd.f32 %v3978, %v4057
  %v4059 = vpop.f32.mrb[0].mxu0
  %v4060 = vadd.f32 %v3978, %v4059
  %4061 = vmatprep.mubr.f32.mxu0 0.0
  %4062 = vmatmul.mubr.f32.gmra.mrb[0].mxu0 %v3989
  %v4063 = vpop.f32.mrb[0].mxu0
  %v4064 = vadd.f32 %v3983, %v4063
  %v4065 = vpop.f32.mrb[0].mxu0
  %v4066 = vadd.f32 %v3983, %v4065
  %4067 = vdwg.mxu0
  %4068 = vmatprep.subr.mxu0 %v3966
  %4069 = vmatpush1.msra.mxu0 %v3965
  %4070 = vmatprep.subr.mxu0 0.0
  %4071 = vmatpush1.msra.mxu0 0.0
  %4072 = vmatprep.subr.mxu0 0.0
  %4073 = vmatpush1.msra.mxu0 0.0
  %4074 = vmatprep.subr.mxu0 0.0
  %4075 = vmatpush1.msra.mxu0 0.0
  %4076 = vmatprep.subr.mxu0 0.0
  %4077 = vmatpush1.msra.mxu0 0.0
  %4078 = vmatprep.subr.mxu0 0.0
  %4079 = vmatpush1.msra.mxu0 0.0
  %4080 = vmatprep.subr.mxu0 0.0
  %4081 = vmatpush1.msra.mxu0 0.0
  %4082 = vmatprep.subr.mxu0 0.0
  %4083 = vmatpush1.msra.mxu0 0.0
  %4084 = vmatprep.subr.mxu0 0.0
  %4085 = vmatpush1.msra.mxu0 0.0
  %4086 = vmatprep.subr.mxu0 0.0
  %4087 = vmatpush1.msra.mxu0 0.0
  %4088 = vmatprep.subr.mxu0 0.0
  %4089 = vmatpush1.msra.mxu0 0.0
  %4090 = vmatprep.subr.mxu0 0.0
  %4091 = vmatpush1.msra.mxu0 0.0
  %4092 = vmatprep.subr.mxu0 0.0
  %4093 = vmatpush1.msra.mxu0 0.0
  %4094 = vmatprep.subr.mxu0 0.0
  %4095 = vmatpush1.msra.mxu0 0.0
  %4096 = vmatprep.subr.mxu0 0.0
  %4097 = vmatpush1.msra.mxu0 0.0
  %4098 = vmatprep.subr.mxu0 0.0
  %4099 = vmatpush1.msra.mxu0 0.0
  %4100 = vmatprep.subr.mxu0 0.0
  %4101 = vmatpush1.msra.mxu0 0.0
  %4102 = vmatprep.subr.mxu0 0.0
  %4103 = vmatpush1.msra.mxu0 0.0
  %4104 = vmatprep.subr.mxu0 0.0
  %4105 = vmatpush1.msra.mxu0 0.0
  %4106 = vmatprep.subr.mxu0 0.0
  %4107 = vmatpush1.msra.mxu0 0.0
  %4108 = vmatprep.subr.mxu0 0.0
  %4109 = vmatpush1.msra.mxu0 0.0
  %4110 = vmatprep.subr.mxu0 0.0
  %4111 = vmatpush1.msra.mxu0 0.0
  %4112 = vmatprep.subr.mxu0 0.0
  %4113 = vmatpush1.msra.mxu0 0.0
  %4114 = vmatprep.subr.mxu0 0.0
  %4115 = vmatpush1.msra.mxu0 0.0
  %4116 = vmatprep.subr.mxu0 0.0
  %4117 = vmatpush1.msra.mxu0 0.0
  %4118 = vmatprep.subr.mxu0 0.0
  %4119 = vmatpush1.msra.mxu0 0.0
  %4120 = vmatprep.subr.mxu0 0.0
  %4121 = vmatpush1.msra.mxu0 0.0
  %4122 = vmatprep.subr.mxu0 0.0
  %4123 = vmatpush1.msra.mxu0 0.0
  %4124 = vmatprep.subr.mxu0 0.0
  %4125 = vmatpush1.msra.mxu0 0.0
  %4126 = vmatprep.subr.mxu0 0.0
  %4127 = vmatpush1.msra.mxu0 0.0
  %4128 = vmatprep.subr.mxu0 0.0
  %4129 = vmatpush1.msra.mxu0 0.0
  %4130 = vmatprep.subr.mxu0 0.0
  %4131 = vmatpush1.msra.mxu0 0.0
  %4132 = vmatprep.mubr.f32.mxu0 0.0
  %4133 = vmatmul.mubr.f32.gmra.mrb[0].mxu0 %v3986
  %v4134 = vpop.f32.mrb[0].mxu0
  %v4135 = vadd.f32 %v3978, %v4134
  %v4136 = vpop.f32.mrb[0].mxu0
  %v4137 = vadd.f32 %v3978, %v4136
  %4138 = vmatprep.mubr.f32.mxu0 0.0
  %4139 = vmatmul.mubr.f32.gmra.mrb[0].mxu0 %v3989
  %v4140 = vpop.f32.mrb[0].mxu0
  %v4141 = vadd.f32 %v3983, %v4140
  %v4142 = vpop.f32.mrb[0].mxu0
  %v4143 = vadd.f32 %v3983, %v4142
  %4144 = vdwg.mxu0
  %4145 = vmatprep.subr.mxu0 %v3968
  %4146 = vmatpush1.msra.mxu0 %v3967
  %4147 = vmatprep.subr.mxu0 0.0
  %4148 = vmatpush1.msra.mxu0 0.0
  %4149 = vmatprep.subr.mxu0 0.0
  %4150 = vmatpush1.msra.mxu0 0.0
  %4151 = vmatprep.subr.mxu0 0.0
  %4152 = vmatpush1.msra.mxu0 0.0
  %4153 = vmatprep.subr.mxu0 0.0
  %4154 = vmatpush1.msra.mxu0 0.0
  %4155 = vmatprep.subr.mxu0 0.0
  %4156 = vmatpush1.msra.mxu0 0.0
  %4157 = vmatprep.subr.mxu0 0.0
  %4158 = vmatpush1.msra.mxu0 0.0
  %4159 = vmatprep.subr.mxu0 0.0
  %4160 = vmatpush1.msra.mxu0 0.0
  %4161 = vmatprep.subr.mxu0 0.0
  %4162 = vmatpush1.msra.mxu0 0.0
  %4163 = vmatprep.subr.mxu0 0.0
  %4164 = vmatpush1.msra.mxu0 0.0
  %4165 = vmatprep.subr.mxu0 0.0
  %4166 = vmatpush1.msra.mxu0 0.0
  %4167 = vmatprep.subr.mxu0 0.0
  %4168 = vmatpush1.msra.mxu0 0.0
  %4169 = vmatprep.subr.mxu0 0.0
  %4170 = vmatpush1.msra.mxu0 0.0
  %4171 = vmatprep.subr.mxu0 0.0
  %4172 = vmatpush1.msra.mxu0 0.0
  %4173 = vmatprep.subr.mxu0 0.0
  %4174 = vmatpush1.msra.mxu0 0.0
  %4175 = vmatprep.subr.mxu0 0.0
  %4176 = vmatpush1.msra.mxu0 0.0
  %4177 = vmatprep.subr.mxu0 0.0
  %4178 = vmatpush1.msra.mxu0 0.0
  %4179 = vmatprep.subr.mxu0 0.0
  %4180 = vmatpush1.msra.mxu0 0.0
  %4181 = vmatprep.subr.mxu0 0.0
  %4182 = vmatpush1.msra.mxu0 0.0
  %4183 = vmatprep.subr.mxu0 0.0
  %4184 = vmatpush1.msra.mxu0 0.0
  %4185 = vmatprep.subr.mxu0 0.0
  %4186 = vmatpush1.msra.mxu0 0.0
  %4187 = vmatprep.subr.mxu0 0.0
  %4188 = vmatpush1.msra.mxu0 0.0
  %4189 = vmatprep.subr.mxu0 0.0
  %4190 = vmatpush1.msra.mxu0 0.0
  %4191 = vmatprep.subr.mxu0 0.0
  %4192 = vmatpush1.msra.mxu0 0.0
  %4193 = vmatprep.subr.mxu0 0.0
  %4194 = vmatpush1.msra.mxu0 0.0
  %4195 = vmatprep.subr.mxu0 0.0
  %4196 = vmatpush1.msra.mxu0 0.0
  %4197 = vmatprep.subr.mxu0 0.0
  %4198 = vmatpush1.msra.mxu0 0.0
  %4199 = vmatprep.subr.mxu0 0.0
  %4200 = vmatpush1.msra.mxu0 0.0
  %4201 = vmatprep.subr.mxu0 0.0
  %4202 = vmatpush1.msra.mxu0 0.0
  %4203 = vmatprep.subr.mxu0 0.0
  %4204 = vmatpush1.msra.mxu0 0.0
  %4205 = vmatprep.subr.mxu0 0.0
  %4206 = vmatpush1.msra.mxu0 0.0
  %4207 = vmatprep.subr.mxu0 0.0
  %4208 = vmatpush1.msra.mxu0 0.0
  %4209 = vmatprep.mubr.f32.mxu0 0.0
  %4210 = vmatmul.mubr.f32.gmra.mrb[0].mxu0 %v3986
  %v4211 = vpop.f32.mrb[0].mxu0
  %v4212 = vadd.f32 %v3978, %v4211
  %v4213 = vpop.f32.mrb[0].mxu0
  %v4214 = vadd.f32 %v3978, %v4213
  %4215 = vmatprep.mubr.f32.mxu0 0.0
  %4216 = vmatmul.mubr.f32.gmra.mrb[0].mxu0 %v3989
  %v4217 = vpop.f32.mrb[0].mxu0
  %v4218 = vadd.f32 %v3983, %v4217
  %v4219 = vpop.f32.mrb[0].mxu0
  %v4220 = vadd.f32 %v3983, %v4219
  %4221 = vdwg.mxu0
  %4222 = vmatprep.subr.mxu0 %v3970
  %4223 = vmatpush1.msra.mxu0 %v3969
  %4224 = vmatprep.subr.mxu0 0.0
  %4225 = vmatpush1.msra.mxu0 0.0
  %4226 = vmatprep.subr.mxu0 0.0
  %4227 = vmatpush1.msra.mxu0 0.0
  %4228 = vmatprep.subr.mxu0 0.0
  %4229 = vmatpush1.msra.mxu0 0.0
  %4230 = vmatprep.subr.mxu0 0.0
  %4231 = vmatpush1.msra.mxu0 0.0
  %4232 = vmatprep.subr.mxu0 0.0
  %4233 = vmatpush1.msra.mxu0 0.0
  %4234 = vmatprep.subr.mxu0 0.0
  %4235 = vmatpush1.msra.mxu0 0.0
  %4236 = vmatprep.subr.mxu0 0.0
  %4237 = vmatpush1.msra.mxu0 0.0
  %4238 = vmatprep.subr.mxu0 0.0
  %4239 = vmatpush1.msra.mxu0 0.0
  %4240 = vmatprep.subr.mxu0 0.0
  %4241 = vmatpush1.msra.mxu0 0.0
  %4242 = vmatprep.subr.mxu0 0.0
  %4243 = vmatpush1.msra.mxu0 0.0
  %4244 = vmatprep.subr.mxu0 0.0
  %4245 = vmatpush1.msra.mxu0 0.0
  %4246 = vmatprep.subr.mxu0 0.0
  %4247 = vmatpush1.msra.mxu0 0.0
  %4248 = vmatprep.subr.mxu0 0.0
  %4249 = vmatpush1.msra.mxu0 0.0
  %4250 = vmatprep.subr.mxu0 0.0
  %4251 = vmatpush1.msra.mxu0 0.0
  %4252 = vmatprep.subr.mxu0 0.0
  %4253 = vmatpush1.msra.mxu0 0.0
  %4254 = vmatprep.subr.mxu0 0.0
  %4255 = vmatpush1.msra.mxu0 0.0
  %4256 = vmatprep.subr.mxu0 0.0
  %4257 = vmatpush1.msra.mxu0 0.0
  %4258 = vmatprep.subr.mxu0 0.0
  %4259 = vmatpush1.msra.mxu0 0.0
  %4260 = vmatprep.subr.mxu0 0.0
  %4261 = vmatpush1.msra.mxu0 0.0
  %4262 = vmatprep.subr.mxu0 0.0
  %4263 = vmatpush1.msra.mxu0 0.0
  %4264 = vmatprep.subr.mxu0 0.0
  %4265 = vmatpush1.msra.mxu0 0.0
  %4266 = vmatprep.subr.mxu0 0.0
  %4267 = vmatpush1.msra.mxu0 0.0
  %4268 = vmatprep.subr.mxu0 0.0
  %4269 = vmatpush1.msra.mxu0 0.0
  %4270 = vmatprep.subr.mxu0 0.0
  %4271 = vmatpush1.msra.mxu0 0.0
  %4272 = vmatprep.subr.mxu0 0.0
  %4273 = vmatpush1.msra.mxu0 0.0
  %4274 = vmatprep.subr.mxu0 0.0
  %4275 = vmatpush1.msra.mxu0 0.0
  %4276 = vmatprep.subr.mxu0 0.0
  %4277 = vmatpush1.msra.mxu0 0.0
  %4278 = vmatprep.subr.mxu0 0.0
  %4279 = vmatpush1.msra.mxu0 0.0
  %4280 = vmatprep.subr.mxu0 0.0
  %4281 = vmatpush1.msra.mxu0 0.0
  %4282 = vmatprep.subr.mxu0 0.0
  %4283 = vmatpush1.msra.mxu0 0.0
  %4284 = vmatprep.subr.mxu0 0.0
  %4285 = vmatpush1.msra.mxu0 0.0
  %4286 = vmatprep.mubr.f32.mxu0 0.0
  %4287 = vmatmul.mubr.f32.gmra.mrb[0].mxu0 %v3986
  %v4288 = vpop.f32.mrb[0].mxu0
  %v4289 = vadd.f32 %v3978, %v4288
  %v4290 = vpop.f32.mrb[0].mxu0
  %v4291 = vadd.f32 %v3978, %v4290
  %4292 = vmatprep.mubr.f32.mxu0 0.0
  %4293 = vmatmul.mubr.f32.gmra.mrb[0].mxu0 %v3989
  %v4294 = vpop.f32.mrb[0].mxu0
  %v4295 = vadd.f32 %v3983, %v4294
  %v4296 = vpop.f32.mrb[0].mxu0
  %v4297 = vadd.f32 %v3983, %v4296
  %4298 = vdwg.mxu0
  %4299 = vst [vmem:[%s11] sm:$0xff] %v4058
  %4300 = vst [vmem:[%s11 + $0x8] sm:$0xff] %v4060
  %4301 = vst [vmem:[%s11 + $0x10] sm:$0xff] %v4135
  %4302 = vst [vmem:[%s11 + $0x18] sm:$0xff] %v4137
  %4303 = vst [vmem:[%s11 + $0x20] sm:$0xff] %v4212
  %4304 = vst [vmem:[%s11 + $0x28] sm:$0xff] %v4214
  %4305 = vst [vmem:[%s11 + $0x30] sm:$0xff] %v4289
  %4306 = vst [vmem:[%s11 + $0x38] sm:$0xff] %v4291
  %4307 = vst [vmem:[%s11 + $0x40] sm:$0xff] %v4064
  %4308 = vst [vmem:[%s11 + $0x48] sm:$0xff] %v4066
  %4309 = vst [vmem:[%s11 + $0x50] sm:$0xff] %v4141
  %4310 = vst [vmem:[%s11 + $0x58] sm:$0xff] %v4143
  %4311 = vst [vmem:[%s11 + $0x60] sm:$0xff] %v4218
  %4312 = vst [vmem:[%s11 + $0x68] sm:$0xff] %v4220
  %4313 = vst [vmem:[%s11 + $0x70] sm:$0xff] %v4295
  %4314 = vst [vmem:[%s11 + $0x78] sm:$0xff] %v4297
  // Predicated region
  $region46: #{peb_forward.1} parent=0 // pred_check
    _
  $region47: #{peb_forward.1} parent=0 // pred_check_branch
    %4316 = sbr.rel (0) target = $region49
  $region48: #{peb_forward.1} parent=0 // pred_region
    _
  $region49: #{peb_forward.1} parent=0 // pred_fallthru
    _
  // Predicated region
  $region50: #{peb_forward.1} parent=0 // pred_check
    _
  $region51: #{peb_forward.1} parent=0 // pred_check_branch
    %4318 = sbr.rel (0) target = $region53
  $region52: #{peb_forward.1} parent=0 // pred_region
    _
  $region53: #{peb_forward.1} parent=0 // pred_fallthru
    _

</llo_original>
